<compile_context>
chip_gen: v5e
topology: v5e:2x2
jax: 0.10.0
libtpu: 0.0.40
codegen_flags: <defaults>
</compile_context>

<pallas_src>
import functools

import jax
import jax.numpy as jnp
from jax.experimental import pallas as pl
from jax.experimental.pallas import tpu as pltpu


# -----------------------------------------------------------------------------
# Fused decoder kernel (single invocation, everything lives in VMEM)
# -----------------------------------------------------------------------------
def _decoder_kernel(
    # ---- inputs --------------------------------------------------------------
    x_ref,                                    # [B, latent]
    wlin_ref, blin_ref,                       # [latent, 16*C1], [1, 16*C1]
    w1_ref, s1_ref, b1_ref,                   # ConvT1 band / scatter / bias-row
    r1_ref, r1t_ref, g1_ref, be1_ref,         # BN1 reduce mats + gamma / beta
    w2_ref, s2_ref, b2_ref,                   # ConvT2
    r2_ref, r2t_ref, g2_ref, be2_ref,         # BN2
    w3_ref, s3_ref, b3_ref,                   # ConvT3
    alpha_ref,                                # SMEM [2]  (PReLU slopes)
    # ---- outputs -------------------------------------------------------------
    out_ref,                                  # [B*28, 28*Cout]
    # ---- scratch -------------------------------------------------------------
    x1_ref,                                   # VMEM [4*B, 4*C1]
    *, dims,
):
    f32 = jnp.float32
    B, IH1, IWC1 = dims["B"], dims["IH1"], dims["IWC1"]

    # ---- dec_lin: Linear + ReLU (weight columns pre-permuted to (ih, iw, c)) --
    h = jnp.dot(x_ref[...], wlin_ref[...], preferred_element_type=f32)
    h = jnp.maximum(h + blin_ref[...], 0.0)                       # [B, 16*C1]

    # ---- torch .view(b, C1, 4, 4): regroup into rows (ih, b) x lanes (iw, c) --
    for ih in range(IH1):
        x1_ref[ih * B:(ih + 1) * B, :] = h[:, ih * IWC1:(ih + 1) * IWC1]
    x1 = x1_ref[...]                                              # [4*B, 4*C1]

    def conv_t(x, w_ref, s_ref, brow_ref, k):
        """ConvTranspose2d as bias + sum_kh S_kh @ (x @ Wband_kh); lane-dense."""
        acc = brow_ref[...]                                       # [1, OW*C] bias
        for kh in range(k):
            y = jnp.dot(x, w_ref[kh], preferred_element_type=f32)         # W axis
            acc = acc + jnp.dot(s_ref[kh], y, preferred_element_type=f32)  # H axis
        return acc

    def bn_prelu(y, r_ref, rt_ref, g_ref, be_ref, alpha, count):
        """Train-mode BatchNorm2d (batch stats, biased var, eps=1e-5) + PReLU.
        y: [B*OH, OW*C].  R: [OW*C, C] sums lanes per channel; R^T broadcasts a
        per-channel vector back to the (ow, c) lane layout.  BN is applied as a
        single FMA: z = y*scale_l + shift_l."""
        inv_n = 1.0 / count
        col_sum = jnp.sum(y, axis=0, keepdims=True)                    # [1,OW*C]
        col_sq = jnp.sum(y * y, axis=0, keepdims=True)                 # [1,OW*C]
        mean_c = jnp.dot(col_sum, r_ref[...], preferred_element_type=f32) * inv_n
        ex2_c = jnp.dot(col_sq, r_ref[...], preferred_element_type=f32) * inv_n
        var_c = ex2_c - mean_c * mean_c                                # biased var
        scale_c = g_ref[...] * jax.lax.rsqrt(var_c + 1e-5)             # [1, C]
        shift_c = be_ref[...] - mean_c * scale_c                       # [1, C]
        scale_l = jnp.dot(scale_c, rt_ref[...], preferred_element_type=f32)
        shift_l = jnp.dot(shift_c, rt_ref[...], preferred_element_type=f32)
        z = y * scale_l + shift_l
        return jnp.where(z > 0.0, z, alpha * z)

    # ---- decoder block 1 ------------------------------------------------------
    y1 = conv_t(x1, w1_ref, s1_ref, b1_ref, dims["K1"])            # [B*11, 11*C1]
    y1 = bn_prelu(y1, r1_ref, r1t_ref, g1_ref, be1_ref, alpha_ref[0], dims["cnt1"])
    y2 = conv_t(y1, w2_ref, s2_ref, b2_ref, dims["K2"])            # [B*26, 26*C2]
    y2 = bn_prelu(y2, r2_ref, r2t_ref, g2_ref, be2_ref, alpha_ref[1], dims["cnt2"])

    # ---- decoder block 2 + Sigmoid --------------------------------------------
    y3 = conv_t(y2, w3_ref, s3_ref, b3_ref, dims["K3"])            # [B*28, 28*Co]
    out_ref[...] = jax.nn.sigmoid(y3)


# -----------------------------------------------------------------------------
# One-time repack of PyTorch-layout parameters into kernel operands
# -----------------------------------------------------------------------------
def prepare_decoder_params(params, batch):
    f32 = jnp.float32
    lin_w, lin_b = params["lin_w"], params["lin_b"]
    latent = lin_w.shape[0]
    c1 = params["ct1_w"].shape[0]                   # hidden_dims[-1]
    c2 = params["ct2_w"].shape[1]                   # hidden_dims[-2]
    cout = params["ct3_w"].shape[1]
    k1, k2, k3 = (params["ct1_w"].shape[2], params["ct2_w"].shape[2],
                  params["ct3_w"].shape[2])

    # geometry implied by the module: 4x4 -> 11x11 -> 26x26 -> 28x28
    ih1 = 4
    s1, s2, s3 = 2, 2, 1
    op2 = 1
    oh1 = (ih1 - 1) * s1 + k1                       # 11
    oh2 = (oh1 - 1) * s2 + k2 + op2                 # 26
    oh3 = (oh2 - 1) * s3 + k3                       # 28

    # Linear weights: output features reordered (c, ih, iw) -> (ih, iw, c)
    wlin = (lin_w.reshape(latent, c1, ih1, ih1).transpose(0, 2, 3, 1)
            .reshape(latent, ih1 * ih1 * c1).astype(f32))
    blin = (lin_b.reshape(c1, ih1, ih1).transpose(1, 2, 0)
            .reshape(1, ih1 * ih1 * c1).astype(f32))

    def band(w_pt, iw_dim, ow_dim, stride):
        """Wband[kh, (iw, ci), (ow, co)] = w[ci, co, kh, ow - stride*iw] (else 0)."""
        cin, co_, k, _ = w_pt.shape
        kw = jnp.arange(ow_dim)[None, :] - stride * jnp.arange(iw_dim)[:, None]
        valid = ((kw >= 0) & (kw < k)).astype(f32)               # [IW, OW]
        w_k = jnp.transpose(w_pt, (2, 0, 1, 3)).astype(f32)      # [K, ci, co, kw]
        g = jnp.take(w_k, jnp.clip(kw, 0, k - 1), axis=3)        # [K, ci, co, IW, OW]
        g = g * valid[None, None, None, :, :]
        g = jnp.transpose(g, (0, 3, 1, 4, 2))                    # [K, IW, ci, OW, co]
        return g.reshape(k, iw_dim * cin, ow_dim * co_)

    def scatter(ih_dim, oh_dim, stride, k, col_ih_major=False):
        """S[kh, (b, oh), col] = 1 iff same batch and oh == stride*ih + kh."""
        r = jnp.arange(batch * oh_dim)
        c = jnp.arange(batch * ih_dim)
        kh = jnp.arange(k)
        rb, ro = r // oh_dim, r % oh_dim
        if col_ih_major:                       # columns ordered (ih, b)
            cb, ci = c % batch, c // batch
        else:                                  # columns ordered (b, ih)
            cb, ci = c // ih_dim, c % ih_dim
        cond = ((rb[None, :, None] == cb[None, None, :]) &
                (ro[None, :, None] == stride * ci[None, None, :] + kh[:, None, None]))
        return cond.astype(f32)

    def reduce_mat(ow_dim, ch):
        r = jnp.tile(jnp.eye(ch, dtype=f32), (ow_dim, 1))        # [(ow, c), c]
        return r, r.T

    w1 = band(params["ct1_w"], ih1, oh1, s1)
    w2 = band(params["ct2_w"], oh1, oh2, s2)
    w3 = band(params["ct3_w"], oh2, oh3, s3)
    sc1 = scatter(ih1, oh1, s1, k1, col_ih_major=True)
    sc2 = scatter(oh1, oh2, s2, k2)
    sc3 = scatter(oh2, oh3, s3, k3)
    b1 = jnp.tile(params["ct1_b"].astype(f32), oh1).reshape(1, oh1 * c1)
    b2 = jnp.tile(params["ct2_b"].astype(f32), oh2).reshape(1, oh2 * c2)
    b3 = jnp.tile(params["ct3_b"].astype(f32), oh3).reshape(1, oh3 * cout)
    r1, r1t = reduce_mat(oh1, c1)
    r2, r2t = reduce_mat(oh2, c2)
    g1 = params["bn1_g"].reshape(1, c1).astype(f32)
    be1 = params["bn1_b"].reshape(1, c1).astype(f32)
    g2 = params["bn2_g"].reshape(1, c2).astype(f32)
    be2 = params["bn2_b"].reshape(1, c2).astype(f32)
    alphas = jnp.asarray([params["prelu1"], params["prelu2"]], f32)

    vmem_operands = (wlin, blin,
                     w1, sc1, b1, r1, r1t, g1, be1,
                     w2, sc2, b2, r2, r2t, g2, be2,
                     w3, sc3, b3)
    dims = dict(B=batch, IH1=ih1, IWC1=ih1 * c1, K1=k1, K2=k2, K3=k3,
                cnt1=float(batch * oh1 * oh1), cnt2=float(batch * oh2 * oh2),
                OH3=oh3, COUT=cout)
    return vmem_operands, alphas, dims


# -----------------------------------------------------------------------------
# Forward: one pallas_call + a tiny NHWC->NCHW reshape outside
# -----------------------------------------------------------------------------
def cnn_decoder_forward(x, vmem_operands, alphas, dims):
    b = x.shape[0]
    oh3, cout = dims["OH3"], dims["COUT"]
    in_specs = [pl.BlockSpec(memory_space=pltpu.MemorySpace.VMEM)
                for _ in range(1 + len(vmem_operands))]            # x + VMEM operands
    in_specs.append(pl.BlockSpec(memory_space=pltpu.MemorySpace.SMEM))  # alphas

    out2d = pl.pallas_call(
        functools.partial(_decoder_kernel, dims=dims),
        out_shape=jax.ShapeDtypeStruct((b * oh3, oh3 * cout), jnp.float32),
        in_specs=in_specs,
        out_specs=pl.BlockSpec(memory_space=pltpu.MemorySpace.VMEM),
        scratch_shapes=[pltpu.VMEM((dims["IH1"] * b, dims["IWC1"]), jnp.float32)],
    )(x.astype(jnp.float32), *vmem_operands, alphas)

    out = out2d.reshape(b, oh3, oh3, cout)                     # [B, 28, 28, Cout]
    return jnp.transpose(out, (0, 3, 1, 2))                    # NCHW like PyTorch


def init_params(key, out_channel, latent, hidden_dims):
    """Deterministic synthetic parameters with the shapes implied by __init__."""
    h_last, h_prev = hidden_dims[-1], hidden_dims[-2]
    ks = jax.random.split(key, 8)

    def rnd(k, shape, scale):
        return scale * jax.random.normal(k, shape, jnp.float32)

    return {
        "lin_w": rnd(ks[0], (latent, 16 * h_last), 0.2),      # Linear(latent, 16*h)
        "lin_b": rnd(ks[1], (16 * h_last,), 0.1),
        "ct1_w": rnd(ks[2], (h_last, h_last, 5, 5), 0.1),     # ConvT(h, h, 5, 2)
        "ct1_b": rnd(ks[3], (h_last,), 0.1),
        "bn1_g": jnp.ones((h_last,), jnp.float32),            # BatchNorm2d init
        "bn1_b": jnp.zeros((h_last,), jnp.float32),
        "prelu1": 0.25,                                       # PReLU default
        "ct2_w": rnd(ks[4], (h_last, h_prev, 5, 5), 0.1),     # ConvT(h, h2, 5, 2, op=1)
        "ct2_b": rnd(ks[5], (h_prev,), 0.1),
        "bn2_g": jnp.ones((h_prev,), jnp.float32),
        "bn2_b": jnp.zeros((h_prev,), jnp.float32),
        "prelu2": 0.25,
        "ct3_w": rnd(ks[6], (h_prev, out_channel, 3, 3), 0.1),  # ConvT(h2, out, 3)
        "ct3_b": rnd(ks[7], (out_channel,), 0.1),
    }


if __name__ == "__main__":
    key = jax.random.PRNGKey(0)
    kx, kp = jax.random.split(key)

    batch, latent = 2, 8
    hidden_dims = [8, 16]          # hidden_dims[-1]=16, hidden_dims[-2]=8
    out_channel = 1

    params = init_params(kp, out_channel, latent, hidden_dims)
    x = jax.random.normal(kx, (batch, latent), jnp.float32)

    # one-time weight repack (band / scatter / reduction matrices), outside the hot path
    vmem_operands, alphas, dims = prepare_decoder_params(params, batch)

    fwd = jax.jit(lambda xx: cnn_decoder_forward(xx, vmem_operands, alphas, dims))
    out = jax.block_until_ready(fwd(x))

    # 4x4 -> 11x11 -> 26x26 -> 28x28, sigmoid output in [0, 1]
    assert out.shape == (batch, out_channel, 28, 28), out.shape
    assert bool(jnp.all(jnp.isfinite(out)))
    assert bool(jnp.all((out >= 0.0) & (out <= 1.0)))
    print("KERNEL_OK")
</pallas_src>

<mosaic_0001>
module attributes {stable_mosaic.version = 11 : i64} {
  func.func @_decoder_kernel(%arg0: memref<2x8xf32, #tpu.memory_space<vmem>>, %arg1: memref<8x256xf32, #tpu.memory_space<vmem>>, %arg2: memref<1x256xf32, #tpu.memory_space<vmem>>, %arg3: memref<5x64x176xf32, #tpu.memory_space<vmem>>, %arg4: memref<5x22x8xf32, #tpu.memory_space<vmem>>, %arg5: memref<1x176xf32, #tpu.memory_space<vmem>>, %arg6: memref<176x16xf32, #tpu.memory_space<vmem>>, %arg7: memref<16x176xf32, #tpu.memory_space<vmem>>, %arg8: memref<1x16xf32, #tpu.memory_space<vmem>>, %arg9: memref<1x16xf32, #tpu.memory_space<vmem>>, %arg10: memref<5x176x208xf32, #tpu.memory_space<vmem>>, %arg11: memref<5x52x22xf32, #tpu.memory_space<vmem>>, %arg12: memref<1x208xf32, #tpu.memory_space<vmem>>, %arg13: memref<208x8xf32, #tpu.memory_space<vmem>>, %arg14: memref<8x208xf32, #tpu.memory_space<vmem>>, %arg15: memref<1x8xf32, #tpu.memory_space<vmem>>, %arg16: memref<1x8xf32, #tpu.memory_space<vmem>>, %arg17: memref<3x208x28xf32, #tpu.memory_space<vmem>>, %arg18: memref<3x56x52xf32, #tpu.memory_space<vmem>>, %arg19: memref<1x28xf32, #tpu.memory_space<vmem>>, %arg20: memref<2xf32, #tpu.memory_space<smem>>, %arg21: memref<56x28xf32, #tpu.memory_space<vmem>>, %arg22: memref<8x64xf32, #tpu.memory_space<vmem>>) attributes {dimension_semantics = [], scalar_prefetch = 0 : i64, scratch_operands = 1 : i64, tpu.core_type = #tpu.core_type<tc>} {
    %c0 = arith.constant 0 : index
    %c0_0 = arith.constant 0 : index
    %0 = vector.load %arg0[%c0, %c0_0] : memref<2x8xf32, #tpu.memory_space<vmem>>, vector<2x8xf32>
    %c0_1 = arith.constant 0 : index
    %c0_2 = arith.constant 0 : index
    %1 = vector.load %arg1[%c0_1, %c0_2] : memref<8x256xf32, #tpu.memory_space<vmem>>, vector<8x256xf32>
    %cst = arith.constant dense<0.000000e+00> : vector<2x256xf32>
    %2 = tpu.matmul %0, %1, %cst {dimension_numbers = #tpu.dot_dimension_numbers<[1], [0], [0], [1], [0, 0, 1, 1], [], []>} : vector<2x8xf32>, vector<8x256xf32>, vector<2x256xf32> -> vector<2x256xf32>
    %c0_3 = arith.constant 0 : index
    %c0_4 = arith.constant 0 : index
    %3 = vector.load %arg2[%c0_3, %c0_4] : memref<1x256xf32, #tpu.memory_space<vmem>>, vector<1x256xf32>
    %4 = vector.broadcast %3 : vector<1x256xf32> to vector<2x256xf32>
    %5 = arith.addf %2, %4 : vector<2x256xf32>
    %cst_5 = arith.constant 0.000000e+00 : f32
    %6 = vector.broadcast %cst_5 : f32 to vector<2x256xf32>
    %7 = arith.maximumf %5, %6 : vector<2x256xf32>
    %8 = vector.extract_strided_slice %7 {offsets = [0, 0], sizes = [2, 64], strides = [1, 1]} : vector<2x256xf32> to vector<2x64xf32>
    %c0_6 = arith.constant 0 : index
    %c0_7 = arith.constant 0 : index
    %9 = vector.load %arg22[%c0_6, %c0_7] : memref<8x64xf32, #tpu.memory_space<vmem>>, vector<2x64xf32>
    tpu.vector_store %arg22[%c0_6, %c0_7], %8 {strides = array<i32>} : memref<8x64xf32, #tpu.memory_space<vmem>>, vector<2x64xf32>,
    %10 = vector.extract_strided_slice %7 {offsets = [0, 64], sizes = [2, 64], strides = [1, 1]} : vector<2x256xf32> to vector<2x64xf32>
    %c2 = arith.constant 2 : index
    %c0_8 = arith.constant 0 : index
    %11 = vector.load %arg22[%c2, %c0_8] : memref<8x64xf32, #tpu.memory_space<vmem>>, vector<2x64xf32>
    tpu.vector_store %arg22[%c2, %c0_8], %10 {strides = array<i32>} : memref<8x64xf32, #tpu.memory_space<vmem>>, vector<2x64xf32>,
    %12 = vector.extract_strided_slice %7 {offsets = [0, 128], sizes = [2, 64], strides = [1, 1]} : vector<2x256xf32> to vector<2x64xf32>
    %c4 = arith.constant 4 : index
    %c0_9 = arith.constant 0 : index
    %13 = vector.load %arg22[%c4, %c0_9] : memref<8x64xf32, #tpu.memory_space<vmem>>, vector<2x64xf32>
    tpu.vector_store %arg22[%c4, %c0_9], %12 {strides = array<i32>} : memref<8x64xf32, #tpu.memory_space<vmem>>, vector<2x64xf32>,
    %14 = vector.extract_strided_slice %7 {offsets = [0, 192], sizes = [2, 64], strides = [1, 1]} : vector<2x256xf32> to vector<2x64xf32>
    %c6 = arith.constant 6 : index
    %c0_10 = arith.constant 0 : index
    %15 = vector.load %arg22[%c6, %c0_10] : memref<8x64xf32, #tpu.memory_space<vmem>>, vector<2x64xf32>
    tpu.vector_store %arg22[%c6, %c0_10], %14 {strides = array<i32>} : memref<8x64xf32, #tpu.memory_space<vmem>>, vector<2x64xf32>,
    %c0_11 = arith.constant 0 : index
    %c0_12 = arith.constant 0 : index
    %16 = vector.load %arg22[%c0_11, %c0_12] : memref<8x64xf32, #tpu.memory_space<vmem>>, vector<8x64xf32>
    %c0_13 = arith.constant 0 : index
    %c0_14 = arith.constant 0 : index
    %17 = vector.load %arg5[%c0_13, %c0_14] : memref<1x176xf32, #tpu.memory_space<vmem>>, vector<1x176xf32>
    %c0_15 = arith.constant 0 : index
    %c0_16 = arith.constant 0 : index
    %c0_17 = arith.constant 0 : index
    %18 = vector.load %arg3[%c0_15, %c0_16, %c0_17] : memref<5x64x176xf32, #tpu.memory_space<vmem>>, vector<1x64x176xf32>
    %19 = vector.shape_cast %18 : vector<1x64x176xf32> to vector<64x176xf32>
    %cst_18 = arith.constant dense<0.000000e+00> : vector<8x176xf32>
    %20 = tpu.matmul %16, %19, %cst_18 {dimension_numbers = #tpu.dot_dimension_numbers<[1], [0], [0], [1], [0, 0, 1, 1], [], []>} : vector<8x64xf32>, vector<64x176xf32>, vector<8x176xf32> -> vector<8x176xf32>
    %c0_19 = arith.constant 0 : index
    %c0_20 = arith.constant 0 : index
    %c0_21 = arith.constant 0 : index
    %21 = vector.load %arg4[%c0_19, %c0_20, %c0_21] : memref<5x22x8xf32, #tpu.memory_space<vmem>>, vector<1x22x8xf32>
    %22 = vector.shape_cast %21 : vector<1x22x8xf32> to vector<22x8xf32>
    %cst_22 = arith.constant dense<0.000000e+00> : vector<22x176xf32>
    %23 = tpu.matmul %22, %20, %cst_22 {dimension_numbers = #tpu.dot_dimension_numbers<[1], [0], [0], [1], [0, 0, 1, 1], [], []>} : vector<22x8xf32>, vector<8x176xf32>, vector<22x176xf32> -> vector<22x176xf32>
    %24 = vector.broadcast %17 : vector<1x176xf32> to vector<22x176xf32>
    %25 = arith.addf %24, %23 : vector<22x176xf32>
    %c1 = arith.constant 1 : index
    %c0_23 = arith.constant 0 : index
    %c0_24 = arith.constant 0 : index
    %26 = vector.load %arg3[%c1, %c0_23, %c0_24] : memref<5x64x176xf32, #tpu.memory_space<vmem>>, vector<1x64x176xf32>
    %27 = vector.shape_cast %26 : vector<1x64x176xf32> to vector<64x176xf32>
    %cst_25 = arith.constant dense<0.000000e+00> : vector<8x176xf32>
    %28 = tpu.matmul %16, %27, %cst_25 {dimension_numbers = #tpu.dot_dimension_numbers<[1], [0], [0], [1], [0, 0, 1, 1], [], []>} : vector<8x64xf32>, vector<64x176xf32>, vector<8x176xf32> -> vector<8x176xf32>
    %c1_26 = arith.constant 1 : index
    %c0_27 = arith.constant 0 : index
    %c0_28 = arith.constant 0 : index
    %29 = vector.load %arg4[%c1_26, %c0_27, %c0_28] : memref<5x22x8xf32, #tpu.memory_space<vmem>>, vector<1x22x8xf32>
    %30 = vector.shape_cast %29 : vector<1x22x8xf32> to vector<22x8xf32>
    %cst_29 = arith.constant dense<0.000000e+00> : vector<22x176xf32>
    %31 = tpu.matmul %30, %28, %cst_29 {dimension_numbers = #tpu.dot_dimension_numbers<[1], [0], [0], [1], [0, 0, 1, 1], [], []>} : vector<22x8xf32>, vector<8x176xf32>, vector<22x176xf32> -> vector<22x176xf32>
    %32 = arith.addf %25, %31 : vector<22x176xf32>
    %c2_30 = arith.constant 2 : index
    %c0_31 = arith.constant 0 : index
    %c0_32 = arith.constant 0 : index
    %33 = vector.load %arg3[%c2_30, %c0_31, %c0_32] : memref<5x64x176xf32, #tpu.memory_space<vmem>>, vector<1x64x176xf32>
    %34 = vector.shape_cast %33 : vector<1x64x176xf32> to vector<64x176xf32>
    %cst_33 = arith.constant dense<0.000000e+00> : vector<8x176xf32>
    %35 = tpu.matmul %16, %34, %cst_33 {dimension_numbers = #tpu.dot_dimension_numbers<[1], [0], [0], [1], [0, 0, 1, 1], [], []>} : vector<8x64xf32>, vector<64x176xf32>, vector<8x176xf32> -> vector<8x176xf32>
    %c2_34 = arith.constant 2 : index
    %c0_35 = arith.constant 0 : index
    %c0_36 = arith.constant 0 : index
    %36 = vector.load %arg4[%c2_34, %c0_35, %c0_36] : memref<5x22x8xf32, #tpu.memory_space<vmem>>, vector<1x22x8xf32>
    %37 = vector.shape_cast %36 : vector<1x22x8xf32> to vector<22x8xf32>
    %cst_37 = arith.constant dense<0.000000e+00> : vector<22x176xf32>
    %38 = tpu.matmul %37, %35, %cst_37 {dimension_numbers = #tpu.dot_dimension_numbers<[1], [0], [0], [1], [0, 0, 1, 1], [], []>} : vector<22x8xf32>, vector<8x176xf32>, vector<22x176xf32> -> vector<22x176xf32>
    %39 = arith.addf %32, %38 : vector<22x176xf32>
    %c3 = arith.constant 3 : index
    %c0_38 = arith.constant 0 : index
    %c0_39 = arith.constant 0 : index
    %40 = vector.load %arg3[%c3, %c0_38, %c0_39] : memref<5x64x176xf32, #tpu.memory_space<vmem>>, vector<1x64x176xf32>
    %41 = vector.shape_cast %40 : vector<1x64x176xf32> to vector<64x176xf32>
    %cst_40 = arith.constant dense<0.000000e+00> : vector<8x176xf32>
    %42 = tpu.matmul %16, %41, %cst_40 {dimension_numbers = #tpu.dot_dimension_numbers<[1], [0], [0], [1], [0, 0, 1, 1], [], []>} : vector<8x64xf32>, vector<64x176xf32>, vector<8x176xf32> -> vector<8x176xf32>
    %c3_41 = arith.constant 3 : index
    %c0_42 = arith.constant 0 : index
    %c0_43 = arith.constant 0 : index
    %43 = vector.load %arg4[%c3_41, %c0_42, %c0_43] : memref<5x22x8xf32, #tpu.memory_space<vmem>>, vector<1x22x8xf32>
    %44 = vector.shape_cast %43 : vector<1x22x8xf32> to vector<22x8xf32>
    %cst_44 = arith.constant dense<0.000000e+00> : vector<22x176xf32>
    %45 = tpu.matmul %44, %42, %cst_44 {dimension_numbers = #tpu.dot_dimension_numbers<[1], [0], [0], [1], [0, 0, 1, 1], [], []>} : vector<22x8xf32>, vector<8x176xf32>, vector<22x176xf32> -> vector<22x176xf32>
    %46 = arith.addf %39, %45 : vector<22x176xf32>
    %c4_45 = arith.constant 4 : index
    %c0_46 = arith.constant 0 : index
    %c0_47 = arith.constant 0 : index
    %47 = vector.load %arg3[%c4_45, %c0_46, %c0_47] : memref<5x64x176xf32, #tpu.memory_space<vmem>>, vector<1x64x176xf32>
    %48 = vector.shape_cast %47 : vector<1x64x176xf32> to vector<64x176xf32>
    %cst_48 = arith.constant dense<0.000000e+00> : vector<8x176xf32>
    %49 = tpu.matmul %16, %48, %cst_48 {dimension_numbers = #tpu.dot_dimension_numbers<[1], [0], [0], [1], [0, 0, 1, 1], [], []>} : vector<8x64xf32>, vector<64x176xf32>, vector<8x176xf32> -> vector<8x176xf32>
    %c4_49 = arith.constant 4 : index
    %c0_50 = arith.constant 0 : index
    %c0_51 = arith.constant 0 : index
    %50 = vector.load %arg4[%c4_49, %c0_50, %c0_51] : memref<5x22x8xf32, #tpu.memory_space<vmem>>, vector<1x22x8xf32>
    %51 = vector.shape_cast %50 : vector<1x22x8xf32> to vector<22x8xf32>
    %cst_52 = arith.constant dense<0.000000e+00> : vector<22x176xf32>
    %52 = tpu.matmul %51, %49, %cst_52 {dimension_numbers = #tpu.dot_dimension_numbers<[1], [0], [0], [1], [0, 0, 1, 1], [], []>} : vector<22x8xf32>, vector<8x176xf32>, vector<22x176xf32> -> vector<22x176xf32>
    %53 = arith.addf %46, %52 : vector<22x176xf32>
    %c0_53 = arith.constant 0 : index
    %54 = memref.load %arg20[%c0_53] : memref<2xf32, #tpu.memory_space<smem>>
    %cst_54 = arith.constant dense<0.000000e+00> : vector<176xf32>
    %55 = vector.multi_reduction <add>, %53, %cst_54 [0] : vector<22x176xf32> to vector<176xf32>
    %56 = vector.shape_cast %55 : vector<176xf32> to vector<1x176xf32>
    %57 = arith.mulf %53, %53 : vector<22x176xf32>
    %cst_55 = arith.constant dense<0.000000e+00> : vector<176xf32>
    %58 = vector.multi_reduction <add>, %57, %cst_55 [0] : vector<22x176xf32> to vector<176xf32>
    %59 = vector.shape_cast %58 : vector<176xf32> to vector<1x176xf32>
    %c0_56 = arith.constant 0 : index
    %c0_57 = arith.constant 0 : index
    %60 = vector.load %arg6[%c0_56, %c0_57] : memref<176x16xf32, #tpu.memory_space<vmem>>, vector<176x16xf32>
    %cst_58 = arith.constant dense<0.000000e+00> : vector<1x16xf32>
    %61 = tpu.matmul %56, %60, %cst_58 {dimension_numbers = #tpu.dot_dimension_numbers<[1], [0], [0], [1], [0, 0, 1, 1], [], []>} : vector<1x176xf32>, vector<176x16xf32>, vector<1x16xf32> -> vector<1x16xf32>
    %cst_59 = arith.constant 0.00413223123 : f32
    %62 = vector.broadcast %cst_59 : f32 to vector<1x16xf32>
    %63 = arith.mulf %61, %62 : vector<1x16xf32>
    %c0_60 = arith.constant 0 : index
    %c0_61 = arith.constant 0 : index
    %64 = vector.load %arg6[%c0_60, %c0_61] : memref<176x16xf32, #tpu.memory_space<vmem>>, vector<176x16xf32>
    %cst_62 = arith.constant dense<0.000000e+00> : vector<1x16xf32>
    %65 = tpu.matmul %59, %64, %cst_62 {dimension_numbers = #tpu.dot_dimension_numbers<[1], [0], [0], [1], [0, 0, 1, 1], [], []>} : vector<1x176xf32>, vector<176x16xf32>, vector<1x16xf32> -> vector<1x16xf32>
    %cst_63 = arith.constant 0.00413223123 : f32
    %66 = vector.broadcast %cst_63 : f32 to vector<1x16xf32>
    %67 = arith.mulf %65, %66 : vector<1x16xf32>
    %68 = arith.mulf %63, %63 : vector<1x16xf32>
    %69 = arith.subf %67, %68 : vector<1x16xf32>
    %c0_64 = arith.constant 0 : index
    %c0_65 = arith.constant 0 : index
    %70 = vector.load %arg8[%c0_64, %c0_65] : memref<1x16xf32, #tpu.memory_space<vmem>>, vector<1x16xf32>
    %cst_66 = arith.constant 9.99999974E-6 : f32
    %71 = vector.broadcast %cst_66 : f32 to vector<1x16xf32>
    %72 = arith.addf %69, %71 : vector<1x16xf32>
    %73 = math.rsqrt %72 : vector<1x16xf32>
    %74 = arith.mulf %70, %73 : vector<1x16xf32>
    %c0_67 = arith.constant 0 : index
    %c0_68 = arith.constant 0 : index
    %75 = vector.load %arg9[%c0_67, %c0_68] : memref<1x16xf32, #tpu.memory_space<vmem>>, vector<1x16xf32>
    %76 = arith.mulf %63, %74 : vector<1x16xf32>
    %77 = arith.subf %75, %76 : vector<1x16xf32>
    %c0_69 = arith.constant 0 : index
    %c0_70 = arith.constant 0 : index
    %78 = vector.load %arg7[%c0_69, %c0_70] : memref<16x176xf32, #tpu.memory_space<vmem>>, vector<16x176xf32>
    %cst_71 = arith.constant dense<0.000000e+00> : vector<1x176xf32>
    %79 = tpu.matmul %74, %78, %cst_71 {dimension_numbers = #tpu.dot_dimension_numbers<[1], [0], [0], [1], [0, 0, 1, 1], [], []>} : vector<1x16xf32>, vector<16x176xf32>, vector<1x176xf32> -> vector<1x176xf32>
    %c0_72 = arith.constant 0 : index
    %c0_73 = arith.constant 0 : index
    %80 = vector.load %arg7[%c0_72, %c0_73] : memref<16x176xf32, #tpu.memory_space<vmem>>, vector<16x176xf32>
    %cst_74 = arith.constant dense<0.000000e+00> : vector<1x176xf32>
    %81 = tpu.matmul %77, %80, %cst_74 {dimension_numbers = #tpu.dot_dimension_numbers<[1], [0], [0], [1], [0, 0, 1, 1], [], []>} : vector<1x16xf32>, vector<16x176xf32>, vector<1x176xf32> -> vector<1x176xf32>
    %82 = vector.broadcast %79 : vector<1x176xf32> to vector<22x176xf32>
    %83 = arith.mulf %53, %82 : vector<22x176xf32>
    %84 = vector.broadcast %81 : vector<1x176xf32> to vector<22x176xf32>
    %85 = arith.addf %83, %84 : vector<22x176xf32>
    %cst_75 = arith.constant 0.000000e+00 : f32
    %86 = vector.broadcast %cst_75 : f32 to vector<22x176xf32>
    %87 = arith.cmpf ogt, %85, %86 : vector<22x176xf32>
    %88 = vector.broadcast %54 : f32 to vector<22x176xf32>
    %89 = arith.mulf %88, %85 : vector<22x176xf32>
    %90 = arith.select %87, %85, %89 : vector<22x176xi1>, vector<22x176xf32>
    %c0_76 = arith.constant 0 : index
    %c0_77 = arith.constant 0 : index
    %91 = vector.load %arg12[%c0_76, %c0_77] : memref<1x208xf32, #tpu.memory_space<vmem>>, vector<1x208xf32>
    %c0_78 = arith.constant 0 : index
    %c0_79 = arith.constant 0 : index
    %c0_80 = arith.constant 0 : index
    %92 = vector.load %arg10[%c0_78, %c0_79, %c0_80] : memref<5x176x208xf32, #tpu.memory_space<vmem>>, vector<1x176x208xf32>
    %93 = vector.shape_cast %92 : vector<1x176x208xf32> to vector<176x208xf32>
    %cst_81 = arith.constant dense<0.000000e+00> : vector<22x208xf32>
    %94 = tpu.matmul %90, %93, %cst_81 {dimension_numbers = #tpu.dot_dimension_numbers<[1], [0], [0], [1], [0, 0, 1, 1], [], []>} : vector<22x176xf32>, vector<176x208xf32>, vector<22x208xf32> -> vector<22x208xf32>
    %c0_82 = arith.constant 0 : index
    %c0_83 = arith.constant 0 : index
    %c0_84 = arith.constant 0 : index
    %95 = vector.load %arg11[%c0_82, %c0_83, %c0_84] : memref<5x52x22xf32, #tpu.memory_space<vmem>>, vector<1x52x22xf32>
    %96 = vector.shape_cast %95 : vector<1x52x22xf32> to vector<52x22xf32>
    %cst_85 = arith.constant dense<0.000000e+00> : vector<52x208xf32>
    %97 = tpu.matmul %96, %94, %cst_85 {dimension_numbers = #tpu.dot_dimension_numbers<[1], [0], [0], [1], [0, 0, 1, 1], [], []>} : vector<52x22xf32>, vector<22x208xf32>, vector<52x208xf32> -> vector<52x208xf32>
    %98 = vector.broadcast %91 : vector<1x208xf32> to vector<52x208xf32>
    %99 = arith.addf %98, %97 : vector<52x208xf32>
    %c1_86 = arith.constant 1 : index
    %c0_87 = arith.constant 0 : index
    %c0_88 = arith.constant 0 : index
    %100 = vector.load %arg10[%c1_86, %c0_87, %c0_88] : memref<5x176x208xf32, #tpu.memory_space<vmem>>, vector<1x176x208xf32>
    %101 = vector.shape_cast %100 : vector<1x176x208xf32> to vector<176x208xf32>
    %cst_89 = arith.constant dense<0.000000e+00> : vector<22x208xf32>
    %102 = tpu.matmul %90, %101, %cst_89 {dimension_numbers = #tpu.dot_dimension_numbers<[1], [0], [0], [1], [0, 0, 1, 1], [], []>} : vector<22x176xf32>, vector<176x208xf32>, vector<22x208xf32> -> vector<22x208xf32>
    %c1_90 = arith.constant 1 : index
    %c0_91 = arith.constant 0 : index
    %c0_92 = arith.constant 0 : index
    %103 = vector.load %arg11[%c1_90, %c0_91, %c0_92] : memref<5x52x22xf32, #tpu.memory_space<vmem>>, vector<1x52x22xf32>
    %104 = vector.shape_cast %103 : vector<1x52x22xf32> to vector<52x22xf32>
    %cst_93 = arith.constant dense<0.000000e+00> : vector<52x208xf32>
    %105 = tpu.matmul %104, %102, %cst_93 {dimension_numbers = #tpu.dot_dimension_numbers<[1], [0], [0], [1], [0, 0, 1, 1], [], []>} : vector<52x22xf32>, vector<22x208xf32>, vector<52x208xf32> -> vector<52x208xf32>
    %106 = arith.addf %99, %105 : vector<52x208xf32>
    %c2_94 = arith.constant 2 : index
    %c0_95 = arith.constant 0 : index
    %c0_96 = arith.constant 0 : index
    %107 = vector.load %arg10[%c2_94, %c0_95, %c0_96] : memref<5x176x208xf32, #tpu.memory_space<vmem>>, vector<1x176x208xf32>
    %108 = vector.shape_cast %107 : vector<1x176x208xf32> to vector<176x208xf32>
    %cst_97 = arith.constant dense<0.000000e+00> : vector<22x208xf32>
    %109 = tpu.matmul %90, %108, %cst_97 {dimension_numbers = #tpu.dot_dimension_numbers<[1], [0], [0], [1], [0, 0, 1, 1], [], []>} : vector<22x176xf32>, vector<176x208xf32>, vector<22x208xf32> -> vector<22x208xf32>
    %c2_98 = arith.constant 2 : index
    %c0_99 = arith.constant 0 : index
    %c0_100 = arith.constant 0 : index
    %110 = vector.load %arg11[%c2_98, %c0_99, %c0_100] : memref<5x52x22xf32, #tpu.memory_space<vmem>>, vector<1x52x22xf32>
    %111 = vector.shape_cast %110 : vector<1x52x22xf32> to vector<52x22xf32>
    %cst_101 = arith.constant dense<0.000000e+00> : vector<52x208xf32>
    %112 = tpu.matmul %111, %109, %cst_101 {dimension_numbers = #tpu.dot_dimension_numbers<[1], [0], [0], [1], [0, 0, 1, 1], [], []>} : vector<52x22xf32>, vector<22x208xf32>, vector<52x208xf32> -> vector<52x208xf32>
    %113 = arith.addf %106, %112 : vector<52x208xf32>
    %c3_102 = arith.constant 3 : index
    %c0_103 = arith.constant 0 : index
    %c0_104 = arith.constant 0 : index
    %114 = vector.load %arg10[%c3_102, %c0_103, %c0_104] : memref<5x176x208xf32, #tpu.memory_space<vmem>>, vector<1x176x208xf32>
    %115 = vector.shape_cast %114 : vector<1x176x208xf32> to vector<176x208xf32>
    %cst_105 = arith.constant dense<0.000000e+00> : vector<22x208xf32>
    %116 = tpu.matmul %90, %115, %cst_105 {dimension_numbers = #tpu.dot_dimension_numbers<[1], [0], [0], [1], [0, 0, 1, 1], [], []>} : vector<22x176xf32>, vector<176x208xf32>, vector<22x208xf32> -> vector<22x208xf32>
    %c3_106 = arith.constant 3 : index
    %c0_107 = arith.constant 0 : index
    %c0_108 = arith.constant 0 : index
    %117 = vector.load %arg11[%c3_106, %c0_107, %c0_108] : memref<5x52x22xf32, #tpu.memory_space<vmem>>, vector<1x52x22xf32>
    %118 = vector.shape_cast %117 : vector<1x52x22xf32> to vector<52x22xf32>
    %cst_109 = arith.constant dense<0.000000e+00> : vector<52x208xf32>
    %119 = tpu.matmul %118, %116, %cst_109 {dimension_numbers = #tpu.dot_dimension_numbers<[1], [0], [0], [1], [0, 0, 1, 1], [], []>} : vector<52x22xf32>, vector<22x208xf32>, vector<52x208xf32> -> vector<52x208xf32>
    %120 = arith.addf %113, %119 : vector<52x208xf32>
    %c4_110 = arith.constant 4 : index
    %c0_111 = arith.constant 0 : index
    %c0_112 = arith.constant 0 : index
    %121 = vector.load %arg10[%c4_110, %c0_111, %c0_112] : memref<5x176x208xf32, #tpu.memory_space<vmem>>, vector<1x176x208xf32>
    %122 = vector.shape_cast %121 : vector<1x176x208xf32> to vector<176x208xf32>
    %cst_113 = arith.constant dense<0.000000e+00> : vector<22x208xf32>
    %123 = tpu.matmul %90, %122, %cst_113 {dimension_numbers = #tpu.dot_dimension_numbers<[1], [0], [0], [1], [0, 0, 1, 1], [], []>} : vector<22x176xf32>, vector<176x208xf32>, vector<22x208xf32> -> vector<22x208xf32>
    %c4_114 = arith.constant 4 : index
    %c0_115 = arith.constant 0 : index
    %c0_116 = arith.constant 0 : index
    %124 = vector.load %arg11[%c4_114, %c0_115, %c0_116] : memref<5x52x22xf32, #tpu.memory_space<vmem>>, vector<1x52x22xf32>
    %125 = vector.shape_cast %124 : vector<1x52x22xf32> to vector<52x22xf32>
    %cst_117 = arith.constant dense<0.000000e+00> : vector<52x208xf32>
    %126 = tpu.matmul %125, %123, %cst_117 {dimension_numbers = #tpu.dot_dimension_numbers<[1], [0], [0], [1], [0, 0, 1, 1], [], []>} : vector<52x22xf32>, vector<22x208xf32>, vector<52x208xf32> -> vector<52x208xf32>
    %127 = arith.addf %120, %126 : vector<52x208xf32>
    %c1_118 = arith.constant 1 : index
    %128 = memref.load %arg20[%c1_118] : memref<2xf32, #tpu.memory_space<smem>>
    %cst_119 = arith.constant dense<0.000000e+00> : vector<208xf32>
    %129 = vector.multi_reduction <add>, %127, %cst_119 [0] : vector<52x208xf32> to vector<208xf32>
    %130 = vector.shape_cast %129 : vector<208xf32> to vector<1x208xf32>
    %131 = arith.mulf %127, %127 : vector<52x208xf32>
    %cst_120 = arith.constant dense<0.000000e+00> : vector<208xf32>
    %132 = vector.multi_reduction <add>, %131, %cst_120 [0] : vector<52x208xf32> to vector<208xf32>
    %133 = vector.shape_cast %132 : vector<208xf32> to vector<1x208xf32>
    %c0_121 = arith.constant 0 : index
    %c0_122 = arith.constant 0 : index
    %134 = vector.load %arg13[%c0_121, %c0_122] : memref<208x8xf32, #tpu.memory_space<vmem>>, vector<208x8xf32>
    %cst_123 = arith.constant dense<0.000000e+00> : vector<1x8xf32>
    %135 = tpu.matmul %130, %134, %cst_123 {dimension_numbers = #tpu.dot_dimension_numbers<[1], [0], [0], [1], [0, 0, 1, 1], [], []>} : vector<1x208xf32>, vector<208x8xf32>, vector<1x8xf32> -> vector<1x8xf32>
    %cst_124 = arith.constant 7.396450e-04 : f32
    %136 = vector.broadcast %cst_124 : f32 to vector<1x8xf32>
    %137 = arith.mulf %135, %136 : vector<1x8xf32>
    %c0_125 = arith.constant 0 : index
    %c0_126 = arith.constant 0 : index
    %138 = vector.load %arg13[%c0_125, %c0_126] : memref<208x8xf32, #tpu.memory_space<vmem>>, vector<208x8xf32>
    %cst_127 = arith.constant dense<0.000000e+00> : vector<1x8xf32>
    %139 = tpu.matmul %133, %138, %cst_127 {dimension_numbers = #tpu.dot_dimension_numbers<[1], [0], [0], [1], [0, 0, 1, 1], [], []>} : vector<1x208xf32>, vector<208x8xf32>, vector<1x8xf32> -> vector<1x8xf32>
    %cst_128 = arith.constant 7.396450e-04 : f32
    %140 = vector.broadcast %cst_128 : f32 to vector<1x8xf32>
    %141 = arith.mulf %139, %140 : vector<1x8xf32>
    %142 = arith.mulf %137, %137 : vector<1x8xf32>
    %143 = arith.subf %141, %142 : vector<1x8xf32>
    %c0_129 = arith.constant 0 : index
    %c0_130 = arith.constant 0 : index
    %144 = vector.load %arg15[%c0_129, %c0_130] : memref<1x8xf32, #tpu.memory_space<vmem>>, vector<1x8xf32>
    %cst_131 = arith.constant 9.99999974E-6 : f32
    %145 = vector.broadcast %cst_131 : f32 to vector<1x8xf32>
    %146 = arith.addf %143, %145 : vector<1x8xf32>
    %147 = math.rsqrt %146 : vector<1x8xf32>
    %148 = arith.mulf %144, %147 : vector<1x8xf32>
    %c0_132 = arith.constant 0 : index
    %c0_133 = arith.constant 0 : index
    %149 = vector.load %arg16[%c0_132, %c0_133] : memref<1x8xf32, #tpu.memory_space<vmem>>, vector<1x8xf32>
    %150 = arith.mulf %137, %148 : vector<1x8xf32>
    %151 = arith.subf %149, %150 : vector<1x8xf32>
    %c0_134 = arith.constant 0 : index
    %c0_135 = arith.constant 0 : index
    %152 = vector.load %arg14[%c0_134, %c0_135] : memref<8x208xf32, #tpu.memory_space<vmem>>, vector<8x208xf32>
    %cst_136 = arith.constant dense<0.000000e+00> : vector<1x208xf32>
    %153 = tpu.matmul %148, %152, %cst_136 {dimension_numbers = #tpu.dot_dimension_numbers<[1], [0], [0], [1], [0, 0, 1, 1], [], []>} : vector<1x8xf32>, vector<8x208xf32>, vector<1x208xf32> -> vector<1x208xf32>
    %c0_137 = arith.constant 0 : index
    %c0_138 = arith.constant 0 : index
    %154 = vector.load %arg14[%c0_137, %c0_138] : memref<8x208xf32, #tpu.memory_space<vmem>>, vector<8x208xf32>
    %cst_139 = arith.constant dense<0.000000e+00> : vector<1x208xf32>
    %155 = tpu.matmul %151, %154, %cst_139 {dimension_numbers = #tpu.dot_dimension_numbers<[1], [0], [0], [1], [0, 0, 1, 1], [], []>} : vector<1x8xf32>, vector<8x208xf32>, vector<1x208xf32> -> vector<1x208xf32>
    %156 = vector.broadcast %153 : vector<1x208xf32> to vector<52x208xf32>
    %157 = arith.mulf %127, %156 : vector<52x208xf32>
    %158 = vector.broadcast %155 : vector<1x208xf32> to vector<52x208xf32>
    %159 = arith.addf %157, %158 : vector<52x208xf32>
    %cst_140 = arith.constant 0.000000e+00 : f32
    %160 = vector.broadcast %cst_140 : f32 to vector<52x208xf32>
    %161 = arith.cmpf ogt, %159, %160 : vector<52x208xf32>
    %162 = vector.broadcast %128 : f32 to vector<52x208xf32>
    %163 = arith.mulf %162, %159 : vector<52x208xf32>
    %164 = arith.select %161, %159, %163 : vector<52x208xi1>, vector<52x208xf32>
    %c0_141 = arith.constant 0 : index
    %c0_142 = arith.constant 0 : index
    %165 = vector.load %arg19[%c0_141, %c0_142] : memref<1x28xf32, #tpu.memory_space<vmem>>, vector<1x28xf32>
    %c0_143 = arith.constant 0 : index
    %c0_144 = arith.constant 0 : index
    %c0_145 = arith.constant 0 : index
    %166 = vector.load %arg17[%c0_143, %c0_144, %c0_145] : memref<3x208x28xf32, #tpu.memory_space<vmem>>, vector<1x208x28xf32>
    %167 = vector.shape_cast %166 : vector<1x208x28xf32> to vector<208x28xf32>
    %cst_146 = arith.constant dense<0.000000e+00> : vector<52x28xf32>
    %168 = tpu.matmul %164, %167, %cst_146 {dimension_numbers = #tpu.dot_dimension_numbers<[1], [0], [0], [1], [0, 0, 1, 1], [], []>} : vector<52x208xf32>, vector<208x28xf32>, vector<52x28xf32> -> vector<52x28xf32>
    %c0_147 = arith.constant 0 : index
    %c0_148 = arith.constant 0 : index
    %c0_149 = arith.constant 0 : index
    %169 = vector.load %arg18[%c0_147, %c0_148, %c0_149] : memref<3x56x52xf32, #tpu.memory_space<vmem>>, vector<1x56x52xf32>
    %170 = vector.shape_cast %169 : vector<1x56x52xf32> to vector<56x52xf32>
    %cst_150 = arith.constant dense<0.000000e+00> : vector<56x28xf32>
    %171 = tpu.matmul %170, %168, %cst_150 {dimension_numbers = #tpu.dot_dimension_numbers<[1], [0], [0], [1], [0, 0, 1, 1], [], []>} : vector<56x52xf32>, vector<52x28xf32>, vector<56x28xf32> -> vector<56x28xf32>
    %172 = vector.broadcast %165 : vector<1x28xf32> to vector<56x28xf32>
    %173 = arith.addf %172, %171 : vector<56x28xf32>
    %c1_151 = arith.constant 1 : index
    %c0_152 = arith.constant 0 : index
    %c0_153 = arith.constant 0 : index
    %174 = vector.load %arg17[%c1_151, %c0_152, %c0_153] : memref<3x208x28xf32, #tpu.memory_space<vmem>>, vector<1x208x28xf32>
    %175 = vector.shape_cast %174 : vector<1x208x28xf32> to vector<208x28xf32>
    %cst_154 = arith.constant dense<0.000000e+00> : vector<52x28xf32>
    %176 = tpu.matmul %164, %175, %cst_154 {dimension_numbers = #tpu.dot_dimension_numbers<[1], [0], [0], [1], [0, 0, 1, 1], [], []>} : vector<52x208xf32>, vector<208x28xf32>, vector<52x28xf32> -> vector<52x28xf32>
    %c1_155 = arith.constant 1 : index
    %c0_156 = arith.constant 0 : index
    %c0_157 = arith.constant 0 : index
    %177 = vector.load %arg18[%c1_155, %c0_156, %c0_157] : memref<3x56x52xf32, #tpu.memory_space<vmem>>, vector<1x56x52xf32>
    %178 = vector.shape_cast %177 : vector<1x56x52xf32> to vector<56x52xf32>
    %cst_158 = arith.constant dense<0.000000e+00> : vector<56x28xf32>
    %179 = tpu.matmul %178, %176, %cst_158 {dimension_numbers = #tpu.dot_dimension_numbers<[1], [0], [0], [1], [0, 0, 1, 1], [], []>} : vector<56x52xf32>, vector<52x28xf32>, vector<56x28xf32> -> vector<56x28xf32>
    %180 = arith.addf %173, %179 : vector<56x28xf32>
    %c2_159 = arith.constant 2 : index
    %c0_160 = arith.constant 0 : index
    %c0_161 = arith.constant 0 : index
    %181 = vector.load %arg17[%c2_159, %c0_160, %c0_161] : memref<3x208x28xf32, #tpu.memory_space<vmem>>, vector<1x208x28xf32>
    %182 = vector.shape_cast %181 : vector<1x208x28xf32> to vector<208x28xf32>
    %cst_162 = arith.constant dense<0.000000e+00> : vector<52x28xf32>
    %183 = tpu.matmul %164, %182, %cst_162 {dimension_numbers = #tpu.dot_dimension_numbers<[1], [0], [0], [1], [0, 0, 1, 1], [], []>} : vector<52x208xf32>, vector<208x28xf32>, vector<52x28xf32> -> vector<52x28xf32>
    %c2_163 = arith.constant 2 : index
    %c0_164 = arith.constant 0 : index
    %c0_165 = arith.constant 0 : index
    %184 = vector.load %arg18[%c2_163, %c0_164, %c0_165] : memref<3x56x52xf32, #tpu.memory_space<vmem>>, vector<1x56x52xf32>
    %185 = vector.shape_cast %184 : vector<1x56x52xf32> to vector<56x52xf32>
    %cst_166 = arith.constant dense<0.000000e+00> : vector<56x28xf32>
    %186 = tpu.matmul %185, %183, %cst_166 {dimension_numbers = #tpu.dot_dimension_numbers<[1], [0], [0], [1], [0, 0, 1, 1], [], []>} : vector<56x52xf32>, vector<52x28xf32>, vector<56x28xf32> -> vector<56x28xf32>
    %187 = arith.addf %180, %186 : vector<56x28xf32>
    %188 = arith.negf %187 : vector<56x28xf32>
    %189 = math.exp %188 : vector<56x28xf32>
    %cst_167 = arith.constant 1.000000e+00 : f32
    %190 = vector.broadcast %cst_167 : f32 to vector<56x28xf32>
    %191 = arith.addf %190, %189 : vector<56x28xf32>
    %192 = arith.divf %190, %191 : vector<56x28xf32>
    %c0_168 = arith.constant 0 : index
    %c0_169 = arith.constant 0 : index
    %193 = vector.load %arg21[%c0_168, %c0_169] : memref<56x28xf32, #tpu.memory_space<vmem>>, vector<56x28xf32>
    tpu.vector_store %arg21[%c0_168, %c0_169], %192 {strides = array<i32>} : memref<56x28xf32, #tpu.memory_space<vmem>>, vector<56x28xf32>,
    return
  }
}

</mosaic_0001>

<llo_original>
// kernel: _lambda_.1
$region0: #{_lambda_.1}
  #allocation0 [shape = 'u32[]', space=smem, size = 0x4, offset = 0x4, fixed_abs, tag = 'smem constant byte address 0x4 - core index']
  #allocation1 [shape = 'u32[72,128]{1,0:T(1,128)}', space=vmem, size = 0x9000, scoped, tag = 'internal scratch']
  #allocation2 [shape = 'f32[8,64]{1,0:T(8,128)}', space=vmem, size = 0x1000, scoped, tag = 'scratch operand']
  %s0 = inlined_call_operand.vmem [shape: f32[2,8], index: 0, kind: input, shape index: {}]
  %s1 = inlined_call_operand.hbm [shape: f32[8,256], index: 1, kind: input, shape index: {}]
  %s2 = inlined_call_operand.vmem [shape: f32[1,256], index: 2, kind: input, shape index: {}]
  %s3 = inlined_call_operand.hbm [shape: f32[5,64,176], index: 3, kind: input, shape index: {}]
  %s4 = inlined_call_operand.hbm [shape: f32[5,22,8], index: 4, kind: input, shape index: {}]
  %s5 = inlined_call_operand.vmem [shape: f32[1,176], index: 5, kind: input, shape index: {}]
  %s6 = inlined_call_operand.hbm [shape: f32[176,16], index: 6, kind: input, shape index: {}]
  %s7 = inlined_call_operand.hbm [shape: f32[16,176], index: 7, kind: input, shape index: {}]
  %s8 = inlined_call_operand.vmem [shape: f32[1,16], index: 8, kind: input, shape index: {}]
  %s9 = inlined_call_operand.vmem [shape: f32[1,16], index: 9, kind: input, shape index: {}]
  %s10 = inlined_call_operand.hbm [shape: f32[5,176,208], index: 10, kind: input, shape index: {}]
  %s11 = inlined_call_operand.hbm [shape: f32[5,52,22], index: 11, kind: input, shape index: {}]
  %s12 = inlined_call_operand.vmem [shape: f32[1,208], index: 12, kind: input, shape index: {}]
  %s13 = inlined_call_operand.hbm [shape: f32[208,8], index: 13, kind: input, shape index: {}]
  %s14 = inlined_call_operand.vmem [shape: f32[8,208], index: 14, kind: input, shape index: {}]
  %s15 = inlined_call_operand.vmem [shape: f32[1,8], index: 15, kind: input, shape index: {}]
  %s16 = inlined_call_operand.vmem [shape: f32[1,8], index: 16, kind: input, shape index: {}]
  %s17 = inlined_call_operand.hbm [shape: f32[3,208,28], index: 17, kind: input, shape index: {}]
  %s18 = inlined_call_operand.hbm [shape: f32[3,56,52], index: 18, kind: input, shape index: {}]
  %s19 = inlined_call_operand.vmem [shape: f32[1,28], index: 19, kind: input, shape index: {}]
  %s20 = inlined_call_operand.vmem [shape: f32[2], index: 20, kind: input, shape index: {}]
  %s21 = inlined_call_operand.hbm [shape: f32[56,28], index: 21, kind: output, shape index: {}]
  %s22 = sld [smem:[#allocation0]]
  $region138: #{_lambda_.1} parent=0
    _
  %s24 = ssub.s32 1, %s22
  %s25 = scalar_select 0, %s24, %s22
  $region1: #{_lambda_.1} parent=0
    #allocation3 [shape = 'u8[8192]{0}', space=vmem, size = 0x2000, scoped, tag = 'input window, operand 1, single buffered']
    #allocation4 [shape = 's32[1]{0}', space=sflag, size = 0x4, scoped, tag = 'scoped memory for _lambda_.1']
    #allocation5 [shape = 's32[1]{0}', space=sflag, size = 0x4, scoped, tag = 'scoped memory for _lambda_.1']
    #allocation6 [shape = 's32[1]{0}', space=sflag, size = 0x4, scoped, tag = 'scoped memory for _lambda_.1']
    #allocation7 [shape = 'u8[327680]{0}', space=vmem, size = 0x50000, scoped, tag = 'input window, operand 3, single buffered']
    #allocation8 [shape = 's32[1]{0}', space=sflag, size = 0x4, scoped, tag = 'scoped memory for _lambda_.1']
    #allocation9 [shape = 'u8[61440]{0}', space=vmem, size = 0xf000, scoped, tag = 'input window, operand 4, single buffered']
    #allocation10 [shape = 'u8[90112]{0}', space=vmem, size = 0x16000, scoped, tag = 'input window, operand 6, single buffered']
    #allocation11 [shape = 's32[1]{0}', space=sflag, size = 0x4, scoped, tag = 'scoped memory for _lambda_.1']
    #allocation12 [shape = 'u8[16384]{0}', space=vmem, size = 0x4000, scoped, tag = 'input window, operand 7, single buffered']
    #allocation13 [shape = 'u8[901120]{0}', space=vmem, size = 0xdc000, scoped, tag = 'input window, operand 10, single buffered']
    #allocation14 [shape = 's32[1]{0}', space=sflag, size = 0x4, scoped, tag = 'scoped memory for _lambda_.1']
    #allocation15 [shape = 'u8[143360]{0}', space=vmem, size = 0x23000, scoped, tag = 'input window, operand 11, single buffered']
    #allocation16 [shape = 'u8[106496]{0}', space=vmem, size = 0x1a000, scoped, tag = 'input window, operand 13, single buffered']
    #allocation17 [shape = 's32[1]{0}', space=sflag, size = 0x4, scoped, tag = 'scoped memory for _lambda_.1']
    #allocation18 [shape = 'u8[319488]{0}', space=vmem, size = 0x4e000, scoped, tag = 'input window, operand 17, single buffered']
    #allocation19 [shape = 'u8[86016]{0}', space=vmem, size = 0x15000, scoped, tag = 'input window, operand 18, single buffered']
    #allocation20 [shape = 's32[1]{0}', space=sflag, size = 0x4, scoped, tag = 'scoped memory for _lambda_.1']
    #allocation21 [shape = 'u8[512]{0}', space=smem, size = 0x200, scoped, tag = 'input window, operand 20, single buffered']
    #allocation22 [shape = 'u8[28672]{0}', space=vmem, size = 0x7000, scoped, tag = 'output window, operand 0, single buffered']
    %26 = vsyncpa [#allocation4], 0
    %27 = vsyncpa [#allocation8], 0
    %28 = vsyncpa [#allocation11], 0
    %29 = vsyncpa [#allocation14], 0
    %30 = vsyncpa [#allocation17], 0
    %31 = vsyncpa [#allocation20], 0
    %32 = vsyncpa [#allocation6], 0
    %33 = vsyncpa [#allocation5], 0
    // Predicated region
    $region2: #{_lambda_.1} parent=1 // pred_check
      _
    $region3: #{_lambda_.1} parent=1 // pred_check_branch
      %35 = sbr.rel (0) target = $region5
    $region4: #{_lambda_.1} parent=1 // pred_region
      _
    $region5: #{_lambda_.1} parent=1 // pred_fallthru
      _
    // Predicated region
    $region6: #{_lambda_.1} parent=1 // pred_check
      _
    $region7: #{_lambda_.1} parent=1 // pred_check_branch
      %37 = sbr.rel (0) target = $region9
    $region8: #{_lambda_.1} parent=1 // pred_region
      %39 = vsyncadd [#allocation4], 0
      %s41 = sshll.u32 %s1, 4
      %s42 = int_to_ptr.hbm [resolvable:$true] %s41
      %s43 = sshll.u32 [#allocation3], 4
      %s44 = int_to_ptr.vmem [resolvable:$true] %s43
      %46 = dma.hbm_to_vmem [thread:$0]  %s42, 256, %s44, [#allocation4]
    $region9: #{_lambda_.1} parent=1 // pred_fallthru
      _
    // Predicated region
    $region10: #{_lambda_.1} parent=1 // pred_check
      _
    $region11: #{_lambda_.1} parent=1 // pred_check_branch
      %48 = sbr.rel (0) target = $region13
    $region12: #{_lambda_.1} parent=1 // pred_region
      _
    $region13: #{_lambda_.1} parent=1 // pred_fallthru
      _
    // Predicated region
    $region14: #{_lambda_.1} parent=1 // pred_check
      _
    $region15: #{_lambda_.1} parent=1 // pred_check_branch
      %50 = sbr.rel (0) target = $region17
    $region16: #{_lambda_.1} parent=1 // pred_region
      %52 = vsyncadd [#allocation8], 0
      %s53 = sshll.u32 %s3, 4
      %s54 = int_to_ptr.hbm [resolvable:$true] %s53
      %s55 = sshll.u32 [#allocation7], 4
      %s56 = int_to_ptr.vmem [resolvable:$true] %s55
      %61 = dma.hbm_to_vmem [thread:$0]  %s54, 10240, %s56, [#allocation8], 256, 256, 16
    $region17: #{_lambda_.1} parent=1 // pred_fallthru
      _
    // Predicated region
    $region18: #{_lambda_.1} parent=1 // pred_check
      _
    $region19: #{_lambda_.1} parent=1 // pred_check_branch
      %63 = sbr.rel (0) target = $region21
    $region20: #{_lambda_.1} parent=1 // pred_region
      %65 = vsyncadd [#allocation8], 0
      %s66 = sshll.u32 %s4, 4
      %s67 = int_to_ptr.hbm [resolvable:$true] %s66
      %s68 = sshll.u32 [#allocation9], 4
      %s69 = int_to_ptr.vmem [resolvable:$true] %s68
      %74 = dma.hbm_to_vmem [thread:$0]  %s67, 1920, %s69, [#allocation8], 128, 128, 8
    $region21: #{_lambda_.1} parent=1 // pred_fallthru
      _
    // Predicated region
    $region22: #{_lambda_.1} parent=1 // pred_check
      _
    $region23: #{_lambda_.1} parent=1 // pred_check_branch
      %76 = sbr.rel (0) target = $region25
    $region24: #{_lambda_.1} parent=1 // pred_region
      _
    $region25: #{_lambda_.1} parent=1 // pred_fallthru
      _
    // Predicated region
    $region26: #{_lambda_.1} parent=1 // pred_check
      _
    $region27: #{_lambda_.1} parent=1 // pred_check_branch
      %78 = sbr.rel (0) target = $region29
    $region28: #{_lambda_.1} parent=1 // pred_region
      %80 = vsyncadd [#allocation11], 0
      %s81 = sshll.u32 %s6, 4
      %s82 = int_to_ptr.hbm [resolvable:$true] %s81
      %s83 = sshll.u32 [#allocation10], 4
      %s84 = int_to_ptr.vmem [resolvable:$true] %s83
      %89 = dma.hbm_to_vmem [thread:$0]  %s82, 2816, %s84, [#allocation11], 128, 128, 8
    $region29: #{_lambda_.1} parent=1 // pred_fallthru
      _
    // Predicated region
    $region30: #{_lambda_.1} parent=1 // pred_check
      _
    $region31: #{_lambda_.1} parent=1 // pred_check_branch
      %91 = sbr.rel (0) target = $region33
    $region32: #{_lambda_.1} parent=1 // pred_region
      %93 = vsyncadd [#allocation11], 0
      %s94 = sshll.u32 %s7, 4
      %s95 = int_to_ptr.hbm [resolvable:$true] %s94
      %s96 = sshll.u32 [#allocation12], 4
      %s97 = int_to_ptr.vmem [resolvable:$true] %s96
      %102 = dma.hbm_to_vmem [thread:$0]  %s95, 512, %s97, [#allocation11], 256, 256, 16
    $region33: #{_lambda_.1} parent=1 // pred_fallthru
      _
    // Predicated region
    $region34: #{_lambda_.1} parent=1 // pred_check
      _
    $region35: #{_lambda_.1} parent=1 // pred_check_branch
      %104 = sbr.rel (0) target = $region37
    $region36: #{_lambda_.1} parent=1 // pred_region
      _
    $region37: #{_lambda_.1} parent=1 // pred_fallthru
      _
    // Predicated region
    $region38: #{_lambda_.1} parent=1 // pred_check
      _
    $region39: #{_lambda_.1} parent=1 // pred_check_branch
      %106 = sbr.rel (0) target = $region41
    $region40: #{_lambda_.1} parent=1 // pred_region
      _
    $region41: #{_lambda_.1} parent=1 // pred_fallthru
      _
    // Predicated region
    $region42: #{_lambda_.1} parent=1 // pred_check
      _
    $region43: #{_lambda_.1} parent=1 // pred_check_branch
      %108 = sbr.rel (0) target = $region45
    $region44: #{_lambda_.1} parent=1 // pred_region
      %110 = vsyncadd [#allocation14], 0
      %s111 = sshll.u32 %s10, 4
      %s112 = int_to_ptr.hbm [resolvable:$true] %s111
      %s113 = sshll.u32 [#allocation13], 4
      %s114 = int_to_ptr.vmem [resolvable:$true] %s113
      %119 = dma.hbm_to_vmem [thread:$0]  %s112, 28160, %s114, [#allocation14], 256, 256, 16
    $region45: #{_lambda_.1} parent=1 // pred_fallthru
      _
    // Predicated region
    $region46: #{_lambda_.1} parent=1 // pred_check
      _
    $region47: #{_lambda_.1} parent=1 // pred_check_branch
      %121 = sbr.rel (0) target = $region49
    $region48: #{_lambda_.1} parent=1 // pred_region
      %123 = vsyncadd [#allocation14], 0
      %s124 = sshll.u32 %s11, 4
      %s125 = int_to_ptr.hbm [resolvable:$true] %s124
      %s126 = sshll.u32 [#allocation15], 4
      %s127 = int_to_ptr.vmem [resolvable:$true] %s126
      %132 = dma.hbm_to_vmem [thread:$0]  %s125, 4480, %s127, [#allocation14], 128, 128, 8
    $region49: #{_lambda_.1} parent=1 // pred_fallthru
      _
    // Predicated region
    $region50: #{_lambda_.1} parent=1 // pred_check
      _
    $region51: #{_lambda_.1} parent=1 // pred_check_branch
      %134 = sbr.rel (0) target = $region53
    $region52: #{_lambda_.1} parent=1 // pred_region
      _
    $region53: #{_lambda_.1} parent=1 // pred_fallthru
      _
    // Predicated region
    $region54: #{_lambda_.1} parent=1 // pred_check
      _
    $region55: #{_lambda_.1} parent=1 // pred_check_branch
      %136 = sbr.rel (0) target = $region57
    $region56: #{_lambda_.1} parent=1 // pred_region
      %138 = vsyncadd [#allocation17], 0
      %s139 = sshll.u32 %s13, 4
      %s140 = int_to_ptr.hbm [resolvable:$true] %s139
      %s141 = sshll.u32 [#allocation16], 4
      %s142 = int_to_ptr.vmem [resolvable:$true] %s141
      %147 = dma.hbm_to_vmem [thread:$0]  %s140, 3328, %s142, [#allocation17], 128, 128, 8
    $region57: #{_lambda_.1} parent=1 // pred_fallthru
      _
    // Predicated region
    $region58: #{_lambda_.1} parent=1 // pred_check
      _
    $region59: #{_lambda_.1} parent=1 // pred_check_branch
      %149 = sbr.rel (0) target = $region61
    $region60: #{_lambda_.1} parent=1 // pred_region
      _
    $region61: #{_lambda_.1} parent=1 // pred_fallthru
      _
    // Predicated region
    $region62: #{_lambda_.1} parent=1 // pred_check
      _
    $region63: #{_lambda_.1} parent=1 // pred_check_branch
      %151 = sbr.rel (0) target = $region65
    $region64: #{_lambda_.1} parent=1 // pred_region
      _
    $region65: #{_lambda_.1} parent=1 // pred_fallthru
      _
    // Predicated region
    $region66: #{_lambda_.1} parent=1 // pred_check
      _
    $region67: #{_lambda_.1} parent=1 // pred_check_branch
      %153 = sbr.rel (0) target = $region69
    $region68: #{_lambda_.1} parent=1 // pred_region
      _
    $region69: #{_lambda_.1} parent=1 // pred_fallthru
      _
    // Predicated region
    $region70: #{_lambda_.1} parent=1 // pred_check
      _
    $region71: #{_lambda_.1} parent=1 // pred_check_branch
      %155 = sbr.rel (0) target = $region73
    $region72: #{_lambda_.1} parent=1 // pred_region
      %157 = vsyncadd [#allocation17], 0
      %s158 = sshll.u32 %s17, 4
      %s159 = int_to_ptr.hbm [resolvable:$true] %s158
      %s160 = sshll.u32 [#allocation18], 4
      %s161 = int_to_ptr.vmem [resolvable:$true] %s160
      %166 = dma.hbm_to_vmem [thread:$0]  %s159, 9984, %s161, [#allocation17], 128, 128, 8
    $region73: #{_lambda_.1} parent=1 // pred_fallthru
      _
    // Predicated region
    $region74: #{_lambda_.1} parent=1 // pred_check
      _
    $region75: #{_lambda_.1} parent=1 // pred_check_branch
      %168 = sbr.rel (0) target = $region77
    $region76: #{_lambda_.1} parent=1 // pred_region
      %170 = vsyncadd [#allocation20], 0
      %s171 = sshll.u32 %s18, 4
      %s172 = int_to_ptr.hbm [resolvable:$true] %s171
      %s173 = sshll.u32 [#allocation19], 4
      %s174 = int_to_ptr.vmem [resolvable:$true] %s173
      %179 = dma.hbm_to_vmem [thread:$0]  %s172, 2688, %s174, [#allocation20], 128, 128, 8
    $region77: #{_lambda_.1} parent=1 // pred_fallthru
      _
    // Predicated region
    $region78: #{_lambda_.1} parent=1 // pred_check
      _
    $region79: #{_lambda_.1} parent=1 // pred_check_branch
      %181 = sbr.rel (0) target = $region81
    $region80: #{_lambda_.1} parent=1 // pred_region
      _
    $region81: #{_lambda_.1} parent=1 // pred_fallthru
      _
    // Predicated region
    $region82: #{_lambda_.1} parent=1 // pred_check
      _
    $region83: #{_lambda_.1} parent=1 // pred_check_branch
      %183 = sbr.rel (0) target = $region85
    $region84: #{_lambda_.1} parent=1 // pred_region
      %185 = vsyncadd [#allocation6], 0
      %s187 = sshll.u32 %s20, 4
      %s188 = int_to_ptr.vmem [resolvable:$true] %s187
      %190 = dma.vmem_to_smem %s188, 16, [#allocation21], [#allocation6]
    $region85: #{_lambda_.1} parent=1 // pred_fallthru
      _
    // Predicated region
    $region86: #{_lambda_.1} parent=1 // pred_check
      _
    $region87: #{_lambda_.1} parent=1 // pred_check_branch
      %192 = sbr.rel (0) target = $region89
    $region88: #{_lambda_.1} parent=1 // pred_region
      %194 = dma.done [#allocation4], 256
    $region89: #{_lambda_.1} parent=1 // pred_fallthru
      _
    // Predicated region
    $region90: #{_lambda_.1} parent=1 // pred_check
      _
    $region91: #{_lambda_.1} parent=1 // pred_check_branch
      %196 = sbr.rel (0) target = $region93
    $region92: #{_lambda_.1} parent=1 // pred_region
      %198 = dma.done [#allocation8], 10240
    $region93: #{_lambda_.1} parent=1 // pred_fallthru
      _
    // Predicated region
    $region94: #{_lambda_.1} parent=1 // pred_check
      _
    $region95: #{_lambda_.1} parent=1 // pred_check_branch
      %200 = sbr.rel (0) target = $region97
    $region96: #{_lambda_.1} parent=1 // pred_region
      %202 = dma.done [#allocation8], 1920
    $region97: #{_lambda_.1} parent=1 // pred_fallthru
      _
    // Predicated region
    $region98: #{_lambda_.1} parent=1 // pred_check
      _
    $region99: #{_lambda_.1} parent=1 // pred_check_branch
      %204 = sbr.rel (0) target = $region101
    $region100: #{_lambda_.1} parent=1 // pred_region
      %206 = dma.done [#allocation11], 2816
    $region101: #{_lambda_.1} parent=1 // pred_fallthru
      _
    // Predicated region
    $region102: #{_lambda_.1} parent=1 // pred_check
      _
    $region103: #{_lambda_.1} parent=1 // pred_check_branch
      %208 = sbr.rel (0) target = $region105
    $region104: #{_lambda_.1} parent=1 // pred_region
      %210 = dma.done [#allocation11], 512
    $region105: #{_lambda_.1} parent=1 // pred_fallthru
      _
    // Predicated region
    $region106: #{_lambda_.1} parent=1 // pred_check
      _
    $region107: #{_lambda_.1} parent=1 // pred_check_branch
      %212 = sbr.rel (0) target = $region109
    $region108: #{_lambda_.1} parent=1 // pred_region
      %214 = dma.done [#allocation14], 28160
    $region109: #{_lambda_.1} parent=1 // pred_fallthru
      _
    // Predicated region
    $region110: #{_lambda_.1} parent=1 // pred_check
      _
    $region111: #{_lambda_.1} parent=1 // pred_check_branch
      %216 = sbr.rel (0) target = $region113
    $region112: #{_lambda_.1} parent=1 // pred_region
      %218 = dma.done [#allocation14], 4480
    $region113: #{_lambda_.1} parent=1 // pred_fallthru
      _
    // Predicated region
    $region114: #{_lambda_.1} parent=1 // pred_check
      _
    $region115: #{_lambda_.1} parent=1 // pred_check_branch
      %220 = sbr.rel (0) target = $region117
    $region116: #{_lambda_.1} parent=1 // pred_region
      %222 = dma.done [#allocation17], 3328
    $region117: #{_lambda_.1} parent=1 // pred_fallthru
      _
    // Predicated region
    $region118: #{_lambda_.1} parent=1 // pred_check
      _
    $region119: #{_lambda_.1} parent=1 // pred_check_branch
      %224 = sbr.rel (0) target = $region121
    $region120: #{_lambda_.1} parent=1 // pred_region
      %226 = dma.done [#allocation17], 9984
    $region121: #{_lambda_.1} parent=1 // pred_fallthru
      _
    // Predicated region
    $region122: #{_lambda_.1} parent=1 // pred_check
      _
    $region123: #{_lambda_.1} parent=1 // pred_check_branch
      %228 = sbr.rel (0) target = $region125
    $region124: #{_lambda_.1} parent=1 // pred_region
      %230 = dma.done [#allocation20], 2688
    $region125: #{_lambda_.1} parent=1 // pred_fallthru
      _
    // Predicated region
    $region126: #{_lambda_.1} parent=1 // pred_check
      _
    $region127: #{_lambda_.1} parent=1 // pred_check_branch
      %232 = sbr.rel (0) target = $region129
    $region128: #{_lambda_.1} parent=1 // pred_region
      %234 = dma.done [#allocation6], 16
    $region129: #{_lambda_.1} parent=1 // pred_fallthru
      _
    %235 = sfence
    %v236 = vld [vmem:[%s0] sm:$0x3]
    %v237 = vld [vmem:[#allocation3] sm:$0xff]
    %v238 = vld [vmem:[#allocation3 + $0x8] sm:$0xff]
    %v239 = vld [vmem:[%s2] sm:$0x3]
    %v241 = vperm.slane %v239, 0
    %v242 = vperm.slane %v239, 1
    %vm245 = vcmask 64512
    %v247 = vsel %vm245, %v236, 0
    %249 = vmatpush.msra.mxu0 0.0
    %250 = vmatpush.msra.mxu0 0.0
    %251 = vmatpush.msra.mxu0 0.0
    %252 = vmatpush.msra.mxu0 0.0
    %253 = vmatpush.msra.mxu0 0.0
    %254 = vmatpush.msra.mxu0 0.0
    %255 = vmatpush.msra.mxu0 0.0
    %256 = vmatpush.msra.mxu0 0.0
    %257 = vmatpush.msra.mxu0 0.0
    %258 = vmatpush.msra.mxu0 0.0
    %259 = vmatpush.msra.mxu0 0.0
    %260 = vmatpush.msra.mxu0 0.0
    %261 = vmatpush.msra.mxu0 0.0
    %262 = vmatpush.msra.mxu0 0.0
    %263 = vmatpush.msra.mxu0 0.0
    %264 = vmatpush.msra.mxu0 %v237
    %265 = vmatmul.f32.gmra.mxu0 %v247
    %v266 = vpop.f32.mrf.mxu0
    %v267 = vadd.f32 %v241, %v266
    %268 = vdwg.mxu0
    %269 = vmatpush.msra.mxu0 0.0
    %270 = vmatpush.msra.mxu0 0.0
    %271 = vmatpush.msra.mxu0 0.0
    %272 = vmatpush.msra.mxu0 0.0
    %273 = vmatpush.msra.mxu0 0.0
    %274 = vmatpush.msra.mxu0 0.0
    %275 = vmatpush.msra.mxu0 0.0
    %276 = vmatpush.msra.mxu0 0.0
    %277 = vmatpush.msra.mxu0 0.0
    %278 = vmatpush.msra.mxu0 0.0
    %279 = vmatpush.msra.mxu0 0.0
    %280 = vmatpush.msra.mxu0 0.0
    %281 = vmatpush.msra.mxu0 0.0
    %282 = vmatpush.msra.mxu0 0.0
    %283 = vmatpush.msra.mxu0 0.0
    %284 = vmatpush.msra.mxu0 %v238
    %285 = vmatmul.f32.gmra.mxu0 %v247
    %v286 = vpop.f32.mrf.mxu0
    %v287 = vadd.f32 %v242, %v286
    %288 = vdwg.mxu0
    %v289 = vmax.f32 %v267, 0.0
    %v290 = vmax.f32 %v287, 0.0
    %vm291 = vcmask 517120
    %292 = vst.msk [vmem:[#allocation2] sm:$0x3] %vm291, %v289
    %294 = vrot.lane.b32.xlu0 %v289, 64
    %v295 = vpop.permute.xlu0 %294
    %297 = vst.msk [vmem:[#allocation2 + $0x2] sm:$0x3] %vm291, %v295
    %298 = vst.msk [vmem:[#allocation2 + $0x4] sm:$0x3] %vm291, %v290
    %300 = vrot.lane.b32.xlu0 %v290, 64
    %v301 = vpop.permute.xlu0 %300
    %303 = vst.msk [vmem:[#allocation2 + $0x6] sm:$0x3] %vm291, %v301
    %v304 = vld [vmem:[#allocation2] sm:$0xff]
    %v305 = vld [vmem:[%s5] sm:$0x3]
    %v306 = vld [vmem:[#allocation7] sm:$0xff]
    %v307 = vld [vmem:[#allocation7 + $0x8] sm:$0xff]
    %v308 = vld [vmem:[#allocation7 + $0x10] sm:$0xff]
    %v309 = vld [vmem:[#allocation7 + $0x18] sm:$0xff]
    %v310 = vld [vmem:[#allocation7 + $0x20] sm:$0xff]
    %v311 = vld [vmem:[#allocation7 + $0x28] sm:$0xff]
    %v312 = vld [vmem:[#allocation7 + $0x30] sm:$0xff]
    %v313 = vld [vmem:[#allocation7 + $0x38] sm:$0xff]
    %v314 = vld [vmem:[#allocation7 + $0x40] sm:$0xff]
    %v315 = vld [vmem:[#allocation7 + $0x48] sm:$0xff]
    %v316 = vld [vmem:[#allocation7 + $0x50] sm:$0xff]
    %v317 = vld [vmem:[#allocation7 + $0x58] sm:$0xff]
    %v318 = vld [vmem:[#allocation7 + $0x60] sm:$0xff]
    %v319 = vld [vmem:[#allocation7 + $0x68] sm:$0xff]
    %v320 = vld [vmem:[#allocation7 + $0x70] sm:$0xff]
    %v321 = vld [vmem:[#allocation7 + $0x78] sm:$0xff]
    %vm322 = vcmask 523264
    %v324 = vsel %vm322, %v304, 0
    %326 = vmatpush.msra.mxu0 0.0
    %327 = vmatpush.msra.mxu0 0.0
    %328 = vmatpush.msra.mxu0 0.0
    %329 = vmatpush.msra.mxu0 0.0
    %330 = vmatpush.msra.mxu0 0.0
    %331 = vmatpush.msra.mxu0 0.0
    %332 = vmatpush.msra.mxu0 0.0
    %333 = vmatpush.msra.mxu0 0.0
    %334 = vmatpush.msra.mxu0 %v320
    %335 = vmatpush.msra.mxu0 %v318
    %336 = vmatpush.msra.mxu0 %v316
    %337 = vmatpush.msra.mxu0 %v314
    %338 = vmatpush.msra.mxu0 %v312
    %339 = vmatpush.msra.mxu0 %v310
    %340 = vmatpush.msra.mxu0 %v308
    %341 = vmatpush.msra.mxu0 %v306
    %342 = vmatmul.f32.gmra.mxu0 %v324
    %v343 = vpop.f32.mrf.mxu0
    %v344 = vadd.f32 0.0, %v343
    %345 = vdwg.mxu0
    %346 = vmatpush.msra.mxu0 0.0
    %347 = vmatpush.msra.mxu0 0.0
    %348 = vmatpush.msra.mxu0 0.0
    %349 = vmatpush.msra.mxu0 0.0
    %350 = vmatpush.msra.mxu0 0.0
    %351 = vmatpush.msra.mxu0 0.0
    %352 = vmatpush.msra.mxu0 0.0
    %353 = vmatpush.msra.mxu0 0.0
    %354 = vmatpush.msra.mxu0 %v321
    %355 = vmatpush.msra.mxu0 %v319
    %356 = vmatpush.msra.mxu0 %v317
    %357 = vmatpush.msra.mxu0 %v315
    %358 = vmatpush.msra.mxu0 %v313
    %359 = vmatpush.msra.mxu0 %v311
    %360 = vmatpush.msra.mxu0 %v309
    %361 = vmatpush.msra.mxu0 %v307
    %362 = vmatmul.f32.gmra.mxu0 %v324
    %v363 = vpop.f32.mrf.mxu0
    %v364 = vadd.f32 0.0, %v363
    %365 = vdwg.mxu0
    %v366 = vld [vmem:[#allocation9] sm:$0xff]
    %v367 = vld [vmem:[#allocation9 + $0x8] sm:$0xff]
    %v368 = vld [vmem:[#allocation9 + $0x10] sm:$0x3f]
    %v370 = vsel %vm245, %v366, 0
    %v373 = vsel %vm245, %v367, 0
    %v376 = vsel %vm245, %v368, 0
    %378 = vmatpush.msra.mxu0 0.0
    %379 = vmatpush.msra.mxu0 0.0
    %380 = vmatpush.msra.mxu0 0.0
    %381 = vmatpush.msra.mxu0 0.0
    %382 = vmatpush.msra.mxu0 0.0
    %383 = vmatpush.msra.mxu0 0.0
    %384 = vmatpush.msra.mxu0 0.0
    %385 = vmatpush.msra.mxu0 0.0
    %386 = vmatpush.msra.mxu0 0.0
    %387 = vmatpush.msra.mxu0 0.0
    %388 = vmatpush.msra.mxu0 0.0
    %389 = vmatpush.msra.mxu0 0.0
    %390 = vmatpush.msra.mxu0 0.0
    %391 = vmatpush.msra.mxu0 0.0
    %392 = vmatpush.msra.mxu0 0.0
    %393 = vmatpush.msra.mxu0 %v344
    %394 = vmatmul.f32.gmra.mxu0 %v370
    %v395 = vpop.f32.mrf.mxu0
    %v396 = vadd.f32 0.0, %v395
    %397 = vmatmul.f32.gmra.mxu0 %v373
    %v398 = vpop.f32.mrf.mxu0
    %v399 = vadd.f32 0.0, %v398
    %400 = vmatmul.f32.gmra.mxu0 %v376
    %v401 = vpop.f32.mrf.mxu0
    %v402 = vadd.f32 0.0, %v401
    %403 = vdwg.mxu0
    %404 = vmatpush.msra.mxu0 0.0
    %405 = vmatpush.msra.mxu0 0.0
    %406 = vmatpush.msra.mxu0 0.0
    %407 = vmatpush.msra.mxu0 0.0
    %408 = vmatpush.msra.mxu0 0.0
    %409 = vmatpush.msra.mxu0 0.0
    %410 = vmatpush.msra.mxu0 0.0
    %411 = vmatpush.msra.mxu0 0.0
    %412 = vmatpush.msra.mxu0 0.0
    %413 = vmatpush.msra.mxu0 0.0
    %414 = vmatpush.msra.mxu0 0.0
    %415 = vmatpush.msra.mxu0 0.0
    %416 = vmatpush.msra.mxu0 0.0
    %417 = vmatpush.msra.mxu0 0.0
    %418 = vmatpush.msra.mxu0 0.0
    %419 = vmatpush.msra.mxu0 %v364
    %420 = vmatmul.f32.gmra.mxu0 %v370
    %v421 = vpop.f32.mrf.mxu0
    %v422 = vadd.f32 0.0, %v421
    %423 = vmatmul.f32.gmra.mxu0 %v373
    %v424 = vpop.f32.mrf.mxu0
    %v425 = vadd.f32 0.0, %v424
    %426 = vmatmul.f32.gmra.mxu0 %v376
    %v427 = vpop.f32.mrf.mxu0
    %v428 = vadd.f32 0.0, %v427
    %429 = vdwg.mxu0
    %v431 = vperm.slane %v305, 0
    %v432 = vperm.slane %v305, 1
    %v435 = vadd.f32 %v431, %v396
    %v436 = vadd.f32 %v432, %v422
    %v437 = vadd.f32 %v431, %v399
    %v438 = vadd.f32 %v432, %v425
    %v439 = vadd.f32 %v431, %v402
    %v440 = vadd.f32 %v432, %v428
    %s441 = scalar_lea.vmem [#allocation7], 128
    %v442 = vld [vmem:[%s441] sm:$0xff]
    %v443 = vld [vmem:[%s441 + $0x8] sm:$0xff]
    %v444 = vld [vmem:[%s441 + $0x10] sm:$0xff]
    %v445 = vld [vmem:[%s441 + $0x18] sm:$0xff]
    %v446 = vld [vmem:[%s441 + $0x20] sm:$0xff]
    %v447 = vld [vmem:[%s441 + $0x28] sm:$0xff]
    %v448 = vld [vmem:[%s441 + $0x30] sm:$0xff]
    %v449 = vld [vmem:[%s441 + $0x38] sm:$0xff]
    %v450 = vld [vmem:[%s441 + $0x40] sm:$0xff]
    %v451 = vld [vmem:[%s441 + $0x48] sm:$0xff]
    %v452 = vld [vmem:[%s441 + $0x50] sm:$0xff]
    %v453 = vld [vmem:[%s441 + $0x58] sm:$0xff]
    %v454 = vld [vmem:[%s441 + $0x60] sm:$0xff]
    %v455 = vld [vmem:[%s441 + $0x68] sm:$0xff]
    %v456 = vld [vmem:[%s441 + $0x70] sm:$0xff]
    %v457 = vld [vmem:[%s441 + $0x78] sm:$0xff]
    %458 = vmatpush.msra.mxu0 0.0
    %459 = vmatpush.msra.mxu0 0.0
    %460 = vmatpush.msra.mxu0 0.0
    %461 = vmatpush.msra.mxu0 0.0
    %462 = vmatpush.msra.mxu0 0.0
    %463 = vmatpush.msra.mxu0 0.0
    %464 = vmatpush.msra.mxu0 0.0
    %465 = vmatpush.msra.mxu0 0.0
    %466 = vmatpush.msra.mxu0 %v456
    %467 = vmatpush.msra.mxu0 %v454
    %468 = vmatpush.msra.mxu0 %v452
    %469 = vmatpush.msra.mxu0 %v450
    %470 = vmatpush.msra.mxu0 %v448
    %471 = vmatpush.msra.mxu0 %v446
    %472 = vmatpush.msra.mxu0 %v444
    %473 = vmatpush.msra.mxu0 %v442
    %474 = vmatmul.f32.gmra.mxu0 %v324
    %v475 = vpop.f32.mrf.mxu0
    %v476 = vadd.f32 0.0, %v475
    %477 = vdwg.mxu0
    %478 = vmatpush.msra.mxu0 0.0
    %479 = vmatpush.msra.mxu0 0.0
    %480 = vmatpush.msra.mxu0 0.0
    %481 = vmatpush.msra.mxu0 0.0
    %482 = vmatpush.msra.mxu0 0.0
    %483 = vmatpush.msra.mxu0 0.0
    %484 = vmatpush.msra.mxu0 0.0
    %485 = vmatpush.msra.mxu0 0.0
    %486 = vmatpush.msra.mxu0 %v457
    %487 = vmatpush.msra.mxu0 %v455
    %488 = vmatpush.msra.mxu0 %v453
    %489 = vmatpush.msra.mxu0 %v451
    %490 = vmatpush.msra.mxu0 %v449
    %491 = vmatpush.msra.mxu0 %v447
    %492 = vmatpush.msra.mxu0 %v445
    %493 = vmatpush.msra.mxu0 %v443
    %494 = vmatmul.f32.gmra.mxu0 %v324
    %v495 = vpop.f32.mrf.mxu0
    %v496 = vadd.f32 0.0, %v495
    %497 = vdwg.mxu0
    %s498 = scalar_lea.vmem [#allocation9], 24
    %v499 = vld [vmem:[%s498] sm:$0xff]
    %v500 = vld [vmem:[%s498 + $0x8] sm:$0xff]
    %v501 = vld [vmem:[%s498 + $0x10] sm:$0x3f]
    %v503 = vsel %vm245, %v499, 0
    %v506 = vsel %vm245, %v500, 0
    %v509 = vsel %vm245, %v501, 0
    %511 = vmatpush.msra.mxu0 0.0
    %512 = vmatpush.msra.mxu0 0.0
    %513 = vmatpush.msra.mxu0 0.0
    %514 = vmatpush.msra.mxu0 0.0
    %515 = vmatpush.msra.mxu0 0.0
    %516 = vmatpush.msra.mxu0 0.0
    %517 = vmatpush.msra.mxu0 0.0
    %518 = vmatpush.msra.mxu0 0.0
    %519 = vmatpush.msra.mxu0 0.0
    %520 = vmatpush.msra.mxu0 0.0
    %521 = vmatpush.msra.mxu0 0.0
    %522 = vmatpush.msra.mxu0 0.0
    %523 = vmatpush.msra.mxu0 0.0
    %524 = vmatpush.msra.mxu0 0.0
    %525 = vmatpush.msra.mxu0 0.0
    %526 = vmatpush.msra.mxu0 %v476
    %527 = vmatmul.f32.gmra.mxu0 %v503
    %v528 = vpop.f32.mrf.mxu0
    %v529 = vadd.f32 0.0, %v528
    %530 = vmatmul.f32.gmra.mxu0 %v506
    %v531 = vpop.f32.mrf.mxu0
    %v532 = vadd.f32 0.0, %v531
    %533 = vmatmul.f32.gmra.mxu0 %v509
    %v534 = vpop.f32.mrf.mxu0
    %v535 = vadd.f32 0.0, %v534
    %536 = vdwg.mxu0
    %537 = vmatpush.msra.mxu0 0.0
    %538 = vmatpush.msra.mxu0 0.0
    %539 = vmatpush.msra.mxu0 0.0
    %540 = vmatpush.msra.mxu0 0.0
    %541 = vmatpush.msra.mxu0 0.0
    %542 = vmatpush.msra.mxu0 0.0
    %543 = vmatpush.msra.mxu0 0.0
    %544 = vmatpush.msra.mxu0 0.0
    %545 = vmatpush.msra.mxu0 0.0
    %546 = vmatpush.msra.mxu0 0.0
    %547 = vmatpush.msra.mxu0 0.0
    %548 = vmatpush.msra.mxu0 0.0
    %549 = vmatpush.msra.mxu0 0.0
    %550 = vmatpush.msra.mxu0 0.0
    %551 = vmatpush.msra.mxu0 0.0
    %552 = vmatpush.msra.mxu0 %v496
    %553 = vmatmul.f32.gmra.mxu0 %v503
    %v554 = vpop.f32.mrf.mxu0
    %v555 = vadd.f32 0.0, %v554
    %556 = vmatmul.f32.gmra.mxu0 %v506
    %v557 = vpop.f32.mrf.mxu0
    %v558 = vadd.f32 0.0, %v557
    %559 = vmatmul.f32.gmra.mxu0 %v509
    %v560 = vpop.f32.mrf.mxu0
    %v561 = vadd.f32 0.0, %v560
    %562 = vdwg.mxu0
    %v563 = vadd.f32 %v435, %v529
    %v564 = vadd.f32 %v436, %v555
    %v565 = vadd.f32 %v437, %v532
    %v566 = vadd.f32 %v438, %v558
    %v567 = vadd.f32 %v439, %v535
    %v568 = vadd.f32 %v440, %v561
    %s569 = scalar_lea.vmem [#allocation7], 256
    %v570 = vld [vmem:[%s569] sm:$0xff]
    %v571 = vld [vmem:[%s569 + $0x8] sm:$0xff]
    %v572 = vld [vmem:[%s569 + $0x10] sm:$0xff]
    %v573 = vld [vmem:[%s569 + $0x18] sm:$0xff]
    %v574 = vld [vmem:[%s569 + $0x20] sm:$0xff]
    %v575 = vld [vmem:[%s569 + $0x28] sm:$0xff]
    %v576 = vld [vmem:[%s569 + $0x30] sm:$0xff]
    %v577 = vld [vmem:[%s569 + $0x38] sm:$0xff]
    %v578 = vld [vmem:[%s569 + $0x40] sm:$0xff]
    %v579 = vld [vmem:[%s569 + $0x48] sm:$0xff]
    %v580 = vld [vmem:[%s569 + $0x50] sm:$0xff]
    %v581 = vld [vmem:[%s569 + $0x58] sm:$0xff]
    %v582 = vld [vmem:[%s569 + $0x60] sm:$0xff]
    %v583 = vld [vmem:[%s569 + $0x68] sm:$0xff]
    %v584 = vld [vmem:[%s569 + $0x70] sm:$0xff]
    %v585 = vld [vmem:[%s569 + $0x78] sm:$0xff]
    %586 = vmatpush.msra.mxu0 0.0
    %587 = vmatpush.msra.mxu0 0.0
    %588 = vmatpush.msra.mxu0 0.0
    %589 = vmatpush.msra.mxu0 0.0
    %590 = vmatpush.msra.mxu0 0.0
    %591 = vmatpush.msra.mxu0 0.0
    %592 = vmatpush.msra.mxu0 0.0
    %593 = vmatpush.msra.mxu0 0.0
    %594 = vmatpush.msra.mxu0 %v584
    %595 = vmatpush.msra.mxu0 %v582
    %596 = vmatpush.msra.mxu0 %v580
    %597 = vmatpush.msra.mxu0 %v578
    %598 = vmatpush.msra.mxu0 %v576
    %599 = vmatpush.msra.mxu0 %v574
    %600 = vmatpush.msra.mxu0 %v572
    %601 = vmatpush.msra.mxu0 %v570
    %602 = vmatmul.f32.gmra.mxu0 %v324
    %v603 = vpop.f32.mrf.mxu0
    %v604 = vadd.f32 0.0, %v603
    %605 = vdwg.mxu0
    %606 = vmatpush.msra.mxu0 0.0
    %607 = vmatpush.msra.mxu0 0.0
    %608 = vmatpush.msra.mxu0 0.0
    %609 = vmatpush.msra.mxu0 0.0
    %610 = vmatpush.msra.mxu0 0.0
    %611 = vmatpush.msra.mxu0 0.0
    %612 = vmatpush.msra.mxu0 0.0
    %613 = vmatpush.msra.mxu0 0.0
    %614 = vmatpush.msra.mxu0 %v585
    %615 = vmatpush.msra.mxu0 %v583
    %616 = vmatpush.msra.mxu0 %v581
    %617 = vmatpush.msra.mxu0 %v579
    %618 = vmatpush.msra.mxu0 %v577
    %619 = vmatpush.msra.mxu0 %v575
    %620 = vmatpush.msra.mxu0 %v573
    %621 = vmatpush.msra.mxu0 %v571
    %622 = vmatmul.f32.gmra.mxu0 %v324
    %v623 = vpop.f32.mrf.mxu0
    %v624 = vadd.f32 0.0, %v623
    %625 = vdwg.mxu0
    %s626 = scalar_lea.vmem [#allocation9], 48
    %v627 = vld [vmem:[%s626] sm:$0xff]
    %v628 = vld [vmem:[%s626 + $0x8] sm:$0xff]
    %v629 = vld [vmem:[%s626 + $0x10] sm:$0x3f]
    %v631 = vsel %vm245, %v627, 0
    %v634 = vsel %vm245, %v628, 0
    %v637 = vsel %vm245, %v629, 0
    %639 = vmatpush.msra.mxu0 0.0
    %640 = vmatpush.msra.mxu0 0.0
    %641 = vmatpush.msra.mxu0 0.0
    %642 = vmatpush.msra.mxu0 0.0
    %643 = vmatpush.msra.mxu0 0.0
    %644 = vmatpush.msra.mxu0 0.0
    %645 = vmatpush.msra.mxu0 0.0
    %646 = vmatpush.msra.mxu0 0.0
    %647 = vmatpush.msra.mxu0 0.0
    %648 = vmatpush.msra.mxu0 0.0
    %649 = vmatpush.msra.mxu0 0.0
    %650 = vmatpush.msra.mxu0 0.0
    %651 = vmatpush.msra.mxu0 0.0
    %652 = vmatpush.msra.mxu0 0.0
    %653 = vmatpush.msra.mxu0 0.0
    %654 = vmatpush.msra.mxu0 %v604
    %655 = vmatmul.f32.gmra.mxu0 %v631
    %v656 = vpop.f32.mrf.mxu0
    %v657 = vadd.f32 0.0, %v656
    %658 = vmatmul.f32.gmra.mxu0 %v634
    %v659 = vpop.f32.mrf.mxu0
    %v660 = vadd.f32 0.0, %v659
    %661 = vmatmul.f32.gmra.mxu0 %v637
    %v662 = vpop.f32.mrf.mxu0
    %v663 = vadd.f32 0.0, %v662
    %664 = vdwg.mxu0
    %665 = vmatpush.msra.mxu0 0.0
    %666 = vmatpush.msra.mxu0 0.0
    %667 = vmatpush.msra.mxu0 0.0
    %668 = vmatpush.msra.mxu0 0.0
    %669 = vmatpush.msra.mxu0 0.0
    %670 = vmatpush.msra.mxu0 0.0
    %671 = vmatpush.msra.mxu0 0.0
    %672 = vmatpush.msra.mxu0 0.0
    %673 = vmatpush.msra.mxu0 0.0
    %674 = vmatpush.msra.mxu0 0.0
    %675 = vmatpush.msra.mxu0 0.0
    %676 = vmatpush.msra.mxu0 0.0
    %677 = vmatpush.msra.mxu0 0.0
    %678 = vmatpush.msra.mxu0 0.0
    %679 = vmatpush.msra.mxu0 0.0
    %680 = vmatpush.msra.mxu0 %v624
    %681 = vmatmul.f32.gmra.mxu0 %v631
    %v682 = vpop.f32.mrf.mxu0
    %v683 = vadd.f32 0.0, %v682
    %684 = vmatmul.f32.gmra.mxu0 %v634
    %v685 = vpop.f32.mrf.mxu0
    %v686 = vadd.f32 0.0, %v685
    %687 = vmatmul.f32.gmra.mxu0 %v637
    %v688 = vpop.f32.mrf.mxu0
    %v689 = vadd.f32 0.0, %v688
    %690 = vdwg.mxu0
    %v691 = vadd.f32 %v563, %v657
    %v692 = vadd.f32 %v564, %v683
    %v693 = vadd.f32 %v565, %v660
    %v694 = vadd.f32 %v566, %v686
    %v695 = vadd.f32 %v567, %v663
    %v696 = vadd.f32 %v568, %v689
    %s697 = scalar_lea.vmem [#allocation7], 384
    %v698 = vld [vmem:[%s697] sm:$0xff]
    %v699 = vld [vmem:[%s697 + $0x8] sm:$0xff]
    %v700 = vld [vmem:[%s697 + $0x10] sm:$0xff]
    %v701 = vld [vmem:[%s697 + $0x18] sm:$0xff]
    %v702 = vld [vmem:[%s697 + $0x20] sm:$0xff]
    %v703 = vld [vmem:[%s697 + $0x28] sm:$0xff]
    %v704 = vld [vmem:[%s697 + $0x30] sm:$0xff]
    %v705 = vld [vmem:[%s697 + $0x38] sm:$0xff]
    %v706 = vld [vmem:[%s697 + $0x40] sm:$0xff]
    %v707 = vld [vmem:[%s697 + $0x48] sm:$0xff]
    %v708 = vld [vmem:[%s697 + $0x50] sm:$0xff]
    %v709 = vld [vmem:[%s697 + $0x58] sm:$0xff]
    %v710 = vld [vmem:[%s697 + $0x60] sm:$0xff]
    %v711 = vld [vmem:[%s697 + $0x68] sm:$0xff]
    %v712 = vld [vmem:[%s697 + $0x70] sm:$0xff]
    %v713 = vld [vmem:[%s697 + $0x78] sm:$0xff]
    %714 = vmatpush.msra.mxu0 0.0
    %715 = vmatpush.msra.mxu0 0.0
    %716 = vmatpush.msra.mxu0 0.0
    %717 = vmatpush.msra.mxu0 0.0
    %718 = vmatpush.msra.mxu0 0.0
    %719 = vmatpush.msra.mxu0 0.0
    %720 = vmatpush.msra.mxu0 0.0
    %721 = vmatpush.msra.mxu0 0.0
    %722 = vmatpush.msra.mxu0 %v712
    %723 = vmatpush.msra.mxu0 %v710
    %724 = vmatpush.msra.mxu0 %v708
    %725 = vmatpush.msra.mxu0 %v706
    %726 = vmatpush.msra.mxu0 %v704
    %727 = vmatpush.msra.mxu0 %v702
    %728 = vmatpush.msra.mxu0 %v700
    %729 = vmatpush.msra.mxu0 %v698
    %730 = vmatmul.f32.gmra.mxu0 %v324
    %v731 = vpop.f32.mrf.mxu0
    %v732 = vadd.f32 0.0, %v731
    %733 = vdwg.mxu0
    %734 = vmatpush.msra.mxu0 0.0
    %735 = vmatpush.msra.mxu0 0.0
    %736 = vmatpush.msra.mxu0 0.0
    %737 = vmatpush.msra.mxu0 0.0
    %738 = vmatpush.msra.mxu0 0.0
    %739 = vmatpush.msra.mxu0 0.0
    %740 = vmatpush.msra.mxu0 0.0
    %741 = vmatpush.msra.mxu0 0.0
    %742 = vmatpush.msra.mxu0 %v713
    %743 = vmatpush.msra.mxu0 %v711
    %744 = vmatpush.msra.mxu0 %v709
    %745 = vmatpush.msra.mxu0 %v707
    %746 = vmatpush.msra.mxu0 %v705
    %747 = vmatpush.msra.mxu0 %v703
    %748 = vmatpush.msra.mxu0 %v701
    %749 = vmatpush.msra.mxu0 %v699
    %750 = vmatmul.f32.gmra.mxu0 %v324
    %v751 = vpop.f32.mrf.mxu0
    %v752 = vadd.f32 0.0, %v751
    %753 = vdwg.mxu0
    %s754 = scalar_lea.vmem [#allocation9], 72
    %v755 = vld [vmem:[%s754] sm:$0xff]
    %v756 = vld [vmem:[%s754 + $0x8] sm:$0xff]
    %v757 = vld [vmem:[%s754 + $0x10] sm:$0x3f]
    %v759 = vsel %vm245, %v755, 0
    %v762 = vsel %vm245, %v756, 0
    %v765 = vsel %vm245, %v757, 0
    %767 = vmatpush.msra.mxu0 0.0
    %768 = vmatpush.msra.mxu0 0.0
    %769 = vmatpush.msra.mxu0 0.0
    %770 = vmatpush.msra.mxu0 0.0
    %771 = vmatpush.msra.mxu0 0.0
    %772 = vmatpush.msra.mxu0 0.0
    %773 = vmatpush.msra.mxu0 0.0
    %774 = vmatpush.msra.mxu0 0.0
    %775 = vmatpush.msra.mxu0 0.0
    %776 = vmatpush.msra.mxu0 0.0
    %777 = vmatpush.msra.mxu0 0.0
    %778 = vmatpush.msra.mxu0 0.0
    %779 = vmatpush.msra.mxu0 0.0
    %780 = vmatpush.msra.mxu0 0.0
    %781 = vmatpush.msra.mxu0 0.0
    %782 = vmatpush.msra.mxu0 %v732
    %783 = vmatmul.f32.gmra.mxu0 %v759
    %v784 = vpop.f32.mrf.mxu0
    %v785 = vadd.f32 0.0, %v784
    %786 = vmatmul.f32.gmra.mxu0 %v762
    %v787 = vpop.f32.mrf.mxu0
    %v788 = vadd.f32 0.0, %v787
    %789 = vmatmul.f32.gmra.mxu0 %v765
    %v790 = vpop.f32.mrf.mxu0
    %v791 = vadd.f32 0.0, %v790
    %792 = vdwg.mxu0
    %793 = vmatpush.msra.mxu0 0.0
    %794 = vmatpush.msra.mxu0 0.0
    %795 = vmatpush.msra.mxu0 0.0
    %796 = vmatpush.msra.mxu0 0.0
    %797 = vmatpush.msra.mxu0 0.0
    %798 = vmatpush.msra.mxu0 0.0
    %799 = vmatpush.msra.mxu0 0.0
    %800 = vmatpush.msra.mxu0 0.0
    %801 = vmatpush.msra.mxu0 0.0
    %802 = vmatpush.msra.mxu0 0.0
    %803 = vmatpush.msra.mxu0 0.0
    %804 = vmatpush.msra.mxu0 0.0
    %805 = vmatpush.msra.mxu0 0.0
    %806 = vmatpush.msra.mxu0 0.0
    %807 = vmatpush.msra.mxu0 0.0
    %808 = vmatpush.msra.mxu0 %v752
    %809 = vmatmul.f32.gmra.mxu0 %v759
    %v810 = vpop.f32.mrf.mxu0
    %v811 = vadd.f32 0.0, %v810
    %812 = vmatmul.f32.gmra.mxu0 %v762
    %v813 = vpop.f32.mrf.mxu0
    %v814 = vadd.f32 0.0, %v813
    %815 = vmatmul.f32.gmra.mxu0 %v765
    %v816 = vpop.f32.mrf.mxu0
    %v817 = vadd.f32 0.0, %v816
    %818 = vdwg.mxu0
    %v819 = vadd.f32 %v691, %v785
    %v820 = vadd.f32 %v692, %v811
    %v821 = vadd.f32 %v693, %v788
    %v822 = vadd.f32 %v694, %v814
    %v823 = vadd.f32 %v695, %v791
    %v824 = vadd.f32 %v696, %v817
    %s825 = scalar_lea.vmem [#allocation7], 512
    %v826 = vld [vmem:[%s825] sm:$0xff]
    %v827 = vld [vmem:[%s825 + $0x8] sm:$0xff]
    %v828 = vld [vmem:[%s825 + $0x10] sm:$0xff]
    %v829 = vld [vmem:[%s825 + $0x18] sm:$0xff]
    %v830 = vld [vmem:[%s825 + $0x20] sm:$0xff]
    %v831 = vld [vmem:[%s825 + $0x28] sm:$0xff]
    %v832 = vld [vmem:[%s825 + $0x30] sm:$0xff]
    %v833 = vld [vmem:[%s825 + $0x38] sm:$0xff]
    %v834 = vld [vmem:[%s825 + $0x40] sm:$0xff]
    %v835 = vld [vmem:[%s825 + $0x48] sm:$0xff]
    %v836 = vld [vmem:[%s825 + $0x50] sm:$0xff]
    %v837 = vld [vmem:[%s825 + $0x58] sm:$0xff]
    %v838 = vld [vmem:[%s825 + $0x60] sm:$0xff]
    %v839 = vld [vmem:[%s825 + $0x68] sm:$0xff]
    %v840 = vld [vmem:[%s825 + $0x70] sm:$0xff]
    %v841 = vld [vmem:[%s825 + $0x78] sm:$0xff]
    %842 = vmatpush.msra.mxu0 0.0
    %843 = vmatpush.msra.mxu0 0.0
    %844 = vmatpush.msra.mxu0 0.0
    %845 = vmatpush.msra.mxu0 0.0
    %846 = vmatpush.msra.mxu0 0.0
    %847 = vmatpush.msra.mxu0 0.0
    %848 = vmatpush.msra.mxu0 0.0
    %849 = vmatpush.msra.mxu0 0.0
    %850 = vmatpush.msra.mxu0 %v840
    %851 = vmatpush.msra.mxu0 %v838
    %852 = vmatpush.msra.mxu0 %v836
    %853 = vmatpush.msra.mxu0 %v834
    %854 = vmatpush.msra.mxu0 %v832
    %855 = vmatpush.msra.mxu0 %v830
    %856 = vmatpush.msra.mxu0 %v828
    %857 = vmatpush.msra.mxu0 %v826
    %858 = vmatmul.f32.gmra.mxu0 %v324
    %v859 = vpop.f32.mrf.mxu0
    %v860 = vadd.f32 0.0, %v859
    %861 = vdwg.mxu0
    %862 = vmatpush.msra.mxu0 0.0
    %863 = vmatpush.msra.mxu0 0.0
    %864 = vmatpush.msra.mxu0 0.0
    %865 = vmatpush.msra.mxu0 0.0
    %866 = vmatpush.msra.mxu0 0.0
    %867 = vmatpush.msra.mxu0 0.0
    %868 = vmatpush.msra.mxu0 0.0
    %869 = vmatpush.msra.mxu0 0.0
    %870 = vmatpush.msra.mxu0 %v841
    %871 = vmatpush.msra.mxu0 %v839
    %872 = vmatpush.msra.mxu0 %v837
    %873 = vmatpush.msra.mxu0 %v835
    %874 = vmatpush.msra.mxu0 %v833
    %875 = vmatpush.msra.mxu0 %v831
    %876 = vmatpush.msra.mxu0 %v829
    %877 = vmatpush.msra.mxu0 %v827
    %878 = vmatmul.f32.gmra.mxu0 %v324
    %v879 = vpop.f32.mrf.mxu0
    %v880 = vadd.f32 0.0, %v879
    %881 = vdwg.mxu0
    %s882 = scalar_lea.vmem [#allocation9], 96
    %v883 = vld [vmem:[%s882] sm:$0xff]
    %v884 = vld [vmem:[%s882 + $0x8] sm:$0xff]
    %v885 = vld [vmem:[%s882 + $0x10] sm:$0x3f]
    %v887 = vsel %vm245, %v883, 0
    %v890 = vsel %vm245, %v884, 0
    %v893 = vsel %vm245, %v885, 0
    %895 = vmatpush.msra.mxu0 0.0
    %896 = vmatpush.msra.mxu0 0.0
    %897 = vmatpush.msra.mxu0 0.0
    %898 = vmatpush.msra.mxu0 0.0
    %899 = vmatpush.msra.mxu0 0.0
    %900 = vmatpush.msra.mxu0 0.0
    %901 = vmatpush.msra.mxu0 0.0
    %902 = vmatpush.msra.mxu0 0.0
    %903 = vmatpush.msra.mxu0 0.0
    %904 = vmatpush.msra.mxu0 0.0
    %905 = vmatpush.msra.mxu0 0.0
    %906 = vmatpush.msra.mxu0 0.0
    %907 = vmatpush.msra.mxu0 0.0
    %908 = vmatpush.msra.mxu0 0.0
    %909 = vmatpush.msra.mxu0 0.0
    %910 = vmatpush.msra.mxu0 %v860
    %911 = vmatmul.f32.gmra.mxu0 %v887
    %v912 = vpop.f32.mrf.mxu0
    %v913 = vadd.f32 0.0, %v912
    %914 = vmatmul.f32.gmra.mxu0 %v890
    %v915 = vpop.f32.mrf.mxu0
    %v916 = vadd.f32 0.0, %v915
    %917 = vmatmul.f32.gmra.mxu0 %v893
    %v918 = vpop.f32.mrf.mxu0
    %v919 = vadd.f32 0.0, %v918
    %920 = vdwg.mxu0
    %921 = vmatpush.msra.mxu0 0.0
    %922 = vmatpush.msra.mxu0 0.0
    %923 = vmatpush.msra.mxu0 0.0
    %924 = vmatpush.msra.mxu0 0.0
    %925 = vmatpush.msra.mxu0 0.0
    %926 = vmatpush.msra.mxu0 0.0
    %927 = vmatpush.msra.mxu0 0.0
    %928 = vmatpush.msra.mxu0 0.0
    %929 = vmatpush.msra.mxu0 0.0
    %930 = vmatpush.msra.mxu0 0.0
    %931 = vmatpush.msra.mxu0 0.0
    %932 = vmatpush.msra.mxu0 0.0
    %933 = vmatpush.msra.mxu0 0.0
    %934 = vmatpush.msra.mxu0 0.0
    %935 = vmatpush.msra.mxu0 0.0
    %936 = vmatpush.msra.mxu0 %v880
    %937 = vmatmul.f32.gmra.mxu0 %v887
    %v938 = vpop.f32.mrf.mxu0
    %v939 = vadd.f32 0.0, %v938
    %940 = vmatmul.f32.gmra.mxu0 %v890
    %v941 = vpop.f32.mrf.mxu0
    %v942 = vadd.f32 0.0, %v941
    %943 = vmatmul.f32.gmra.mxu0 %v893
    %v944 = vpop.f32.mrf.mxu0
    %v945 = vadd.f32 0.0, %v944
    %946 = vdwg.mxu0
    %v947 = vadd.f32 %v819, %v913
    %v948 = vadd.f32 %v820, %v939
    %v949 = vadd.f32 %v821, %v916
    %v950 = vadd.f32 %v822, %v942
    %v951 = vadd.f32 %v823, %v919
    %v952 = vadd.f32 %v824, %v945
    %s953 = sld [smem:[#allocation21]]
    %v954 = vadd.f32 %v947, %v949
    %vm955 = vcmask 1045504
    %v956 = vsel %vm955, %v951, 0.0
    %v957 = vadd.f32 %v954, %v956
    %v958 = vrot.slane %v957, 4
    %v959 = vadd.f32 %v957, %v958
    %v960 = vrot.slane %v959, 2
    %v961 = vadd.f32 %v959, %v960
    %v962 = vrot.slane %v961, 1
    %v963 = vadd.f32 %v961, %v962
    %vm964 = vcmask 392192
    %v965 = vsel %vm964, %v948, 0.0
    %v966 = vsel %vm964, %v950, 0.0
    %v967 = vadd.f32 %v965, %v966
    %vm968 = vcmask 390144
    %v969 = vsel %vm968, %v952, 0.0
    %v970 = vadd.f32 %v967, %v969
    %v971 = vrot.slane %v970, 4
    %v972 = vadd.f32 %v970, %v971
    %v973 = vrot.slane %v972, 2
    %v974 = vadd.f32 %v972, %v973
    %v975 = vrot.slane %v974, 1
    %v976 = vadd.f32 %v974, %v975
    %v977 = vmul.f32 %v947, %v947
    %v978 = vmul.f32 %v948, %v948
    %v979 = vmul.f32 %v949, %v949
    %v980 = vmul.f32 %v950, %v950
    %v981 = vmul.f32 %v951, %v951
    %v982 = vmul.f32 %v952, %v952
    %v983 = vadd.f32 %v977, %v979
    %v984 = vsel %vm955, %v981, 0.0
    %v985 = vadd.f32 %v983, %v984
    %v986 = vrot.slane %v985, 4
    %v987 = vadd.f32 %v985, %v986
    %v988 = vrot.slane %v987, 2
    %v989 = vadd.f32 %v987, %v988
    %v990 = vrot.slane %v989, 1
    %v991 = vadd.f32 %v989, %v990
    %v992 = vsel %vm964, %v978, 0.0
    %v993 = vsel %vm964, %v980, 0.0
    %v994 = vadd.f32 %v992, %v993
    %v995 = vsel %vm968, %v982, 0.0
    %v996 = vadd.f32 %v994, %v995
    %v997 = vrot.slane %v996, 4
    %v998 = vadd.f32 %v996, %v997
    %v999 = vrot.slane %v998, 2
    %v1000 = vadd.f32 %v998, %v999
    %v1001 = vrot.slane %v1000, 1
    %v1002 = vadd.f32 %v1000, %v1001
    %v1003 = vld [vmem:[#allocation10] sm:$0xff]
    %v1004 = vld [vmem:[#allocation10 + $0x8] sm:$0xff]
    %v1005 = vld [vmem:[#allocation10 + $0x10] sm:$0xff]
    %v1006 = vld [vmem:[#allocation10 + $0x18] sm:$0xff]
    %v1007 = vld [vmem:[#allocation10 + $0x20] sm:$0xff]
    %v1008 = vld [vmem:[#allocation10 + $0x28] sm:$0xff]
    %v1009 = vld [vmem:[#allocation10 + $0x30] sm:$0xff]
    %v1010 = vld [vmem:[#allocation10 + $0x38] sm:$0xff]
    %v1011 = vld [vmem:[#allocation10 + $0x40] sm:$0xff]
    %v1012 = vld [vmem:[#allocation10 + $0x48] sm:$0xff]
    %v1013 = vld [vmem:[#allocation10 + $0x50] sm:$0xff]
    %v1014 = vld [vmem:[#allocation10 + $0x58] sm:$0xff]
    %v1015 = vld [vmem:[#allocation10 + $0x60] sm:$0xff]
    %v1016 = vld [vmem:[#allocation10 + $0x68] sm:$0xff]
    %v1017 = vld [vmem:[#allocation10 + $0x70] sm:$0xff]
    %v1018 = vld [vmem:[#allocation10 + $0x78] sm:$0xff]
    %v1019 = vld [vmem:[#allocation10 + $0x80] sm:$0xff]
    %v1020 = vld [vmem:[#allocation10 + $0x88] sm:$0xff]
    %v1021 = vld [vmem:[#allocation10 + $0x90] sm:$0xff]
    %v1022 = vld [vmem:[#allocation10 + $0x98] sm:$0xff]
    %v1023 = vld [vmem:[#allocation10 + $0xa0] sm:$0xff]
    %v1024 = vld [vmem:[#allocation10 + $0xa8] sm:$0xff]
    %v1026 = vsel %vm964, %v976, 0
    %1028 = vmatpush.msra.mxu0 %v1018
    %1029 = vmatpush.msra.mxu0 %v1017
    %1030 = vmatpush.msra.mxu0 %v1016
    %1031 = vmatpush.msra.mxu0 %v1015
    %1032 = vmatpush.msra.mxu0 %v1014
    %1033 = vmatpush.msra.mxu0 %v1013
    %1034 = vmatpush.msra.mxu0 %v1012
    %1035 = vmatpush.msra.mxu0 %v1011
    %1036 = vmatpush.msra.mxu0 %v1010
    %1037 = vmatpush.msra.mxu0 %v1009
    %1038 = vmatpush.msra.mxu0 %v1008
    %1039 = vmatpush.msra.mxu0 %v1007
    %1040 = vmatpush.msra.mxu0 %v1006
    %1041 = vmatpush.msra.mxu0 %v1005
    %1042 = vmatpush.msra.mxu0 %v1004
    %1043 = vmatpush.msra.mxu0 %v1003
    %1044 = vmatmul.f32.gmra.mxu0 %v963
    %v1045 = vpop.f32.mrf.mxu0
    %v1046 = vadd.f32 0.0, %v1045
    %1047 = vdwg.mxu0
    %1048 = vmatpush.msra.mxu0 0.0
    %1049 = vmatpush.msra.mxu0 0.0
    %1050 = vmatpush.msra.mxu0 0.0
    %1051 = vmatpush.msra.mxu0 0.0
    %1052 = vmatpush.msra.mxu0 0.0
    %1053 = vmatpush.msra.mxu0 0.0
    %1054 = vmatpush.msra.mxu0 0.0
    %1055 = vmatpush.msra.mxu0 0.0
    %1056 = vmatpush.msra.mxu0 0.0
    %1057 = vmatpush.msra.mxu0 0.0
    %1058 = vmatpush.msra.mxu0 %v1024
    %1059 = vmatpush.msra.mxu0 %v1023
    %1060 = vmatpush.msra.mxu0 %v1022
    %1061 = vmatpush.msra.mxu0 %v1021
    %1062 = vmatpush.msra.mxu0 %v1020
    %1063 = vmatpush.msra.mxu0 %v1019
    %1064 = vmatmul.f32.gmra.mxu0 %v1026
    %v1065 = vpop.f32.mrf.mxu0
    %v1066 = vadd.f32 %v1046, %v1065
    %1067 = vdwg.mxu0
    %v1068 = vmul.f32 %v1066, 0.004132231
    %v1070 = vsel %vm964, %v1002, 0
    %1072 = vmatpush.msra.mxu0 %v1018
    %1073 = vmatpush.msra.mxu0 %v1017
    %1074 = vmatpush.msra.mxu0 %v1016
    %1075 = vmatpush.msra.mxu0 %v1015
    %1076 = vmatpush.msra.mxu0 %v1014
    %1077 = vmatpush.msra.mxu0 %v1013
    %1078 = vmatpush.msra.mxu0 %v1012
    %1079 = vmatpush.msra.mxu0 %v1011
    %1080 = vmatpush.msra.mxu0 %v1010
    %1081 = vmatpush.msra.mxu0 %v1009
    %1082 = vmatpush.msra.mxu0 %v1008
    %1083 = vmatpush.msra.mxu0 %v1007
    %1084 = vmatpush.msra.mxu0 %v1006
    %1085 = vmatpush.msra.mxu0 %v1005
    %1086 = vmatpush.msra.mxu0 %v1004
    %1087 = vmatpush.msra.mxu0 %v1003
    %1088 = vmatmul.f32.gmra.mxu0 %v991
    %v1089 = vpop.f32.mrf.mxu0
    %v1090 = vadd.f32 0.0, %v1089
    %1091 = vdwg.mxu0
    %1092 = vmatpush.msra.mxu0 0.0
    %1093 = vmatpush.msra.mxu0 0.0
    %1094 = vmatpush.msra.mxu0 0.0
    %1095 = vmatpush.msra.mxu0 0.0
    %1096 = vmatpush.msra.mxu0 0.0
    %1097 = vmatpush.msra.mxu0 0.0
    %1098 = vmatpush.msra.mxu0 0.0
    %1099 = vmatpush.msra.mxu0 0.0
    %1100 = vmatpush.msra.mxu0 0.0
    %1101 = vmatpush.msra.mxu0 0.0
    %1102 = vmatpush.msra.mxu0 %v1024
    %1103 = vmatpush.msra.mxu0 %v1023
    %1104 = vmatpush.msra.mxu0 %v1022
    %1105 = vmatpush.msra.mxu0 %v1021
    %1106 = vmatpush.msra.mxu0 %v1020
    %1107 = vmatpush.msra.mxu0 %v1019
    %1108 = vmatmul.f32.gmra.mxu0 %v1070
    %v1109 = vpop.f32.mrf.mxu0
    %v1110 = vadd.f32 %v1090, %v1109
    %1111 = vdwg.mxu0
    %v1112 = vmul.f32 %v1110, 0.004132231
    %v1113 = vmul.f32 %v1068, %v1068
    %v1114 = vsub.f32 %v1112, %v1113
    %v1115 = vld [vmem:[%s8] sm:$0x1]
    %v1116 = vadd.f32 %v1114, 1e-05
    %v1117 = vrsqrt.pop %v1116
    %v1118 = vmul.f32 %v1117, %v1116
    %v1119 = vmul.f32 %v1118, %v1117
    %v1120 = vmul.f32 0.5, %v1119
    %v1121 = vsub.f32 1.5, %v1120
    %v1122 = vmul.f32 %v1117, %v1121
    %vm1123 = vweird.f32 %v1116
    %vm1124 = vweird.f32 %v1117
    %vm1125 = vmor %vm1123, %vm1124
    %v1126 = vsel %vm1125, %v1117, %v1122
    %v1127 = vmul.f32 %v1115, %v1126
    %v1128 = vld [vmem:[%s9] sm:$0x1]
    %v1129 = vmul.f32 %v1068, %v1127
    %v1130 = vsub.f32 %v1128, %v1129
    %v1131 = vld [vmem:[#allocation12] sm:$0xff]
    %v1132 = vld [vmem:[#allocation12 + $0x8] sm:$0xff]
    %v1133 = vld [vmem:[#allocation12 + $0x10] sm:$0xff]
    %v1134 = vld [vmem:[#allocation12 + $0x18] sm:$0xff]
    %vm1135 = vcmask 130048
    %v1137 = vsel %vm1135, %v1127, 0
    %1139 = vmatpush.msra.mxu0 0.0
    %1140 = vmatpush.msra.mxu0 0.0
    %1141 = vmatpush.msra.mxu0 0.0
    %1142 = vmatpush.msra.mxu0 0.0
    %1143 = vmatpush.msra.mxu0 0.0
    %1144 = vmatpush.msra.mxu0 0.0
    %1145 = vmatpush.msra.mxu0 0.0
    %1146 = vmatpush.msra.mxu0 0.0
    %1147 = vmatpush.msra.mxu0 0.0
    %1148 = vmatpush.msra.mxu0 0.0
    %1149 = vmatpush.msra.mxu0 0.0
    %1150 = vmatpush.msra.mxu0 0.0
    %1151 = vmatpush.msra.mxu0 0.0
    %1152 = vmatpush.msra.mxu0 0.0
    %1153 = vmatpush.msra.mxu0 %v1133
    %1154 = vmatpush.msra.mxu0 %v1131
    %1155 = vmatmul.f32.gmra.mxu0 %v1137
    %v1156 = vpop.f32.mrf.mxu0
    %v1157 = vadd.f32 0.0, %v1156
    %1158 = vdwg.mxu0
    %1159 = vmatpush.msra.mxu0 0.0
    %1160 = vmatpush.msra.mxu0 0.0
    %1161 = vmatpush.msra.mxu0 0.0
    %1162 = vmatpush.msra.mxu0 0.0
    %1163 = vmatpush.msra.mxu0 0.0
    %1164 = vmatpush.msra.mxu0 0.0
    %1165 = vmatpush.msra.mxu0 0.0
    %1166 = vmatpush.msra.mxu0 0.0
    %1167 = vmatpush.msra.mxu0 0.0
    %1168 = vmatpush.msra.mxu0 0.0
    %1169 = vmatpush.msra.mxu0 0.0
    %1170 = vmatpush.msra.mxu0 0.0
    %1171 = vmatpush.msra.mxu0 0.0
    %1172 = vmatpush.msra.mxu0 0.0
    %1173 = vmatpush.msra.mxu0 %v1134
    %1174 = vmatpush.msra.mxu0 %v1132
    %1175 = vmatmul.f32.gmra.mxu0 %v1137
    %v1176 = vpop.f32.mrf.mxu0
    %v1177 = vadd.f32 0.0, %v1176
    %1178 = vdwg.mxu0
    %v1180 = vsel %vm1135, %v1130, 0
    %1182 = vmatpush.msra.mxu0 0.0
    %1183 = vmatpush.msra.mxu0 0.0
    %1184 = vmatpush.msra.mxu0 0.0
    %1185 = vmatpush.msra.mxu0 0.0
    %1186 = vmatpush.msra.mxu0 0.0
    %1187 = vmatpush.msra.mxu0 0.0
    %1188 = vmatpush.msra.mxu0 0.0
    %1189 = vmatpush.msra.mxu0 0.0
    %1190 = vmatpush.msra.mxu0 0.0
    %1191 = vmatpush.msra.mxu0 0.0
    %1192 = vmatpush.msra.mxu0 0.0
    %1193 = vmatpush.msra.mxu0 0.0
    %1194 = vmatpush.msra.mxu0 0.0
    %1195 = vmatpush.msra.mxu0 0.0
    %1196 = vmatpush.msra.mxu0 %v1133
    %1197 = vmatpush.msra.mxu0 %v1131
    %1198 = vmatmul.f32.gmra.mxu0 %v1180
    %v1199 = vpop.f32.mrf.mxu0
    %v1200 = vadd.f32 0.0, %v1199
    %1201 = vdwg.mxu0
    %1202 = vmatpush.msra.mxu0 0.0
    %1203 = vmatpush.msra.mxu0 0.0
    %1204 = vmatpush.msra.mxu0 0.0
    %1205 = vmatpush.msra.mxu0 0.0
    %1206 = vmatpush.msra.mxu0 0.0
    %1207 = vmatpush.msra.mxu0 0.0
    %1208 = vmatpush.msra.mxu0 0.0
    %1209 = vmatpush.msra.mxu0 0.0
    %1210 = vmatpush.msra.mxu0 0.0
    %1211 = vmatpush.msra.mxu0 0.0
    %1212 = vmatpush.msra.mxu0 0.0
    %1213 = vmatpush.msra.mxu0 0.0
    %1214 = vmatpush.msra.mxu0 0.0
    %1215 = vmatpush.msra.mxu0 0.0
    %1216 = vmatpush.msra.mxu0 %v1134
    %1217 = vmatpush.msra.mxu0 %v1132
    %1218 = vmatmul.f32.gmra.mxu0 %v1180
    %v1219 = vpop.f32.mrf.mxu0
    %v1220 = vadd.f32 0.0, %v1219
    %1221 = vdwg.mxu0
    %v1222 = vperm.slane %v1157, 0
    %v1223 = vperm.slane %v1177, 0
    %v1224 = vmul.f32 %v947, %v1222
    %v1225 = vmul.f32 %v948, %v1223
    %v1226 = vmul.f32 %v949, %v1222
    %v1227 = vmul.f32 %v950, %v1223
    %v1228 = vmul.f32 %v951, %v1222
    %v1229 = vmul.f32 %v952, %v1223
    %v1230 = vperm.slane %v1200, 0
    %v1231 = vperm.slane %v1220, 0
    %v1232 = vadd.f32 %v1224, %v1230
    %v1233 = vadd.f32 %v1225, %v1231
    %v1234 = vadd.f32 %v1226, %v1230
    %v1235 = vadd.f32 %v1227, %v1231
    %v1236 = vadd.f32 %v1228, %v1230
    %v1237 = vadd.f32 %v1229, %v1231
    %vm1238 = vcmp.gt.f32.partialorder %v1232, 0.0
    %vm1239 = vcmp.gt.f32.partialorder %v1233, 0.0
    %vm1240 = vcmp.gt.f32.partialorder %v1234, 0.0
    %vm1241 = vcmp.gt.f32.partialorder %v1235, 0.0
    %vm1242 = vcmp.gt.f32.partialorder %v1236, 0.0
    %vm1243 = vcmp.gt.f32.partialorder %v1237, 0.0
    %v1244 = vstv %s953
    %v1245 = vmul.f32 %v1244, %v1232
    %v1246 = vmul.f32 %v1244, %v1233
    %v1247 = vmul.f32 %v1244, %v1234
    %v1248 = vmul.f32 %v1244, %v1235
    %v1249 = vmul.f32 %v1244, %v1236
    %v1250 = vmul.f32 %v1244, %v1237
    %v1251 = vsel %vm1238, %v1232, %v1245
    %v1252 = vsel %vm1239, %v1233, %v1246
    %v1253 = vsel %vm1240, %v1234, %v1247
    %v1254 = vsel %vm1241, %v1235, %v1248
    %v1255 = vsel %vm1242, %v1236, %v1249
    %v1256 = vsel %vm1243, %v1237, %v1250
    %v1257 = vld [vmem:[%s12] sm:$0x3]
    %v1258 = vld [vmem:[#allocation13] sm:$0xff]
    %v1259 = vld [vmem:[#allocation13 + $0x8] sm:$0xff]
    %v1260 = vld [vmem:[#allocation13 + $0x10] sm:$0xff]
    %v1261 = vld [vmem:[#allocation13 + $0x18] sm:$0xff]
    %v1262 = vld [vmem:[#allocation13 + $0x20] sm:$0xff]
    %v1263 = vld [vmem:[#allocation13 + $0x28] sm:$0xff]
    %v1264 = vld [vmem:[#allocation13 + $0x30] sm:$0xff]
    %v1265 = vld [vmem:[#allocation13 + $0x38] sm:$0xff]
    %v1266 = vld [vmem:[#allocation13 + $0x40] sm:$0xff]
    %v1267 = vld [vmem:[#allocation13 + $0x48] sm:$0xff]
    %v1268 = vld [vmem:[#allocation13 + $0x50] sm:$0xff]
    %v1269 = vld [vmem:[#allocation13 + $0x58] sm:$0xff]
    %v1270 = vld [vmem:[#allocation13 + $0x60] sm:$0xff]
    %v1271 = vld [vmem:[#allocation13 + $0x68] sm:$0xff]
    %v1272 = vld [vmem:[#allocation13 + $0x70] sm:$0xff]
    %v1273 = vld [vmem:[#allocation13 + $0x78] sm:$0xff]
    %v1274 = vld [vmem:[#allocation13 + $0x80] sm:$0xff]
    %v1275 = vld [vmem:[#allocation13 + $0x88] sm:$0xff]
    %v1276 = vld [vmem:[#allocation13 + $0x90] sm:$0xff]
    %v1277 = vld [vmem:[#allocation13 + $0x98] sm:$0xff]
    %v1278 = vld [vmem:[#allocation13 + $0xa0] sm:$0xff]
    %v1279 = vld [vmem:[#allocation13 + $0xa8] sm:$0xff]
    %v1280 = vld [vmem:[#allocation13 + $0xb0] sm:$0xff]
    %v1281 = vld [vmem:[#allocation13 + $0xb8] sm:$0xff]
    %v1282 = vld [vmem:[#allocation13 + $0xc0] sm:$0xff]
    %v1283 = vld [vmem:[#allocation13 + $0xc8] sm:$0xff]
    %v1284 = vld [vmem:[#allocation13 + $0xd0] sm:$0xff]
    %v1285 = vld [vmem:[#allocation13 + $0xd8] sm:$0xff]
    %v1286 = vld [vmem:[#allocation13 + $0xe0] sm:$0xff]
    %v1287 = vld [vmem:[#allocation13 + $0xe8] sm:$0xff]
    %v1288 = vld [vmem:[#allocation13 + $0xf0] sm:$0xff]
    %v1289 = vld [vmem:[#allocation13 + $0xf8] sm:$0xff]
    %v1290 = vld [vmem:[#allocation13 + $0x100] sm:$0xff]
    %v1291 = vld [vmem:[#allocation13 + $0x108] sm:$0xff]
    %v1292 = vld [vmem:[#allocation13 + $0x110] sm:$0xff]
    %v1293 = vld [vmem:[#allocation13 + $0x118] sm:$0xff]
    %v1294 = vld [vmem:[#allocation13 + $0x120] sm:$0xff]
    %v1295 = vld [vmem:[#allocation13 + $0x128] sm:$0xff]
    %v1296 = vld [vmem:[#allocation13 + $0x130] sm:$0xff]
    %v1297 = vld [vmem:[#allocation13 + $0x138] sm:$0xff]
    %v1298 = vld [vmem:[#allocation13 + $0x140] sm:$0xff]
    %v1299 = vld [vmem:[#allocation13 + $0x148] sm:$0xff]
    %v1300 = vld [vmem:[#allocation13 + $0x150] sm:$0xff]
    %v1301 = vld [vmem:[#allocation13 + $0x158] sm:$0xff]
    %v1303 = vsel %vm964, %v1252, 0
    %v1306 = vsel %vm964, %v1254, 0
    %v1309 = vsel %vm964, %v1256, 0
    %1311 = vmatpush.msra.mxu0 %v1288
    %1312 = vmatpush.msra.mxu0 %v1286
    %1313 = vmatpush.msra.mxu0 %v1284
    %1314 = vmatpush.msra.mxu0 %v1282
    %1315 = vmatpush.msra.mxu0 %v1280
    %1316 = vmatpush.msra.mxu0 %v1278
    %1317 = vmatpush.msra.mxu0 %v1276
    %1318 = vmatpush.msra.mxu0 %v1274
    %1319 = vmatpush.msra.mxu0 %v1272
    %1320 = vmatpush.msra.mxu0 %v1270
    %1321 = vmatpush.msra.mxu0 %v1268
    %1322 = vmatpush.msra.mxu0 %v1266
    %1323 = vmatpush.msra.mxu0 %v1264
    %1324 = vmatpush.msra.mxu0 %v1262
    %1325 = vmatpush.msra.mxu0 %v1260
    %1326 = vmatpush.msra.mxu0 %v1258
    %1327 = vmatmul.f32.gmra.mxu0 %v1251
    %v1328 = vpop.f32.mrf.mxu0
    %v1329 = vadd.f32 0.0, %v1328
    %1330 = vmatmul.f32.gmra.mxu0 %v1253
    %v1331 = vpop.f32.mrf.mxu0
    %v1332 = vadd.f32 0.0, %v1331
    %1333 = vmatmul.f32.gmra.mxu0 %v1255
    %v1334 = vpop.f32.mrf.mxu0
    %v1335 = vadd.f32 0.0, %v1334
    %1336 = vdwg.mxu0
    %1337 = vmatpush.msra.mxu0 0.0
    %1338 = vmatpush.msra.mxu0 0.0
    %1339 = vmatpush.msra.mxu0 0.0
    %1340 = vmatpush.msra.mxu0 0.0
    %1341 = vmatpush.msra.mxu0 0.0
    %1342 = vmatpush.msra.mxu0 0.0
    %1343 = vmatpush.msra.mxu0 0.0
    %1344 = vmatpush.msra.mxu0 0.0
    %1345 = vmatpush.msra.mxu0 0.0
    %1346 = vmatpush.msra.mxu0 0.0
    %1347 = vmatpush.msra.mxu0 %v1300
    %1348 = vmatpush.msra.mxu0 %v1298
    %1349 = vmatpush.msra.mxu0 %v1296
    %1350 = vmatpush.msra.mxu0 %v1294
    %1351 = vmatpush.msra.mxu0 %v1292
    %1352 = vmatpush.msra.mxu0 %v1290
    %1353 = vmatmul.f32.gmra.mxu0 %v1303
    %v1354 = vpop.f32.mrf.mxu0
    %v1355 = vadd.f32 %v1329, %v1354
    %1356 = vmatmul.f32.gmra.mxu0 %v1306
    %v1357 = vpop.f32.mrf.mxu0
    %v1358 = vadd.f32 %v1332, %v1357
    %1359 = vmatmul.f32.gmra.mxu0 %v1309
    %v1360 = vpop.f32.mrf.mxu0
    %v1361 = vadd.f32 %v1335, %v1360
    %1362 = vdwg.mxu0
    %1363 = vmatpush.msra.mxu0 %v1289
    %1364 = vmatpush.msra.mxu0 %v1287
    %1365 = vmatpush.msra.mxu0 %v1285
    %1366 = vmatpush.msra.mxu0 %v1283
    %1367 = vmatpush.msra.mxu0 %v1281
    %1368 = vmatpush.msra.mxu0 %v1279
    %1369 = vmatpush.msra.mxu0 %v1277
    %1370 = vmatpush.msra.mxu0 %v1275
    %1371 = vmatpush.msra.mxu0 %v1273
    %1372 = vmatpush.msra.mxu0 %v1271
    %1373 = vmatpush.msra.mxu0 %v1269
    %1374 = vmatpush.msra.mxu0 %v1267
    %1375 = vmatpush.msra.mxu0 %v1265
    %1376 = vmatpush.msra.mxu0 %v1263
    %1377 = vmatpush.msra.mxu0 %v1261
    %1378 = vmatpush.msra.mxu0 %v1259
    %1379 = vmatmul.f32.gmra.mxu0 %v1251
    %v1380 = vpop.f32.mrf.mxu0
    %v1381 = vadd.f32 0.0, %v1380
    %1382 = vmatmul.f32.gmra.mxu0 %v1253
    %v1383 = vpop.f32.mrf.mxu0
    %v1384 = vadd.f32 0.0, %v1383
    %1385 = vmatmul.f32.gmra.mxu0 %v1255
    %v1386 = vpop.f32.mrf.mxu0
    %v1387 = vadd.f32 0.0, %v1386
    %1388 = vdwg.mxu0
    %1389 = vmatpush.msra.mxu0 0.0
    %1390 = vmatpush.msra.mxu0 0.0
    %1391 = vmatpush.msra.mxu0 0.0
    %1392 = vmatpush.msra.mxu0 0.0
    %1393 = vmatpush.msra.mxu0 0.0
    %1394 = vmatpush.msra.mxu0 0.0
    %1395 = vmatpush.msra.mxu0 0.0
    %1396 = vmatpush.msra.mxu0 0.0
    %1397 = vmatpush.msra.mxu0 0.0
    %1398 = vmatpush.msra.mxu0 0.0
    %1399 = vmatpush.msra.mxu0 %v1301
    %1400 = vmatpush.msra.mxu0 %v1299
    %1401 = vmatpush.msra.mxu0 %v1297
    %1402 = vmatpush.msra.mxu0 %v1295
    %1403 = vmatpush.msra.mxu0 %v1293
    %1404 = vmatpush.msra.mxu0 %v1291
    %1405 = vmatmul.f32.gmra.mxu0 %v1303
    %v1406 = vpop.f32.mrf.mxu0
    %v1407 = vadd.f32 %v1381, %v1406
    %1408 = vmatmul.f32.gmra.mxu0 %v1306
    %v1409 = vpop.f32.mrf.mxu0
    %v1410 = vadd.f32 %v1384, %v1409
    %1411 = vmatmul.f32.gmra.mxu0 %v1309
    %v1412 = vpop.f32.mrf.mxu0
    %v1413 = vadd.f32 %v1387, %v1412
    %1414 = vdwg.mxu0
    %v1415 = vld [vmem:[#allocation15] sm:$0xff]
    %v1416 = vld [vmem:[#allocation15 + $0x8] sm:$0xff]
    %v1417 = vld [vmem:[#allocation15 + $0x10] sm:$0xff]
    %v1418 = vld [vmem:[#allocation15 + $0x18] sm:$0xff]
    %v1419 = vld [vmem:[#allocation15 + $0x20] sm:$0xff]
    %v1420 = vld [vmem:[#allocation15 + $0x28] sm:$0xff]
    %v1421 = vld [vmem:[#allocation15 + $0x30] sm:$0xf]
    %vm1422 = vcmask 179200
    %v1424 = vsel %vm1422, %v1415, 0
    %v1427 = vsel %vm1422, %v1416, 0
    %v1430 = vsel %vm1422, %v1417, 0
    %v1433 = vsel %vm1422, %v1418, 0
    %v1436 = vsel %vm1422, %v1419, 0
    %v1439 = vsel %vm1422, %v1420, 0
    %v1442 = vsel %vm1422, %v1421, 0
    %v1445 = vsel %vm955, %v1361, 0
    %v1448 = vsel %vm955, %v1413, 0
    %1450 = vmatpush.msra.mxu0 0.0
    %1451 = vmatpush.msra.mxu0 0.0
    %1452 = vmatpush.msra.mxu0 0.0
    %1453 = vmatpush.msra.mxu0 0.0
    %1454 = vmatpush.msra.mxu0 0.0
    %1455 = vmatpush.msra.mxu0 0.0
    %1456 = vmatpush.msra.mxu0 0.0
    %1457 = vmatpush.msra.mxu0 0.0
    %1458 = vmatpush.msra.mxu0 0.0
    %1459 = vmatpush.msra.mxu0 0.0
    %1460 = vmatpush.msra.mxu0 0.0
    %1461 = vmatpush.msra.mxu0 0.0
    %1462 = vmatpush.msra.mxu0 0.0
    %1463 = vmatpush.msra.mxu0 %v1445
    %1464 = vmatpush.msra.mxu0 %v1358
    %1465 = vmatpush.msra.mxu0 %v1355
    %1466 = vmatmul.f32.gmra.mxu0 %v1424
    %v1467 = vpop.f32.mrf.mxu0
    %v1468 = vadd.f32 0.0, %v1467
    %1469 = vmatmul.f32.gmra.mxu0 %v1427
    %v1470 = vpop.f32.mrf.mxu0
    %v1471 = vadd.f32 0.0, %v1470
    %1472 = vmatmul.f32.gmra.mxu0 %v1430
    %v1473 = vpop.f32.mrf.mxu0
    %v1474 = vadd.f32 0.0, %v1473
    %1475 = vmatmul.f32.gmra.mxu0 %v1433
    %v1476 = vpop.f32.mrf.mxu0
    %v1477 = vadd.f32 0.0, %v1476
    %1478 = vmatmul.f32.gmra.mxu0 %v1436
    %v1479 = vpop.f32.mrf.mxu0
    %v1480 = vadd.f32 0.0, %v1479
    %1481 = vmatmul.f32.gmra.mxu0 %v1439
    %v1482 = vpop.f32.mrf.mxu0
    %v1483 = vadd.f32 0.0, %v1482
    %1484 = vmatmul.f32.gmra.mxu0 %v1442
    %v1485 = vpop.f32.mrf.mxu0
    %v1486 = vadd.f32 0.0, %v1485
    %1487 = vdwg.mxu0
    %1488 = vmatpush.msra.mxu0 0.0
    %1489 = vmatpush.msra.mxu0 0.0
    %1490 = vmatpush.msra.mxu0 0.0
    %1491 = vmatpush.msra.mxu0 0.0
    %1492 = vmatpush.msra.mxu0 0.0
    %1493 = vmatpush.msra.mxu0 0.0
    %1494 = vmatpush.msra.mxu0 0.0
    %1495 = vmatpush.msra.mxu0 0.0
    %1496 = vmatpush.msra.mxu0 0.0
    %1497 = vmatpush.msra.mxu0 0.0
    %1498 = vmatpush.msra.mxu0 0.0
    %1499 = vmatpush.msra.mxu0 0.0
    %1500 = vmatpush.msra.mxu0 0.0
    %1501 = vmatpush.msra.mxu0 %v1448
    %1502 = vmatpush.msra.mxu0 %v1410
    %1503 = vmatpush.msra.mxu0 %v1407
    %1504 = vmatmul.f32.gmra.mxu0 %v1424
    %v1505 = vpop.f32.mrf.mxu0
    %v1506 = vadd.f32 0.0, %v1505
    %1507 = vmatmul.f32.gmra.mxu0 %v1427
    %v1508 = vpop.f32.mrf.mxu0
    %v1509 = vadd.f32 0.0, %v1508
    %1510 = vmatmul.f32.gmra.mxu0 %v1430
    %v1511 = vpop.f32.mrf.mxu0
    %v1512 = vadd.f32 0.0, %v1511
    %1513 = vmatmul.f32.gmra.mxu0 %v1433
    %v1514 = vpop.f32.mrf.mxu0
    %v1515 = vadd.f32 0.0, %v1514
    %1516 = vmatmul.f32.gmra.mxu0 %v1436
    %v1517 = vpop.f32.mrf.mxu0
    %v1518 = vadd.f32 0.0, %v1517
    %1519 = vmatmul.f32.gmra.mxu0 %v1439
    %v1520 = vpop.f32.mrf.mxu0
    %v1521 = vadd.f32 0.0, %v1520
    %1522 = vmatmul.f32.gmra.mxu0 %v1442
    %v1523 = vpop.f32.mrf.mxu0
    %v1524 = vadd.f32 0.0, %v1523
    %1525 = vdwg.mxu0
    %v1527 = vperm.slane %v1257, 0
    %v1528 = vperm.slane %v1257, 1
    %v1531 = vadd.f32 %v1527, %v1468
    %v1532 = vadd.f32 %v1528, %v1506
    %v1533 = vadd.f32 %v1527, %v1471
    %v1534 = vadd.f32 %v1528, %v1509
    %v1535 = vadd.f32 %v1527, %v1474
    %v1536 = vadd.f32 %v1528, %v1512
    %v1537 = vadd.f32 %v1527, %v1477
    %v1538 = vadd.f32 %v1528, %v1515
    %v1539 = vadd.f32 %v1527, %v1480
    %v1540 = vadd.f32 %v1528, %v1518
    %v1541 = vadd.f32 %v1527, %v1483
    %v1542 = vadd.f32 %v1528, %v1521
    %v1543 = vadd.f32 %v1527, %v1486
    %v1544 = vadd.f32 %v1528, %v1524
    %s1545 = scalar_lea.vmem [#allocation13], 352
    %v1546 = vld [vmem:[%s1545] sm:$0xff]
    %v1547 = vld [vmem:[%s1545 + $0x8] sm:$0xff]
    %v1548 = vld [vmem:[%s1545 + $0x10] sm:$0xff]
    %v1549 = vld [vmem:[%s1545 + $0x18] sm:$0xff]
    %v1550 = vld [vmem:[%s1545 + $0x20] sm:$0xff]
    %v1551 = vld [vmem:[%s1545 + $0x28] sm:$0xff]
    %v1552 = vld [vmem:[%s1545 + $0x30] sm:$0xff]
    %v1553 = vld [vmem:[%s1545 + $0x38] sm:$0xff]
    %v1554 = vld [vmem:[%s1545 + $0x40] sm:$0xff]
    %v1555 = vld [vmem:[%s1545 + $0x48] sm:$0xff]
    %v1556 = vld [vmem:[%s1545 + $0x50] sm:$0xff]
    %v1557 = vld [vmem:[%s1545 + $0x58] sm:$0xff]
    %v1558 = vld [vmem:[%s1545 + $0x60] sm:$0xff]
    %v1559 = vld [vmem:[%s1545 + $0x68] sm:$0xff]
    %v1560 = vld [vmem:[%s1545 + $0x70] sm:$0xff]
    %v1561 = vld [vmem:[%s1545 + $0x78] sm:$0xff]
    %v1562 = vld [vmem:[%s1545 + $0x80] sm:$0xff]
    %v1563 = vld [vmem:[%s1545 + $0x88] sm:$0xff]
    %v1564 = vld [vmem:[%s1545 + $0x90] sm:$0xff]
    %v1565 = vld [vmem:[%s1545 + $0x98] sm:$0xff]
    %v1566 = vld [vmem:[%s1545 + $0xa0] sm:$0xff]
    %v1567 = vld [vmem:[%s1545 + $0xa8] sm:$0xff]
    %v1568 = vld [vmem:[%s1545 + $0xb0] sm:$0xff]
    %v1569 = vld [vmem:[%s1545 + $0xb8] sm:$0xff]
    %v1570 = vld [vmem:[%s1545 + $0xc0] sm:$0xff]
    %v1571 = vld [vmem:[%s1545 + $0xc8] sm:$0xff]
    %v1572 = vld [vmem:[%s1545 + $0xd0] sm:$0xff]
    %v1573 = vld [vmem:[%s1545 + $0xd8] sm:$0xff]
    %v1574 = vld [vmem:[%s1545 + $0xe0] sm:$0xff]
    %v1575 = vld [vmem:[%s1545 + $0xe8] sm:$0xff]
    %v1576 = vld [vmem:[%s1545 + $0xf0] sm:$0xff]
    %v1577 = vld [vmem:[%s1545 + $0xf8] sm:$0xff]
    %v1578 = vld [vmem:[%s1545 + $0x100] sm:$0xff]
    %v1579 = vld [vmem:[%s1545 + $0x108] sm:$0xff]
    %v1580 = vld [vmem:[%s1545 + $0x110] sm:$0xff]
    %v1581 = vld [vmem:[%s1545 + $0x118] sm:$0xff]
    %v1582 = vld [vmem:[%s1545 + $0x120] sm:$0xff]
    %v1583 = vld [vmem:[%s1545 + $0x128] sm:$0xff]
    %v1584 = vld [vmem:[%s1545 + $0x130] sm:$0xff]
    %v1585 = vld [vmem:[%s1545 + $0x138] sm:$0xff]
    %v1586 = vld [vmem:[%s1545 + $0x140] sm:$0xff]
    %v1587 = vld [vmem:[%s1545 + $0x148] sm:$0xff]
    %v1588 = vld [vmem:[%s1545 + $0x150] sm:$0xff]
    %v1589 = vld [vmem:[%s1545 + $0x158] sm:$0xff]
    %1590 = vmatpush.msra.mxu0 %v1576
    %1591 = vmatpush.msra.mxu0 %v1574
    %1592 = vmatpush.msra.mxu0 %v1572
    %1593 = vmatpush.msra.mxu0 %v1570
    %1594 = vmatpush.msra.mxu0 %v1568
    %1595 = vmatpush.msra.mxu0 %v1566
    %1596 = vmatpush.msra.mxu0 %v1564
    %1597 = vmatpush.msra.mxu0 %v1562
    %1598 = vmatpush.msra.mxu0 %v1560
    %1599 = vmatpush.msra.mxu0 %v1558
    %1600 = vmatpush.msra.mxu0 %v1556
    %1601 = vmatpush.msra.mxu0 %v1554
    %1602 = vmatpush.msra.mxu0 %v1552
    %1603 = vmatpush.msra.mxu0 %v1550
    %1604 = vmatpush.msra.mxu0 %v1548
    %1605 = vmatpush.msra.mxu0 %v1546
    %1606 = vmatmul.f32.gmra.mxu0 %v1251
    %v1607 = vpop.f32.mrf.mxu0
    %v1608 = vadd.f32 0.0, %v1607
    %1609 = vmatmul.f32.gmra.mxu0 %v1253
    %v1610 = vpop.f32.mrf.mxu0
    %v1611 = vadd.f32 0.0, %v1610
    %1612 = vmatmul.f32.gmra.mxu0 %v1255
    %v1613 = vpop.f32.mrf.mxu0
    %v1614 = vadd.f32 0.0, %v1613
    %1615 = vdwg.mxu0
    %1616 = vmatpush.msra.mxu0 0.0
    %1617 = vmatpush.msra.mxu0 0.0
    %1618 = vmatpush.msra.mxu0 0.0
    %1619 = vmatpush.msra.mxu0 0.0
    %1620 = vmatpush.msra.mxu0 0.0
    %1621 = vmatpush.msra.mxu0 0.0
    %1622 = vmatpush.msra.mxu0 0.0
    %1623 = vmatpush.msra.mxu0 0.0
    %1624 = vmatpush.msra.mxu0 0.0
    %1625 = vmatpush.msra.mxu0 0.0
    %1626 = vmatpush.msra.mxu0 %v1588
    %1627 = vmatpush.msra.mxu0 %v1586
    %1628 = vmatpush.msra.mxu0 %v1584
    %1629 = vmatpush.msra.mxu0 %v1582
    %1630 = vmatpush.msra.mxu0 %v1580
    %1631 = vmatpush.msra.mxu0 %v1578
    %1632 = vmatmul.f32.gmra.mxu0 %v1303
    %v1633 = vpop.f32.mrf.mxu0
    %v1634 = vadd.f32 %v1608, %v1633
    %1635 = vmatmul.f32.gmra.mxu0 %v1306
    %v1636 = vpop.f32.mrf.mxu0
    %v1637 = vadd.f32 %v1611, %v1636
    %1638 = vmatmul.f32.gmra.mxu0 %v1309
    %v1639 = vpop.f32.mrf.mxu0
    %v1640 = vadd.f32 %v1614, %v1639
    %1641 = vdwg.mxu0
    %1642 = vmatpush.msra.mxu0 %v1577
    %1643 = vmatpush.msra.mxu0 %v1575
    %1644 = vmatpush.msra.mxu0 %v1573
    %1645 = vmatpush.msra.mxu0 %v1571
    %1646 = vmatpush.msra.mxu0 %v1569
    %1647 = vmatpush.msra.mxu0 %v1567
    %1648 = vmatpush.msra.mxu0 %v1565
    %1649 = vmatpush.msra.mxu0 %v1563
    %1650 = vmatpush.msra.mxu0 %v1561
    %1651 = vmatpush.msra.mxu0 %v1559
    %1652 = vmatpush.msra.mxu0 %v1557
    %1653 = vmatpush.msra.mxu0 %v1555
    %1654 = vmatpush.msra.mxu0 %v1553
    %1655 = vmatpush.msra.mxu0 %v1551
    %1656 = vmatpush.msra.mxu0 %v1549
    %1657 = vmatpush.msra.mxu0 %v1547
    %1658 = vmatmul.f32.gmra.mxu0 %v1251
    %v1659 = vpop.f32.mrf.mxu0
    %v1660 = vadd.f32 0.0, %v1659
    %1661 = vmatmul.f32.gmra.mxu0 %v1253
    %v1662 = vpop.f32.mrf.mxu0
    %v1663 = vadd.f32 0.0, %v1662
    %1664 = vmatmul.f32.gmra.mxu0 %v1255
    %v1665 = vpop.f32.mrf.mxu0
    %v1666 = vadd.f32 0.0, %v1665
    %1667 = vdwg.mxu0
    %1668 = vmatpush.msra.mxu0 0.0
    %1669 = vmatpush.msra.mxu0 0.0
    %1670 = vmatpush.msra.mxu0 0.0
    %1671 = vmatpush.msra.mxu0 0.0
    %1672 = vmatpush.msra.mxu0 0.0
    %1673 = vmatpush.msra.mxu0 0.0
    %1674 = vmatpush.msra.mxu0 0.0
    %1675 = vmatpush.msra.mxu0 0.0
    %1676 = vmatpush.msra.mxu0 0.0
    %1677 = vmatpush.msra.mxu0 0.0
    %1678 = vmatpush.msra.mxu0 %v1589
    %1679 = vmatpush.msra.mxu0 %v1587
    %1680 = vmatpush.msra.mxu0 %v1585
    %1681 = vmatpush.msra.mxu0 %v1583
    %1682 = vmatpush.msra.mxu0 %v1581
    %1683 = vmatpush.msra.mxu0 %v1579
    %1684 = vmatmul.f32.gmra.mxu0 %v1303
    %v1685 = vpop.f32.mrf.mxu0
    %v1686 = vadd.f32 %v1660, %v1685
    %1687 = vmatmul.f32.gmra.mxu0 %v1306
    %v1688 = vpop.f32.mrf.mxu0
    %v1689 = vadd.f32 %v1663, %v1688
    %1690 = vmatmul.f32.gmra.mxu0 %v1309
    %v1691 = vpop.f32.mrf.mxu0
    %v1692 = vadd.f32 %v1666, %v1691
    %1693 = vdwg.mxu0
    %s1694 = scalar_lea.vmem [#allocation15], 56
    %v1695 = vld [vmem:[%s1694] sm:$0xff]
    %v1696 = vld [vmem:[%s1694 + $0x8] sm:$0xff]
    %v1697 = vld [vmem:[%s1694 + $0x10] sm:$0xff]
    %v1698 = vld [vmem:[%s1694 + $0x18] sm:$0xff]
    %v1699 = vld [vmem:[%s1694 + $0x20] sm:$0xff]
    %v1700 = vld [vmem:[%s1694 + $0x28] sm:$0xff]
    %v1701 = vld [vmem:[%s1694 + $0x30] sm:$0xf]
    %v1703 = vsel %vm1422, %v1695, 0
    %v1706 = vsel %vm1422, %v1696, 0
    %v1709 = vsel %vm1422, %v1697, 0
    %v1712 = vsel %vm1422, %v1698, 0
    %v1715 = vsel %vm1422, %v1699, 0
    %v1718 = vsel %vm1422, %v1700, 0
    %v1721 = vsel %vm1422, %v1701, 0
    %v1724 = vsel %vm955, %v1640, 0
    %v1727 = vsel %vm955, %v1692, 0
    %1729 = vmatpush.msra.mxu0 0.0
    %1730 = vmatpush.msra.mxu0 0.0
    %1731 = vmatpush.msra.mxu0 0.0
    %1732 = vmatpush.msra.mxu0 0.0
    %1733 = vmatpush.msra.mxu0 0.0
    %1734 = vmatpush.msra.mxu0 0.0
    %1735 = vmatpush.msra.mxu0 0.0
    %1736 = vmatpush.msra.mxu0 0.0
    %1737 = vmatpush.msra.mxu0 0.0
    %1738 = vmatpush.msra.mxu0 0.0
    %1739 = vmatpush.msra.mxu0 0.0
    %1740 = vmatpush.msra.mxu0 0.0
    %1741 = vmatpush.msra.mxu0 0.0
    %1742 = vmatpush.msra.mxu0 %v1724
    %1743 = vmatpush.msra.mxu0 %v1637
    %1744 = vmatpush.msra.mxu0 %v1634
    %1745 = vmatmul.f32.gmra.mxu0 %v1703
    %v1746 = vpop.f32.mrf.mxu0
    %v1747 = vadd.f32 0.0, %v1746
    %1748 = vmatmul.f32.gmra.mxu0 %v1706
    %v1749 = vpop.f32.mrf.mxu0
    %v1750 = vadd.f32 0.0, %v1749
    %1751 = vmatmul.f32.gmra.mxu0 %v1709
    %v1752 = vpop.f32.mrf.mxu0
    %v1753 = vadd.f32 0.0, %v1752
    %1754 = vmatmul.f32.gmra.mxu0 %v1712
    %v1755 = vpop.f32.mrf.mxu0
    %v1756 = vadd.f32 0.0, %v1755
    %1757 = vmatmul.f32.gmra.mxu0 %v1715
    %v1758 = vpop.f32.mrf.mxu0
    %v1759 = vadd.f32 0.0, %v1758
    %1760 = vmatmul.f32.gmra.mxu0 %v1718
    %v1761 = vpop.f32.mrf.mxu0
    %v1762 = vadd.f32 0.0, %v1761
    %1763 = vmatmul.f32.gmra.mxu0 %v1721
    %v1764 = vpop.f32.mrf.mxu0
    %v1765 = vadd.f32 0.0, %v1764
    %1766 = vdwg.mxu0
    %1767 = vmatpush.msra.mxu0 0.0
    %1768 = vmatpush.msra.mxu0 0.0
    %1769 = vmatpush.msra.mxu0 0.0
    %1770 = vmatpush.msra.mxu0 0.0
    %1771 = vmatpush.msra.mxu0 0.0
    %1772 = vmatpush.msra.mxu0 0.0
    %1773 = vmatpush.msra.mxu0 0.0
    %1774 = vmatpush.msra.mxu0 0.0
    %1775 = vmatpush.msra.mxu0 0.0
    %1776 = vmatpush.msra.mxu0 0.0
    %1777 = vmatpush.msra.mxu0 0.0
    %1778 = vmatpush.msra.mxu0 0.0
    %1779 = vmatpush.msra.mxu0 0.0
    %1780 = vmatpush.msra.mxu0 %v1727
    %1781 = vmatpush.msra.mxu0 %v1689
    %1782 = vmatpush.msra.mxu0 %v1686
    %1783 = vmatmul.f32.gmra.mxu0 %v1703
    %v1784 = vpop.f32.mrf.mxu0
    %v1785 = vadd.f32 0.0, %v1784
    %1786 = vmatmul.f32.gmra.mxu0 %v1706
    %v1787 = vpop.f32.mrf.mxu0
    %v1788 = vadd.f32 0.0, %v1787
    %1789 = vmatmul.f32.gmra.mxu0 %v1709
    %v1790 = vpop.f32.mrf.mxu0
    %v1791 = vadd.f32 0.0, %v1790
    %1792 = vmatmul.f32.gmra.mxu0 %v1712
    %v1793 = vpop.f32.mrf.mxu0
    %v1794 = vadd.f32 0.0, %v1793
    %1795 = vmatmul.f32.gmra.mxu0 %v1715
    %v1796 = vpop.f32.mrf.mxu0
    %v1797 = vadd.f32 0.0, %v1796
    %1798 = vmatmul.f32.gmra.mxu0 %v1718
    %v1799 = vpop.f32.mrf.mxu0
    %v1800 = vadd.f32 0.0, %v1799
    %1801 = vmatmul.f32.gmra.mxu0 %v1721
    %v1802 = vpop.f32.mrf.mxu0
    %v1803 = vadd.f32 0.0, %v1802
    %1804 = vdwg.mxu0
    %v1805 = vadd.f32 %v1531, %v1747
    %v1806 = vadd.f32 %v1532, %v1785
    %v1807 = vadd.f32 %v1533, %v1750
    %v1808 = vadd.f32 %v1534, %v1788
    %v1809 = vadd.f32 %v1535, %v1753
    %v1810 = vadd.f32 %v1536, %v1791
    %v1811 = vadd.f32 %v1537, %v1756
    %v1812 = vadd.f32 %v1538, %v1794
    %v1813 = vadd.f32 %v1539, %v1759
    %v1814 = vadd.f32 %v1540, %v1797
    %v1815 = vadd.f32 %v1541, %v1762
    %v1816 = vadd.f32 %v1542, %v1800
    %v1817 = vadd.f32 %v1543, %v1765
    %v1818 = vadd.f32 %v1544, %v1803
    %s1819 = scalar_lea.vmem [#allocation13], 704
    %v1820 = vld [vmem:[%s1819] sm:$0xff]
    %v1821 = vld [vmem:[%s1819 + $0x8] sm:$0xff]
    %v1822 = vld [vmem:[%s1819 + $0x10] sm:$0xff]
    %v1823 = vld [vmem:[%s1819 + $0x18] sm:$0xff]
    %v1824 = vld [vmem:[%s1819 + $0x20] sm:$0xff]
    %v1825 = vld [vmem:[%s1819 + $0x28] sm:$0xff]
    %v1826 = vld [vmem:[%s1819 + $0x30] sm:$0xff]
    %v1827 = vld [vmem:[%s1819 + $0x38] sm:$0xff]
    %v1828 = vld [vmem:[%s1819 + $0x40] sm:$0xff]
    %v1829 = vld [vmem:[%s1819 + $0x48] sm:$0xff]
    %v1830 = vld [vmem:[%s1819 + $0x50] sm:$0xff]
    %v1831 = vld [vmem:[%s1819 + $0x58] sm:$0xff]
    %v1832 = vld [vmem:[%s1819 + $0x60] sm:$0xff]
    %v1833 = vld [vmem:[%s1819 + $0x68] sm:$0xff]
    %v1834 = vld [vmem:[%s1819 + $0x70] sm:$0xff]
    %v1835 = vld [vmem:[%s1819 + $0x78] sm:$0xff]
    %v1836 = vld [vmem:[%s1819 + $0x80] sm:$0xff]
    %v1837 = vld [vmem:[%s1819 + $0x88] sm:$0xff]
    %v1838 = vld [vmem:[%s1819 + $0x90] sm:$0xff]
    %v1839 = vld [vmem:[%s1819 + $0x98] sm:$0xff]
    %v1840 = vld [vmem:[%s1819 + $0xa0] sm:$0xff]
    %v1841 = vld [vmem:[%s1819 + $0xa8] sm:$0xff]
    %v1842 = vld [vmem:[%s1819 + $0xb0] sm:$0xff]
    %v1843 = vld [vmem:[%s1819 + $0xb8] sm:$0xff]
    %v1844 = vld [vmem:[%s1819 + $0xc0] sm:$0xff]
    %v1845 = vld [vmem:[%s1819 + $0xc8] sm:$0xff]
    %v1846 = vld [vmem:[%s1819 + $0xd0] sm:$0xff]
    %v1847 = vld [vmem:[%s1819 + $0xd8] sm:$0xff]
    %v1848 = vld [vmem:[%s1819 + $0xe0] sm:$0xff]
    %v1849 = vld [vmem:[%s1819 + $0xe8] sm:$0xff]
    %v1850 = vld [vmem:[%s1819 + $0xf0] sm:$0xff]
    %v1851 = vld [vmem:[%s1819 + $0xf8] sm:$0xff]
    %v1852 = vld [vmem:[%s1819 + $0x100] sm:$0xff]
    %v1853 = vld [vmem:[%s1819 + $0x108] sm:$0xff]
    %v1854 = vld [vmem:[%s1819 + $0x110] sm:$0xff]
    %v1855 = vld [vmem:[%s1819 + $0x118] sm:$0xff]
    %v1856 = vld [vmem:[%s1819 + $0x120] sm:$0xff]
    %v1857 = vld [vmem:[%s1819 + $0x128] sm:$0xff]
    %v1858 = vld [vmem:[%s1819 + $0x130] sm:$0xff]
    %v1859 = vld [vmem:[%s1819 + $0x138] sm:$0xff]
    %v1860 = vld [vmem:[%s1819 + $0x140] sm:$0xff]
    %v1861 = vld [vmem:[%s1819 + $0x148] sm:$0xff]
    %v1862 = vld [vmem:[%s1819 + $0x150] sm:$0xff]
    %v1863 = vld [vmem:[%s1819 + $0x158] sm:$0xff]
    %1864 = vmatpush.msra.mxu0 %v1850
    %1865 = vmatpush.msra.mxu0 %v1848
    %1866 = vmatpush.msra.mxu0 %v1846
    %1867 = vmatpush.msra.mxu0 %v1844
    %1868 = vmatpush.msra.mxu0 %v1842
    %1869 = vmatpush.msra.mxu0 %v1840
    %1870 = vmatpush.msra.mxu0 %v1838
    %1871 = vmatpush.msra.mxu0 %v1836
    %1872 = vmatpush.msra.mxu0 %v1834
    %1873 = vmatpush.msra.mxu0 %v1832
    %1874 = vmatpush.msra.mxu0 %v1830
    %1875 = vmatpush.msra.mxu0 %v1828
    %1876 = vmatpush.msra.mxu0 %v1826
    %1877 = vmatpush.msra.mxu0 %v1824
    %1878 = vmatpush.msra.mxu0 %v1822
    %1879 = vmatpush.msra.mxu0 %v1820
    %1880 = vmatmul.f32.gmra.mxu0 %v1251
    %v1881 = vpop.f32.mrf.mxu0
    %v1882 = vadd.f32 0.0, %v1881
    %1883 = vmatmul.f32.gmra.mxu0 %v1253
    %v1884 = vpop.f32.mrf.mxu0
    %v1885 = vadd.f32 0.0, %v1884
    %1886 = vmatmul.f32.gmra.mxu0 %v1255
    %v1887 = vpop.f32.mrf.mxu0
    %v1888 = vadd.f32 0.0, %v1887
    %1889 = vdwg.mxu0
    %1890 = vmatpush.msra.mxu0 0.0
    %1891 = vmatpush.msra.mxu0 0.0
    %1892 = vmatpush.msra.mxu0 0.0
    %1893 = vmatpush.msra.mxu0 0.0
    %1894 = vmatpush.msra.mxu0 0.0
    %1895 = vmatpush.msra.mxu0 0.0
    %1896 = vmatpush.msra.mxu0 0.0
    %1897 = vmatpush.msra.mxu0 0.0
    %1898 = vmatpush.msra.mxu0 0.0
    %1899 = vmatpush.msra.mxu0 0.0
    %1900 = vmatpush.msra.mxu0 %v1862
    %1901 = vmatpush.msra.mxu0 %v1860
    %1902 = vmatpush.msra.mxu0 %v1858
    %1903 = vmatpush.msra.mxu0 %v1856
    %1904 = vmatpush.msra.mxu0 %v1854
    %1905 = vmatpush.msra.mxu0 %v1852
    %1906 = vmatmul.f32.gmra.mxu0 %v1303
    %v1907 = vpop.f32.mrf.mxu0
    %v1908 = vadd.f32 %v1882, %v1907
    %1909 = vmatmul.f32.gmra.mxu0 %v1306
    %v1910 = vpop.f32.mrf.mxu0
    %v1911 = vadd.f32 %v1885, %v1910
    %1912 = vmatmul.f32.gmra.mxu0 %v1309
    %v1913 = vpop.f32.mrf.mxu0
    %v1914 = vadd.f32 %v1888, %v1913
    %1915 = vdwg.mxu0
    %1916 = vmatpush.msra.mxu0 %v1851
    %1917 = vmatpush.msra.mxu0 %v1849
    %1918 = vmatpush.msra.mxu0 %v1847
    %1919 = vmatpush.msra.mxu0 %v1845
    %1920 = vmatpush.msra.mxu0 %v1843
    %1921 = vmatpush.msra.mxu0 %v1841
    %1922 = vmatpush.msra.mxu0 %v1839
    %1923 = vmatpush.msra.mxu0 %v1837
    %1924 = vmatpush.msra.mxu0 %v1835
    %1925 = vmatpush.msra.mxu0 %v1833
    %1926 = vmatpush.msra.mxu0 %v1831
    %1927 = vmatpush.msra.mxu0 %v1829
    %1928 = vmatpush.msra.mxu0 %v1827
    %1929 = vmatpush.msra.mxu0 %v1825
    %1930 = vmatpush.msra.mxu0 %v1823
    %1931 = vmatpush.msra.mxu0 %v1821
    %1932 = vmatmul.f32.gmra.mxu0 %v1251
    %v1933 = vpop.f32.mrf.mxu0
    %v1934 = vadd.f32 0.0, %v1933
    %1935 = vmatmul.f32.gmra.mxu0 %v1253
    %v1936 = vpop.f32.mrf.mxu0
    %v1937 = vadd.f32 0.0, %v1936
    %1938 = vmatmul.f32.gmra.mxu0 %v1255
    %v1939 = vpop.f32.mrf.mxu0
    %v1940 = vadd.f32 0.0, %v1939
    %1941 = vdwg.mxu0
    %1942 = vmatpush.msra.mxu0 0.0
    %1943 = vmatpush.msra.mxu0 0.0
    %1944 = vmatpush.msra.mxu0 0.0
    %1945 = vmatpush.msra.mxu0 0.0
    %1946 = vmatpush.msra.mxu0 0.0
    %1947 = vmatpush.msra.mxu0 0.0
    %1948 = vmatpush.msra.mxu0 0.0
    %1949 = vmatpush.msra.mxu0 0.0
    %1950 = vmatpush.msra.mxu0 0.0
    %1951 = vmatpush.msra.mxu0 0.0
    %1952 = vmatpush.msra.mxu0 %v1863
    %1953 = vmatpush.msra.mxu0 %v1861
    %1954 = vmatpush.msra.mxu0 %v1859
    %1955 = vmatpush.msra.mxu0 %v1857
    %1956 = vmatpush.msra.mxu0 %v1855
    %1957 = vmatpush.msra.mxu0 %v1853
    %1958 = vmatmul.f32.gmra.mxu0 %v1303
    %v1959 = vpop.f32.mrf.mxu0
    %v1960 = vadd.f32 %v1934, %v1959
    %1961 = vmatmul.f32.gmra.mxu0 %v1306
    %v1962 = vpop.f32.mrf.mxu0
    %v1963 = vadd.f32 %v1937, %v1962
    %1964 = vmatmul.f32.gmra.mxu0 %v1309
    %v1965 = vpop.f32.mrf.mxu0
    %v1966 = vadd.f32 %v1940, %v1965
    %1967 = vdwg.mxu0
    %s1968 = scalar_lea.vmem [#allocation15], 112
    %v1969 = vld [vmem:[%s1968] sm:$0xff]
    %v1970 = vld [vmem:[%s1968 + $0x8] sm:$0xff]
    %v1971 = vld [vmem:[%s1968 + $0x10] sm:$0xff]
    %v1972 = vld [vmem:[%s1968 + $0x18] sm:$0xff]
    %v1973 = vld [vmem:[%s1968 + $0x20] sm:$0xff]
    %v1974 = vld [vmem:[%s1968 + $0x28] sm:$0xff]
    %v1975 = vld [vmem:[%s1968 + $0x30] sm:$0xf]
    %v1977 = vsel %vm1422, %v1969, 0
    %v1980 = vsel %vm1422, %v1970, 0
    %v1983 = vsel %vm1422, %v1971, 0
    %v1986 = vsel %vm1422, %v1972, 0
    %v1989 = vsel %vm1422, %v1973, 0
    %v1992 = vsel %vm1422, %v1974, 0
    %v1995 = vsel %vm1422, %v1975, 0
    %v1998 = vsel %vm955, %v1914, 0
    %v2001 = vsel %vm955, %v1966, 0
    %2003 = vmatpush.msra.mxu0 0.0
    %2004 = vmatpush.msra.mxu0 0.0
    %2005 = vmatpush.msra.mxu0 0.0
    %2006 = vmatpush.msra.mxu0 0.0
    %2007 = vmatpush.msra.mxu0 0.0
    %2008 = vmatpush.msra.mxu0 0.0
    %2009 = vmatpush.msra.mxu0 0.0
    %2010 = vmatpush.msra.mxu0 0.0
    %2011 = vmatpush.msra.mxu0 0.0
    %2012 = vmatpush.msra.mxu0 0.0
    %2013 = vmatpush.msra.mxu0 0.0
    %2014 = vmatpush.msra.mxu0 0.0
    %2015 = vmatpush.msra.mxu0 0.0
    %2016 = vmatpush.msra.mxu0 %v1998
    %2017 = vmatpush.msra.mxu0 %v1911
    %2018 = vmatpush.msra.mxu0 %v1908
    %2019 = vmatmul.f32.gmra.mxu0 %v1977
    %v2020 = vpop.f32.mrf.mxu0
    %v2021 = vadd.f32 0.0, %v2020
    %2022 = vmatmul.f32.gmra.mxu0 %v1980
    %v2023 = vpop.f32.mrf.mxu0
    %v2024 = vadd.f32 0.0, %v2023
    %2025 = vmatmul.f32.gmra.mxu0 %v1983
    %v2026 = vpop.f32.mrf.mxu0
    %v2027 = vadd.f32 0.0, %v2026
    %2028 = vmatmul.f32.gmra.mxu0 %v1986
    %v2029 = vpop.f32.mrf.mxu0
    %v2030 = vadd.f32 0.0, %v2029
    %2031 = vmatmul.f32.gmra.mxu0 %v1989
    %v2032 = vpop.f32.mrf.mxu0
    %v2033 = vadd.f32 0.0, %v2032
    %2034 = vmatmul.f32.gmra.mxu0 %v1992
    %v2035 = vpop.f32.mrf.mxu0
    %v2036 = vadd.f32 0.0, %v2035
    %2037 = vmatmul.f32.gmra.mxu0 %v1995
    %v2038 = vpop.f32.mrf.mxu0
    %v2039 = vadd.f32 0.0, %v2038
    %2040 = vdwg.mxu0
    %2041 = vmatpush.msra.mxu0 0.0
    %2042 = vmatpush.msra.mxu0 0.0
    %2043 = vmatpush.msra.mxu0 0.0
    %2044 = vmatpush.msra.mxu0 0.0
    %2045 = vmatpush.msra.mxu0 0.0
    %2046 = vmatpush.msra.mxu0 0.0
    %2047 = vmatpush.msra.mxu0 0.0
    %2048 = vmatpush.msra.mxu0 0.0
    %2049 = vmatpush.msra.mxu0 0.0
    %2050 = vmatpush.msra.mxu0 0.0
    %2051 = vmatpush.msra.mxu0 0.0
    %2052 = vmatpush.msra.mxu0 0.0
    %2053 = vmatpush.msra.mxu0 0.0
    %2054 = vmatpush.msra.mxu0 %v2001
    %2055 = vmatpush.msra.mxu0 %v1963
    %2056 = vmatpush.msra.mxu0 %v1960
    %2057 = vmatmul.f32.gmra.mxu0 %v1977
    %v2058 = vpop.f32.mrf.mxu0
    %v2059 = vadd.f32 0.0, %v2058
    %2060 = vmatmul.f32.gmra.mxu0 %v1980
    %v2061 = vpop.f32.mrf.mxu0
    %v2062 = vadd.f32 0.0, %v2061
    %2063 = vmatmul.f32.gmra.mxu0 %v1983
    %v2064 = vpop.f32.mrf.mxu0
    %v2065 = vadd.f32 0.0, %v2064
    %2066 = vmatmul.f32.gmra.mxu0 %v1986
    %v2067 = vpop.f32.mrf.mxu0
    %v2068 = vadd.f32 0.0, %v2067
    %2069 = vmatmul.f32.gmra.mxu0 %v1989
    %v2070 = vpop.f32.mrf.mxu0
    %v2071 = vadd.f32 0.0, %v2070
    %2072 = vmatmul.f32.gmra.mxu0 %v1992
    %v2073 = vpop.f32.mrf.mxu0
    %v2074 = vadd.f32 0.0, %v2073
    %2075 = vmatmul.f32.gmra.mxu0 %v1995
    %v2076 = vpop.f32.mrf.mxu0
    %v2077 = vadd.f32 0.0, %v2076
    %2078 = vdwg.mxu0
    %v2079 = vadd.f32 %v1805, %v2021
    %v2080 = vadd.f32 %v1806, %v2059
    %v2081 = vadd.f32 %v1807, %v2024
    %v2082 = vadd.f32 %v1808, %v2062
    %v2083 = vadd.f32 %v1809, %v2027
    %v2084 = vadd.f32 %v1810, %v2065
    %v2085 = vadd.f32 %v1811, %v2030
    %v2086 = vadd.f32 %v1812, %v2068
    %v2087 = vadd.f32 %v1813, %v2033
    %v2088 = vadd.f32 %v1814, %v2071
    %v2089 = vadd.f32 %v1815, %v2036
    %v2090 = vadd.f32 %v1816, %v2074
    %v2091 = vadd.f32 %v1817, %v2039
    %v2092 = vadd.f32 %v1818, %v2077
    %s2093 = scalar_lea.vmem [#allocation13], 1056
    %v2094 = vld [vmem:[%s2093] sm:$0xff]
    %v2095 = vld [vmem:[%s2093 + $0x8] sm:$0xff]
    %v2096 = vld [vmem:[%s2093 + $0x10] sm:$0xff]
    %v2097 = vld [vmem:[%s2093 + $0x18] sm:$0xff]
    %v2098 = vld [vmem:[%s2093 + $0x20] sm:$0xff]
    %v2099 = vld [vmem:[%s2093 + $0x28] sm:$0xff]
    %v2100 = vld [vmem:[%s2093 + $0x30] sm:$0xff]
    %v2101 = vld [vmem:[%s2093 + $0x38] sm:$0xff]
    %v2102 = vld [vmem:[%s2093 + $0x40] sm:$0xff]
    %v2103 = vld [vmem:[%s2093 + $0x48] sm:$0xff]
    %v2104 = vld [vmem:[%s2093 + $0x50] sm:$0xff]
    %v2105 = vld [vmem:[%s2093 + $0x58] sm:$0xff]
    %v2106 = vld [vmem:[%s2093 + $0x60] sm:$0xff]
    %v2107 = vld [vmem:[%s2093 + $0x68] sm:$0xff]
    %v2108 = vld [vmem:[%s2093 + $0x70] sm:$0xff]
    %v2109 = vld [vmem:[%s2093 + $0x78] sm:$0xff]
    %v2110 = vld [vmem:[%s2093 + $0x80] sm:$0xff]
    %v2111 = vld [vmem:[%s2093 + $0x88] sm:$0xff]
    %v2112 = vld [vmem:[%s2093 + $0x90] sm:$0xff]
    %v2113 = vld [vmem:[%s2093 + $0x98] sm:$0xff]
    %v2114 = vld [vmem:[%s2093 + $0xa0] sm:$0xff]
    %v2115 = vld [vmem:[%s2093 + $0xa8] sm:$0xff]
    %v2116 = vld [vmem:[%s2093 + $0xb0] sm:$0xff]
    %v2117 = vld [vmem:[%s2093 + $0xb8] sm:$0xff]
    %v2118 = vld [vmem:[%s2093 + $0xc0] sm:$0xff]
    %v2119 = vld [vmem:[%s2093 + $0xc8] sm:$0xff]
    %v2120 = vld [vmem:[%s2093 + $0xd0] sm:$0xff]
    %v2121 = vld [vmem:[%s2093 + $0xd8] sm:$0xff]
    %v2122 = vld [vmem:[%s2093 + $0xe0] sm:$0xff]
    %v2123 = vld [vmem:[%s2093 + $0xe8] sm:$0xff]
    %v2124 = vld [vmem:[%s2093 + $0xf0] sm:$0xff]
    %v2125 = vld [vmem:[%s2093 + $0xf8] sm:$0xff]
    %v2126 = vld [vmem:[%s2093 + $0x100] sm:$0xff]
    %v2127 = vld [vmem:[%s2093 + $0x108] sm:$0xff]
    %v2128 = vld [vmem:[%s2093 + $0x110] sm:$0xff]
    %v2129 = vld [vmem:[%s2093 + $0x118] sm:$0xff]
    %v2130 = vld [vmem:[%s2093 + $0x120] sm:$0xff]
    %v2131 = vld [vmem:[%s2093 + $0x128] sm:$0xff]
    %v2132 = vld [vmem:[%s2093 + $0x130] sm:$0xff]
    %v2133 = vld [vmem:[%s2093 + $0x138] sm:$0xff]
    %v2134 = vld [vmem:[%s2093 + $0x140] sm:$0xff]
    %v2135 = vld [vmem:[%s2093 + $0x148] sm:$0xff]
    %v2136 = vld [vmem:[%s2093 + $0x150] sm:$0xff]
    %v2137 = vld [vmem:[%s2093 + $0x158] sm:$0xff]
    %2138 = vmatpush.msra.mxu0 %v2124
    %2139 = vmatpush.msra.mxu0 %v2122
    %2140 = vmatpush.msra.mxu0 %v2120
    %2141 = vmatpush.msra.mxu0 %v2118
    %2142 = vmatpush.msra.mxu0 %v2116
    %2143 = vmatpush.msra.mxu0 %v2114
    %2144 = vmatpush.msra.mxu0 %v2112
    %2145 = vmatpush.msra.mxu0 %v2110
    %2146 = vmatpush.msra.mxu0 %v2108
    %2147 = vmatpush.msra.mxu0 %v2106
    %2148 = vmatpush.msra.mxu0 %v2104
    %2149 = vmatpush.msra.mxu0 %v2102
    %2150 = vmatpush.msra.mxu0 %v2100
    %2151 = vmatpush.msra.mxu0 %v2098
    %2152 = vmatpush.msra.mxu0 %v2096
    %2153 = vmatpush.msra.mxu0 %v2094
    %2154 = vmatmul.f32.gmra.mxu0 %v1251
    %v2155 = vpop.f32.mrf.mxu0
    %v2156 = vadd.f32 0.0, %v2155
    %2157 = vmatmul.f32.gmra.mxu0 %v1253
    %v2158 = vpop.f32.mrf.mxu0
    %v2159 = vadd.f32 0.0, %v2158
    %2160 = vmatmul.f32.gmra.mxu0 %v1255
    %v2161 = vpop.f32.mrf.mxu0
    %v2162 = vadd.f32 0.0, %v2161
    %2163 = vdwg.mxu0
    %2164 = vmatpush.msra.mxu0 0.0
    %2165 = vmatpush.msra.mxu0 0.0
    %2166 = vmatpush.msra.mxu0 0.0
    %2167 = vmatpush.msra.mxu0 0.0
    %2168 = vmatpush.msra.mxu0 0.0
    %2169 = vmatpush.msra.mxu0 0.0
    %2170 = vmatpush.msra.mxu0 0.0
    %2171 = vmatpush.msra.mxu0 0.0
    %2172 = vmatpush.msra.mxu0 0.0
    %2173 = vmatpush.msra.mxu0 0.0
    %2174 = vmatpush.msra.mxu0 %v2136
    %2175 = vmatpush.msra.mxu0 %v2134
    %2176 = vmatpush.msra.mxu0 %v2132
    %2177 = vmatpush.msra.mxu0 %v2130
    %2178 = vmatpush.msra.mxu0 %v2128
    %2179 = vmatpush.msra.mxu0 %v2126
    %2180 = vmatmul.f32.gmra.mxu0 %v1303
    %v2181 = vpop.f32.mrf.mxu0
    %v2182 = vadd.f32 %v2156, %v2181
    %2183 = vmatmul.f32.gmra.mxu0 %v1306
    %v2184 = vpop.f32.mrf.mxu0
    %v2185 = vadd.f32 %v2159, %v2184
    %2186 = vmatmul.f32.gmra.mxu0 %v1309
    %v2187 = vpop.f32.mrf.mxu0
    %v2188 = vadd.f32 %v2162, %v2187
    %2189 = vdwg.mxu0
    %2190 = vmatpush.msra.mxu0 %v2125
    %2191 = vmatpush.msra.mxu0 %v2123
    %2192 = vmatpush.msra.mxu0 %v2121
    %2193 = vmatpush.msra.mxu0 %v2119
    %2194 = vmatpush.msra.mxu0 %v2117
    %2195 = vmatpush.msra.mxu0 %v2115
    %2196 = vmatpush.msra.mxu0 %v2113
    %2197 = vmatpush.msra.mxu0 %v2111
    %2198 = vmatpush.msra.mxu0 %v2109
    %2199 = vmatpush.msra.mxu0 %v2107
    %2200 = vmatpush.msra.mxu0 %v2105
    %2201 = vmatpush.msra.mxu0 %v2103
    %2202 = vmatpush.msra.mxu0 %v2101
    %2203 = vmatpush.msra.mxu0 %v2099
    %2204 = vmatpush.msra.mxu0 %v2097
    %2205 = vmatpush.msra.mxu0 %v2095
    %2206 = vmatmul.f32.gmra.mxu0 %v1251
    %v2207 = vpop.f32.mrf.mxu0
    %v2208 = vadd.f32 0.0, %v2207
    %2209 = vmatmul.f32.gmra.mxu0 %v1253
    %v2210 = vpop.f32.mrf.mxu0
    %v2211 = vadd.f32 0.0, %v2210
    %2212 = vmatmul.f32.gmra.mxu0 %v1255
    %v2213 = vpop.f32.mrf.mxu0
    %v2214 = vadd.f32 0.0, %v2213
    %2215 = vdwg.mxu0
    %2216 = vmatpush.msra.mxu0 0.0
    %2217 = vmatpush.msra.mxu0 0.0
    %2218 = vmatpush.msra.mxu0 0.0
    %2219 = vmatpush.msra.mxu0 0.0
    %2220 = vmatpush.msra.mxu0 0.0
    %2221 = vmatpush.msra.mxu0 0.0
    %2222 = vmatpush.msra.mxu0 0.0
    %2223 = vmatpush.msra.mxu0 0.0
    %2224 = vmatpush.msra.mxu0 0.0
    %2225 = vmatpush.msra.mxu0 0.0
    %2226 = vmatpush.msra.mxu0 %v2137
    %2227 = vmatpush.msra.mxu0 %v2135
    %2228 = vmatpush.msra.mxu0 %v2133
    %2229 = vmatpush.msra.mxu0 %v2131
    %2230 = vmatpush.msra.mxu0 %v2129
    %2231 = vmatpush.msra.mxu0 %v2127
    %2232 = vmatmul.f32.gmra.mxu0 %v1303
    %v2233 = vpop.f32.mrf.mxu0
    %v2234 = vadd.f32 %v2208, %v2233
    %2235 = vmatmul.f32.gmra.mxu0 %v1306
    %v2236 = vpop.f32.mrf.mxu0
    %v2237 = vadd.f32 %v2211, %v2236
    %2238 = vmatmul.f32.gmra.mxu0 %v1309
    %v2239 = vpop.f32.mrf.mxu0
    %v2240 = vadd.f32 %v2214, %v2239
    %2241 = vdwg.mxu0
    %s2242 = scalar_lea.vmem [#allocation15], 168
    %v2243 = vld [vmem:[%s2242] sm:$0xff]
    %v2244 = vld [vmem:[%s2242 + $0x8] sm:$0xff]
    %v2245 = vld [vmem:[%s2242 + $0x10] sm:$0xff]
    %v2246 = vld [vmem:[%s2242 + $0x18] sm:$0xff]
    %v2247 = vld [vmem:[%s2242 + $0x20] sm:$0xff]
    %v2248 = vld [vmem:[%s2242 + $0x28] sm:$0xff]
    %v2249 = vld [vmem:[%s2242 + $0x30] sm:$0xf]
    %v2251 = vsel %vm1422, %v2243, 0
    %v2254 = vsel %vm1422, %v2244, 0
    %v2257 = vsel %vm1422, %v2245, 0
    %v2260 = vsel %vm1422, %v2246, 0
    %v2263 = vsel %vm1422, %v2247, 0
    %v2266 = vsel %vm1422, %v2248, 0
    %v2269 = vsel %vm1422, %v2249, 0
    %v2272 = vsel %vm955, %v2188, 0
    %v2275 = vsel %vm955, %v2240, 0
    %2277 = vmatpush.msra.mxu0 0.0
    %2278 = vmatpush.msra.mxu0 0.0
    %2279 = vmatpush.msra.mxu0 0.0
    %2280 = vmatpush.msra.mxu0 0.0
    %2281 = vmatpush.msra.mxu0 0.0
    %2282 = vmatpush.msra.mxu0 0.0
    %2283 = vmatpush.msra.mxu0 0.0
    %2284 = vmatpush.msra.mxu0 0.0
    %2285 = vmatpush.msra.mxu0 0.0
    %2286 = vmatpush.msra.mxu0 0.0
    %2287 = vmatpush.msra.mxu0 0.0
    %2288 = vmatpush.msra.mxu0 0.0
    %2289 = vmatpush.msra.mxu0 0.0
    %2290 = vmatpush.msra.mxu0 %v2272
    %2291 = vmatpush.msra.mxu0 %v2185
    %2292 = vmatpush.msra.mxu0 %v2182
    %2293 = vmatmul.f32.gmra.mxu0 %v2251
    %v2294 = vpop.f32.mrf.mxu0
    %v2295 = vadd.f32 0.0, %v2294
    %2296 = vmatmul.f32.gmra.mxu0 %v2254
    %v2297 = vpop.f32.mrf.mxu0
    %v2298 = vadd.f32 0.0, %v2297
    %2299 = vmatmul.f32.gmra.mxu0 %v2257
    %v2300 = vpop.f32.mrf.mxu0
    %v2301 = vadd.f32 0.0, %v2300
    %2302 = vmatmul.f32.gmra.mxu0 %v2260
    %v2303 = vpop.f32.mrf.mxu0
    %v2304 = vadd.f32 0.0, %v2303
    %2305 = vmatmul.f32.gmra.mxu0 %v2263
    %v2306 = vpop.f32.mrf.mxu0
    %v2307 = vadd.f32 0.0, %v2306
    %2308 = vmatmul.f32.gmra.mxu0 %v2266
    %v2309 = vpop.f32.mrf.mxu0
    %v2310 = vadd.f32 0.0, %v2309
    %2311 = vmatmul.f32.gmra.mxu0 %v2269
    %v2312 = vpop.f32.mrf.mxu0
    %v2313 = vadd.f32 0.0, %v2312
    %2314 = vdwg.mxu0
    %2315 = vmatpush.msra.mxu0 0.0
    %2316 = vmatpush.msra.mxu0 0.0
    %2317 = vmatpush.msra.mxu0 0.0
    %2318 = vmatpush.msra.mxu0 0.0
    %2319 = vmatpush.msra.mxu0 0.0
    %2320 = vmatpush.msra.mxu0 0.0
    %2321 = vmatpush.msra.mxu0 0.0
    %2322 = vmatpush.msra.mxu0 0.0
    %2323 = vmatpush.msra.mxu0 0.0
    %2324 = vmatpush.msra.mxu0 0.0
    %2325 = vmatpush.msra.mxu0 0.0
    %2326 = vmatpush.msra.mxu0 0.0
    %2327 = vmatpush.msra.mxu0 0.0
    %2328 = vmatpush.msra.mxu0 %v2275
    %2329 = vmatpush.msra.mxu0 %v2237
    %2330 = vmatpush.msra.mxu0 %v2234
    %2331 = vmatmul.f32.gmra.mxu0 %v2251
    %v2332 = vpop.f32.mrf.mxu0
    %v2333 = vadd.f32 0.0, %v2332
    %2334 = vmatmul.f32.gmra.mxu0 %v2254
    %v2335 = vpop.f32.mrf.mxu0
    %v2336 = vadd.f32 0.0, %v2335
    %2337 = vmatmul.f32.gmra.mxu0 %v2257
    %v2338 = vpop.f32.mrf.mxu0
    %v2339 = vadd.f32 0.0, %v2338
    %2340 = vmatmul.f32.gmra.mxu0 %v2260
    %v2341 = vpop.f32.mrf.mxu0
    %v2342 = vadd.f32 0.0, %v2341
    %2343 = vmatmul.f32.gmra.mxu0 %v2263
    %v2344 = vpop.f32.mrf.mxu0
    %v2345 = vadd.f32 0.0, %v2344
    %2346 = vmatmul.f32.gmra.mxu0 %v2266
    %v2347 = vpop.f32.mrf.mxu0
    %v2348 = vadd.f32 0.0, %v2347
    %2349 = vmatmul.f32.gmra.mxu0 %v2269
    %v2350 = vpop.f32.mrf.mxu0
    %v2351 = vadd.f32 0.0, %v2350
    %2352 = vdwg.mxu0
    %v2353 = vadd.f32 %v2079, %v2295
    %v2354 = vadd.f32 %v2080, %v2333
    %v2355 = vadd.f32 %v2081, %v2298
    %v2356 = vadd.f32 %v2082, %v2336
    %v2357 = vadd.f32 %v2083, %v2301
    %v2358 = vadd.f32 %v2084, %v2339
    %v2359 = vadd.f32 %v2085, %v2304
    %v2360 = vadd.f32 %v2086, %v2342
    %v2361 = vadd.f32 %v2087, %v2307
    %v2362 = vadd.f32 %v2088, %v2345
    %v2363 = vadd.f32 %v2089, %v2310
    %v2364 = vadd.f32 %v2090, %v2348
    %v2365 = vadd.f32 %v2091, %v2313
    %v2366 = vadd.f32 %v2092, %v2351
    %s2367 = scalar_lea.vmem [#allocation13], 1408
    %v2368 = vld [vmem:[%s2367] sm:$0xff]
    %v2369 = vld [vmem:[%s2367 + $0x8] sm:$0xff]
    %v2370 = vld [vmem:[%s2367 + $0x10] sm:$0xff]
    %v2371 = vld [vmem:[%s2367 + $0x18] sm:$0xff]
    %v2372 = vld [vmem:[%s2367 + $0x20] sm:$0xff]
    %v2373 = vld [vmem:[%s2367 + $0x28] sm:$0xff]
    %v2374 = vld [vmem:[%s2367 + $0x30] sm:$0xff]
    %v2375 = vld [vmem:[%s2367 + $0x38] sm:$0xff]
    %v2376 = vld [vmem:[%s2367 + $0x40] sm:$0xff]
    %v2377 = vld [vmem:[%s2367 + $0x48] sm:$0xff]
    %v2378 = vld [vmem:[%s2367 + $0x50] sm:$0xff]
    %v2379 = vld [vmem:[%s2367 + $0x58] sm:$0xff]
    %v2380 = vld [vmem:[%s2367 + $0x60] sm:$0xff]
    %v2381 = vld [vmem:[%s2367 + $0x68] sm:$0xff]
    %v2382 = vld [vmem:[%s2367 + $0x70] sm:$0xff]
    %v2383 = vld [vmem:[%s2367 + $0x78] sm:$0xff]
    %v2384 = vld [vmem:[%s2367 + $0x80] sm:$0xff]
    %v2385 = vld [vmem:[%s2367 + $0x88] sm:$0xff]
    %v2386 = vld [vmem:[%s2367 + $0x90] sm:$0xff]
    %v2387 = vld [vmem:[%s2367 + $0x98] sm:$0xff]
    %v2388 = vld [vmem:[%s2367 + $0xa0] sm:$0xff]
    %v2389 = vld [vmem:[%s2367 + $0xa8] sm:$0xff]
    %v2390 = vld [vmem:[%s2367 + $0xb0] sm:$0xff]
    %v2391 = vld [vmem:[%s2367 + $0xb8] sm:$0xff]
    %v2392 = vld [vmem:[%s2367 + $0xc0] sm:$0xff]
    %v2393 = vld [vmem:[%s2367 + $0xc8] sm:$0xff]
    %v2394 = vld [vmem:[%s2367 + $0xd0] sm:$0xff]
    %v2395 = vld [vmem:[%s2367 + $0xd8] sm:$0xff]
    %v2396 = vld [vmem:[%s2367 + $0xe0] sm:$0xff]
    %v2397 = vld [vmem:[%s2367 + $0xe8] sm:$0xff]
    %v2398 = vld [vmem:[%s2367 + $0xf0] sm:$0xff]
    %v2399 = vld [vmem:[%s2367 + $0xf8] sm:$0xff]
    %v2400 = vld [vmem:[%s2367 + $0x100] sm:$0xff]
    %v2401 = vld [vmem:[%s2367 + $0x108] sm:$0xff]
    %v2402 = vld [vmem:[%s2367 + $0x110] sm:$0xff]
    %v2403 = vld [vmem:[%s2367 + $0x118] sm:$0xff]
    %v2404 = vld [vmem:[%s2367 + $0x120] sm:$0xff]
    %v2405 = vld [vmem:[%s2367 + $0x128] sm:$0xff]
    %v2406 = vld [vmem:[%s2367 + $0x130] sm:$0xff]
    %v2407 = vld [vmem:[%s2367 + $0x138] sm:$0xff]
    %v2408 = vld [vmem:[%s2367 + $0x140] sm:$0xff]
    %v2409 = vld [vmem:[%s2367 + $0x148] sm:$0xff]
    %v2410 = vld [vmem:[%s2367 + $0x150] sm:$0xff]
    %v2411 = vld [vmem:[%s2367 + $0x158] sm:$0xff]
    %2412 = vmatpush.msra.mxu0 %v2398
    %2413 = vmatpush.msra.mxu0 %v2396
    %2414 = vmatpush.msra.mxu0 %v2394
    %2415 = vmatpush.msra.mxu0 %v2392
    %2416 = vmatpush.msra.mxu0 %v2390
    %2417 = vmatpush.msra.mxu0 %v2388
    %2418 = vmatpush.msra.mxu0 %v2386
    %2419 = vmatpush.msra.mxu0 %v2384
    %2420 = vmatpush.msra.mxu0 %v2382
    %2421 = vmatpush.msra.mxu0 %v2380
    %2422 = vmatpush.msra.mxu0 %v2378
    %2423 = vmatpush.msra.mxu0 %v2376
    %2424 = vmatpush.msra.mxu0 %v2374
    %2425 = vmatpush.msra.mxu0 %v2372
    %2426 = vmatpush.msra.mxu0 %v2370
    %2427 = vmatpush.msra.mxu0 %v2368
    %2428 = vmatmul.f32.gmra.mxu0 %v1251
    %v2429 = vpop.f32.mrf.mxu0
    %v2430 = vadd.f32 0.0, %v2429
    %2431 = vmatmul.f32.gmra.mxu0 %v1253
    %v2432 = vpop.f32.mrf.mxu0
    %v2433 = vadd.f32 0.0, %v2432
    %2434 = vmatmul.f32.gmra.mxu0 %v1255
    %v2435 = vpop.f32.mrf.mxu0
    %v2436 = vadd.f32 0.0, %v2435
    %2437 = vdwg.mxu0
    %2438 = vmatpush.msra.mxu0 0.0
    %2439 = vmatpush.msra.mxu0 0.0
    %2440 = vmatpush.msra.mxu0 0.0
    %2441 = vmatpush.msra.mxu0 0.0
    %2442 = vmatpush.msra.mxu0 0.0
    %2443 = vmatpush.msra.mxu0 0.0
    %2444 = vmatpush.msra.mxu0 0.0
    %2445 = vmatpush.msra.mxu0 0.0
    %2446 = vmatpush.msra.mxu0 0.0
    %2447 = vmatpush.msra.mxu0 0.0
    %2448 = vmatpush.msra.mxu0 %v2410
    %2449 = vmatpush.msra.mxu0 %v2408
    %2450 = vmatpush.msra.mxu0 %v2406
    %2451 = vmatpush.msra.mxu0 %v2404
    %2452 = vmatpush.msra.mxu0 %v2402
    %2453 = vmatpush.msra.mxu0 %v2400
    %2454 = vmatmul.f32.gmra.mxu0 %v1303
    %v2455 = vpop.f32.mrf.mxu0
    %v2456 = vadd.f32 %v2430, %v2455
    %2457 = vmatmul.f32.gmra.mxu0 %v1306
    %v2458 = vpop.f32.mrf.mxu0
    %v2459 = vadd.f32 %v2433, %v2458
    %2460 = vmatmul.f32.gmra.mxu0 %v1309
    %v2461 = vpop.f32.mrf.mxu0
    %v2462 = vadd.f32 %v2436, %v2461
    %2463 = vdwg.mxu0
    %2464 = vmatpush.msra.mxu0 %v2399
    %2465 = vmatpush.msra.mxu0 %v2397
    %2466 = vmatpush.msra.mxu0 %v2395
    %2467 = vmatpush.msra.mxu0 %v2393
    %2468 = vmatpush.msra.mxu0 %v2391
    %2469 = vmatpush.msra.mxu0 %v2389
    %2470 = vmatpush.msra.mxu0 %v2387
    %2471 = vmatpush.msra.mxu0 %v2385
    %2472 = vmatpush.msra.mxu0 %v2383
    %2473 = vmatpush.msra.mxu0 %v2381
    %2474 = vmatpush.msra.mxu0 %v2379
    %2475 = vmatpush.msra.mxu0 %v2377
    %2476 = vmatpush.msra.mxu0 %v2375
    %2477 = vmatpush.msra.mxu0 %v2373
    %2478 = vmatpush.msra.mxu0 %v2371
    %2479 = vmatpush.msra.mxu0 %v2369
    %2480 = vmatmul.f32.gmra.mxu0 %v1251
    %v2481 = vpop.f32.mrf.mxu0
    %v2482 = vadd.f32 0.0, %v2481
    %2483 = vmatmul.f32.gmra.mxu0 %v1253
    %v2484 = vpop.f32.mrf.mxu0
    %v2485 = vadd.f32 0.0, %v2484
    %2486 = vmatmul.f32.gmra.mxu0 %v1255
    %v2487 = vpop.f32.mrf.mxu0
    %v2488 = vadd.f32 0.0, %v2487
    %2489 = vdwg.mxu0
    %2490 = vmatpush.msra.mxu0 0.0
    %2491 = vmatpush.msra.mxu0 0.0
    %2492 = vmatpush.msra.mxu0 0.0
    %2493 = vmatpush.msra.mxu0 0.0
    %2494 = vmatpush.msra.mxu0 0.0
    %2495 = vmatpush.msra.mxu0 0.0
    %2496 = vmatpush.msra.mxu0 0.0
    %2497 = vmatpush.msra.mxu0 0.0
    %2498 = vmatpush.msra.mxu0 0.0
    %2499 = vmatpush.msra.mxu0 0.0
    %2500 = vmatpush.msra.mxu0 %v2411
    %2501 = vmatpush.msra.mxu0 %v2409
    %2502 = vmatpush.msra.mxu0 %v2407
    %2503 = vmatpush.msra.mxu0 %v2405
    %2504 = vmatpush.msra.mxu0 %v2403
    %2505 = vmatpush.msra.mxu0 %v2401
    %2506 = vmatmul.f32.gmra.mxu0 %v1303
    %v2507 = vpop.f32.mrf.mxu0
    %v2508 = vadd.f32 %v2482, %v2507
    %2509 = vmatmul.f32.gmra.mxu0 %v1306
    %v2510 = vpop.f32.mrf.mxu0
    %v2511 = vadd.f32 %v2485, %v2510
    %2512 = vmatmul.f32.gmra.mxu0 %v1309
    %v2513 = vpop.f32.mrf.mxu0
    %v2514 = vadd.f32 %v2488, %v2513
    %2515 = vdwg.mxu0
    %s2516 = scalar_lea.vmem [#allocation15], 224
    %v2517 = vld [vmem:[%s2516] sm:$0xff]
    %v2518 = vld [vmem:[%s2516 + $0x8] sm:$0xff]
    %v2519 = vld [vmem:[%s2516 + $0x10] sm:$0xff]
    %v2520 = vld [vmem:[%s2516 + $0x18] sm:$0xff]
    %v2521 = vld [vmem:[%s2516 + $0x20] sm:$0xff]
    %v2522 = vld [vmem:[%s2516 + $0x28] sm:$0xff]
    %v2523 = vld [vmem:[%s2516 + $0x30] sm:$0xf]
    %v2525 = vsel %vm1422, %v2517, 0
    %v2528 = vsel %vm1422, %v2518, 0
    %v2531 = vsel %vm1422, %v2519, 0
    %v2534 = vsel %vm1422, %v2520, 0
    %v2537 = vsel %vm1422, %v2521, 0
    %v2540 = vsel %vm1422, %v2522, 0
    %v2543 = vsel %vm1422, %v2523, 0
    %v2546 = vsel %vm955, %v2462, 0
    %v2549 = vsel %vm955, %v2514, 0
    %2551 = vmatpush.msra.mxu0 0.0
    %2552 = vmatpush.msra.mxu0 0.0
    %2553 = vmatpush.msra.mxu0 0.0
    %2554 = vmatpush.msra.mxu0 0.0
    %2555 = vmatpush.msra.mxu0 0.0
    %2556 = vmatpush.msra.mxu0 0.0
    %2557 = vmatpush.msra.mxu0 0.0
    %2558 = vmatpush.msra.mxu0 0.0
    %2559 = vmatpush.msra.mxu0 0.0
    %2560 = vmatpush.msra.mxu0 0.0
    %2561 = vmatpush.msra.mxu0 0.0
    %2562 = vmatpush.msra.mxu0 0.0
    %2563 = vmatpush.msra.mxu0 0.0
    %2564 = vmatpush.msra.mxu0 %v2546
    %2565 = vmatpush.msra.mxu0 %v2459
    %2566 = vmatpush.msra.mxu0 %v2456
    %2567 = vmatmul.f32.gmra.mxu0 %v2525
    %v2568 = vpop.f32.mrf.mxu0
    %v2569 = vadd.f32 0.0, %v2568
    %2570 = vmatmul.f32.gmra.mxu0 %v2528
    %v2571 = vpop.f32.mrf.mxu0
    %v2572 = vadd.f32 0.0, %v2571
    %2573 = vmatmul.f32.gmra.mxu0 %v2531
    %v2574 = vpop.f32.mrf.mxu0
    %v2575 = vadd.f32 0.0, %v2574
    %2576 = vmatmul.f32.gmra.mxu0 %v2534
    %v2577 = vpop.f32.mrf.mxu0
    %v2578 = vadd.f32 0.0, %v2577
    %2579 = vmatmul.f32.gmra.mxu0 %v2537
    %v2580 = vpop.f32.mrf.mxu0
    %v2581 = vadd.f32 0.0, %v2580
    %2582 = vmatmul.f32.gmra.mxu0 %v2540
    %v2583 = vpop.f32.mrf.mxu0
    %v2584 = vadd.f32 0.0, %v2583
    %2585 = vmatmul.f32.gmra.mxu0 %v2543
    %v2586 = vpop.f32.mrf.mxu0
    %v2587 = vadd.f32 0.0, %v2586
    %2588 = vdwg.mxu0
    %2589 = vmatpush.msra.mxu0 0.0
    %2590 = vmatpush.msra.mxu0 0.0
    %2591 = vmatpush.msra.mxu0 0.0
    %2592 = vmatpush.msra.mxu0 0.0
    %2593 = vmatpush.msra.mxu0 0.0
    %2594 = vmatpush.msra.mxu0 0.0
    %2595 = vmatpush.msra.mxu0 0.0
    %2596 = vmatpush.msra.mxu0 0.0
    %2597 = vmatpush.msra.mxu0 0.0
    %2598 = vmatpush.msra.mxu0 0.0
    %2599 = vmatpush.msra.mxu0 0.0
    %2600 = vmatpush.msra.mxu0 0.0
    %2601 = vmatpush.msra.mxu0 0.0
    %2602 = vmatpush.msra.mxu0 %v2549
    %2603 = vmatpush.msra.mxu0 %v2511
    %2604 = vmatpush.msra.mxu0 %v2508
    %2605 = vmatmul.f32.gmra.mxu0 %v2525
    %v2606 = vpop.f32.mrf.mxu0
    %v2607 = vadd.f32 0.0, %v2606
    %2608 = vmatmul.f32.gmra.mxu0 %v2528
    %v2609 = vpop.f32.mrf.mxu0
    %v2610 = vadd.f32 0.0, %v2609
    %2611 = vmatmul.f32.gmra.mxu0 %v2531
    %v2612 = vpop.f32.mrf.mxu0
    %v2613 = vadd.f32 0.0, %v2612
    %2614 = vmatmul.f32.gmra.mxu0 %v2534
    %v2615 = vpop.f32.mrf.mxu0
    %v2616 = vadd.f32 0.0, %v2615
    %2617 = vmatmul.f32.gmra.mxu0 %v2537
    %v2618 = vpop.f32.mrf.mxu0
    %v2619 = vadd.f32 0.0, %v2618
    %2620 = vmatmul.f32.gmra.mxu0 %v2540
    %v2621 = vpop.f32.mrf.mxu0
    %v2622 = vadd.f32 0.0, %v2621
    %2623 = vmatmul.f32.gmra.mxu0 %v2543
    %v2624 = vpop.f32.mrf.mxu0
    %v2625 = vadd.f32 0.0, %v2624
    %2626 = vdwg.mxu0
    %v2627 = vadd.f32 %v2353, %v2569
    %v2628 = vadd.f32 %v2354, %v2607
    %v2629 = vadd.f32 %v2355, %v2572
    %v2630 = vadd.f32 %v2356, %v2610
    %v2631 = vadd.f32 %v2357, %v2575
    %v2632 = vadd.f32 %v2358, %v2613
    %v2633 = vadd.f32 %v2359, %v2578
    %v2634 = vadd.f32 %v2360, %v2616
    %v2635 = vadd.f32 %v2361, %v2581
    %v2636 = vadd.f32 %v2362, %v2619
    %v2637 = vadd.f32 %v2363, %v2584
    %v2638 = vadd.f32 %v2364, %v2622
    %v2639 = vadd.f32 %v2365, %v2587
    %v2640 = vadd.f32 %v2366, %v2625
    %s2641 = sld [smem:[#allocation21 + $0x1]]
    %v2642 = vadd.f32 %v2627, %v2629
    %v2643 = vadd.f32 %v2642, %v2631
    %v2644 = vadd.f32 %v2643, %v2633
    %v2645 = vadd.f32 %v2644, %v2635
    %v2646 = vadd.f32 %v2645, %v2637
    %vm2647 = vcmask 1043456
    %v2648 = vsel %vm2647, %v2639, 0.0
    %v2649 = vadd.f32 %v2646, %v2648
    %v2650 = vrot.slane %v2649, 4
    %v2651 = vadd.f32 %v2649, %v2650
    %v2652 = vrot.slane %v2651, 2
    %v2653 = vadd.f32 %v2651, %v2652
    %v2654 = vrot.slane %v2653, 1
    %v2655 = vadd.f32 %v2653, %v2654
    %vm2656 = vcmask 654336
    %v2657 = vsel %vm2656, %v2628, 0.0
    %v2658 = vsel %vm2656, %v2630, 0.0
    %v2659 = vadd.f32 %v2657, %v2658
    %v2660 = vsel %vm2656, %v2632, 0.0
    %v2661 = vadd.f32 %v2659, %v2660
    %v2662 = vsel %vm2656, %v2634, 0.0
    %v2663 = vadd.f32 %v2661, %v2662
    %v2664 = vsel %vm2656, %v2636, 0.0
    %v2665 = vadd.f32 %v2663, %v2664
    %v2666 = vsel %vm2656, %v2638, 0.0
    %v2667 = vadd.f32 %v2665, %v2666
    %vm2668 = vcmask 650240
    %v2669 = vsel %vm2668, %v2640, 0.0
    %v2670 = vadd.f32 %v2667, %v2669
    %v2671 = vrot.slane %v2670, 4
    %v2672 = vadd.f32 %v2670, %v2671
    %v2673 = vrot.slane %v2672, 2
    %v2674 = vadd.f32 %v2672, %v2673
    %v2675 = vrot.slane %v2674, 1
    %v2676 = vadd.f32 %v2674, %v2675
    %v2677 = vmul.f32 %v2627, %v2627
    %v2678 = vmul.f32 %v2628, %v2628
    %v2679 = vmul.f32 %v2629, %v2629
    %v2680 = vmul.f32 %v2630, %v2630
    %v2681 = vmul.f32 %v2631, %v2631
    %v2682 = vmul.f32 %v2632, %v2632
    %v2683 = vmul.f32 %v2633, %v2633
    %v2684 = vmul.f32 %v2634, %v2634
    %v2685 = vmul.f32 %v2635, %v2635
    %v2686 = vmul.f32 %v2636, %v2636
    %v2687 = vmul.f32 %v2637, %v2637
    %v2688 = vmul.f32 %v2638, %v2638
    %v2689 = vmul.f32 %v2639, %v2639
    %v2690 = vmul.f32 %v2640, %v2640
    %v2691 = vadd.f32 %v2677, %v2679
    %v2692 = vadd.f32 %v2691, %v2681
    %v2693 = vadd.f32 %v2692, %v2683
    %v2694 = vadd.f32 %v2693, %v2685
    %v2695 = vadd.f32 %v2694, %v2687
    %v2696 = vsel %vm2647, %v2689, 0.0
    %v2697 = vadd.f32 %v2695, %v2696
    %v2698 = vrot.slane %v2697, 4
    %v2699 = vadd.f32 %v2697, %v2698
    %v2700 = vrot.slane %v2699, 2
    %v2701 = vadd.f32 %v2699, %v2700
    %v2702 = vrot.slane %v2701, 1
    %v2703 = vadd.f32 %v2701, %v2702
    %v2704 = vsel %vm2656, %v2678, 0.0
    %v2705 = vsel %vm2656, %v2680, 0.0
    %v2706 = vadd.f32 %v2704, %v2705
    %v2707 = vsel %vm2656, %v2682, 0.0
    %v2708 = vadd.f32 %v2706, %v2707
    %v2709 = vsel %vm2656, %v2684, 0.0
    %v2710 = vadd.f32 %v2708, %v2709
    %v2711 = vsel %vm2656, %v2686, 0.0
    %v2712 = vadd.f32 %v2710, %v2711
    %v2713 = vsel %vm2656, %v2688, 0.0
    %v2714 = vadd.f32 %v2712, %v2713
    %v2715 = vsel %vm2668, %v2690, 0.0
    %v2716 = vadd.f32 %v2714, %v2715
    %v2717 = vrot.slane %v2716, 4
    %v2718 = vadd.f32 %v2716, %v2717
    %v2719 = vrot.slane %v2718, 2
    %v2720 = vadd.f32 %v2718, %v2719
    %v2721 = vrot.slane %v2720, 1
    %v2722 = vadd.f32 %v2720, %v2721
    %v2723 = vld [vmem:[#allocation16] sm:$0xff]
    %v2724 = vld [vmem:[#allocation16 + $0x8] sm:$0xff]
    %v2725 = vld [vmem:[#allocation16 + $0x10] sm:$0xff]
    %v2726 = vld [vmem:[#allocation16 + $0x18] sm:$0xff]
    %v2727 = vld [vmem:[#allocation16 + $0x20] sm:$0xff]
    %v2728 = vld [vmem:[#allocation16 + $0x28] sm:$0xff]
    %v2729 = vld [vmem:[#allocation16 + $0x30] sm:$0xff]
    %v2730 = vld [vmem:[#allocation16 + $0x38] sm:$0xff]
    %v2731 = vld [vmem:[#allocation16 + $0x40] sm:$0xff]
    %v2732 = vld [vmem:[#allocation16 + $0x48] sm:$0xff]
    %v2733 = vld [vmem:[#allocation16 + $0x50] sm:$0xff]
    %v2734 = vld [vmem:[#allocation16 + $0x58] sm:$0xff]
    %v2735 = vld [vmem:[#allocation16 + $0x60] sm:$0xff]
    %v2736 = vld [vmem:[#allocation16 + $0x68] sm:$0xff]
    %v2737 = vld [vmem:[#allocation16 + $0x70] sm:$0xff]
    %v2738 = vld [vmem:[#allocation16 + $0x78] sm:$0xff]
    %v2739 = vld [vmem:[#allocation16 + $0x80] sm:$0xff]
    %v2740 = vld [vmem:[#allocation16 + $0x88] sm:$0xff]
    %v2741 = vld [vmem:[#allocation16 + $0x90] sm:$0xff]
    %v2742 = vld [vmem:[#allocation16 + $0x98] sm:$0xff]
    %v2743 = vld [vmem:[#allocation16 + $0xa0] sm:$0xff]
    %v2744 = vld [vmem:[#allocation16 + $0xa8] sm:$0xff]
    %v2745 = vld [vmem:[#allocation16 + $0xb0] sm:$0xff]
    %v2746 = vld [vmem:[#allocation16 + $0xb8] sm:$0xff]
    %v2747 = vld [vmem:[#allocation16 + $0xc0] sm:$0xff]
    %v2748 = vld [vmem:[#allocation16 + $0xc8] sm:$0xff]
    %v2750 = vsel %vm2656, %v2676, 0
    %2752 = vmatpush.msra.mxu0 %v2738
    %2753 = vmatpush.msra.mxu0 %v2737
    %2754 = vmatpush.msra.mxu0 %v2736
    %2755 = vmatpush.msra.mxu0 %v2735
    %2756 = vmatpush.msra.mxu0 %v2734
    %2757 = vmatpush.msra.mxu0 %v2733
    %2758 = vmatpush.msra.mxu0 %v2732
    %2759 = vmatpush.msra.mxu0 %v2731
    %2760 = vmatpush.msra.mxu0 %v2730
    %2761 = vmatpush.msra.mxu0 %v2729
    %2762 = vmatpush.msra.mxu0 %v2728
    %2763 = vmatpush.msra.mxu0 %v2727
    %2764 = vmatpush.msra.mxu0 %v2726
    %2765 = vmatpush.msra.mxu0 %v2725
    %2766 = vmatpush.msra.mxu0 %v2724
    %2767 = vmatpush.msra.mxu0 %v2723
    %2768 = vmatmul.f32.gmra.mxu0 %v2655
    %v2769 = vpop.f32.mrf.mxu0
    %v2770 = vadd.f32 0.0, %v2769
    %2771 = vdwg.mxu0
    %2772 = vmatpush.msra.mxu0 0.0
    %2773 = vmatpush.msra.mxu0 0.0
    %2774 = vmatpush.msra.mxu0 0.0
    %2775 = vmatpush.msra.mxu0 0.0
    %2776 = vmatpush.msra.mxu0 0.0
    %2777 = vmatpush.msra.mxu0 0.0
    %2778 = vmatpush.msra.mxu0 %v2748
    %2779 = vmatpush.msra.mxu0 %v2747
    %2780 = vmatpush.msra.mxu0 %v2746
    %2781 = vmatpush.msra.mxu0 %v2745
    %2782 = vmatpush.msra.mxu0 %v2744
    %2783 = vmatpush.msra.mxu0 %v2743
    %2784 = vmatpush.msra.mxu0 %v2742
    %2785 = vmatpush.msra.mxu0 %v2741
    %2786 = vmatpush.msra.mxu0 %v2740
    %2787 = vmatpush.msra.mxu0 %v2739
    %2788 = vmatmul.f32.gmra.mxu0 %v2750
    %v2789 = vpop.f32.mrf.mxu0
    %v2790 = vadd.f32 %v2770, %v2789
    %2791 = vdwg.mxu0
    %v2792 = vmul.f32 %v2790, 0.000739645
    %v2794 = vsel %vm2656, %v2722, 0
    %2796 = vmatpush.msra.mxu0 %v2738
    %2797 = vmatpush.msra.mxu0 %v2737
    %2798 = vmatpush.msra.mxu0 %v2736
    %2799 = vmatpush.msra.mxu0 %v2735
    %2800 = vmatpush.msra.mxu0 %v2734
    %2801 = vmatpush.msra.mxu0 %v2733
    %2802 = vmatpush.msra.mxu0 %v2732
    %2803 = vmatpush.msra.mxu0 %v2731
    %2804 = vmatpush.msra.mxu0 %v2730
    %2805 = vmatpush.msra.mxu0 %v2729
    %2806 = vmatpush.msra.mxu0 %v2728
    %2807 = vmatpush.msra.mxu0 %v2727
    %2808 = vmatpush.msra.mxu0 %v2726
    %2809 = vmatpush.msra.mxu0 %v2725
    %2810 = vmatpush.msra.mxu0 %v2724
    %2811 = vmatpush.msra.mxu0 %v2723
    %2812 = vmatmul.f32.gmra.mxu0 %v2703
    %v2813 = vpop.f32.mrf.mxu0
    %v2814 = vadd.f32 0.0, %v2813
    %2815 = vdwg.mxu0
    %2816 = vmatpush.msra.mxu0 0.0
    %2817 = vmatpush.msra.mxu0 0.0
    %2818 = vmatpush.msra.mxu0 0.0
    %2819 = vmatpush.msra.mxu0 0.0
    %2820 = vmatpush.msra.mxu0 0.0
    %2821 = vmatpush.msra.mxu0 0.0
    %2822 = vmatpush.msra.mxu0 %v2748
    %2823 = vmatpush.msra.mxu0 %v2747
    %2824 = vmatpush.msra.mxu0 %v2746
    %2825 = vmatpush.msra.mxu0 %v2745
    %2826 = vmatpush.msra.mxu0 %v2744
    %2827 = vmatpush.msra.mxu0 %v2743
    %2828 = vmatpush.msra.mxu0 %v2742
    %2829 = vmatpush.msra.mxu0 %v2741
    %2830 = vmatpush.msra.mxu0 %v2740
    %2831 = vmatpush.msra.mxu0 %v2739
    %2832 = vmatmul.f32.gmra.mxu0 %v2794
    %v2833 = vpop.f32.mrf.mxu0
    %v2834 = vadd.f32 %v2814, %v2833
    %2835 = vdwg.mxu0
    %v2836 = vmul.f32 %v2834, 0.000739645
    %v2837 = vmul.f32 %v2792, %v2792
    %v2838 = vsub.f32 %v2836, %v2837
    %v2839 = vld [vmem:[%s15] sm:$0x1]
    %v2840 = vadd.f32 %v2838, 1e-05
    %v2841 = vrsqrt.pop %v2840
    %v2842 = vmul.f32 %v2841, %v2840
    %v2843 = vmul.f32 %v2842, %v2841
    %v2844 = vmul.f32 0.5, %v2843
    %v2845 = vsub.f32 1.5, %v2844
    %v2846 = vmul.f32 %v2841, %v2845
    %vm2847 = vweird.f32 %v2840
    %vm2848 = vweird.f32 %v2841
    %vm2849 = vmor %vm2847, %vm2848
    %v2850 = vsel %vm2849, %v2841, %v2846
    %v2851 = vmul.f32 %v2839, %v2850
    %v2852 = vld [vmem:[%s16] sm:$0x1]
    %v2853 = vmul.f32 %v2792, %v2851
    %v2854 = vsub.f32 %v2852, %v2853
    %v2855 = vld [vmem:[%s14] sm:$0xff]
    %v2856 = vld [vmem:[%s14 + $0x8] sm:$0xff]
    %v2858 = vsel %vm245, %v2851, 0
    %2860 = vmatpush.msra.mxu0 0.0
    %2861 = vmatpush.msra.mxu0 0.0
    %2862 = vmatpush.msra.mxu0 0.0
    %2863 = vmatpush.msra.mxu0 0.0
    %2864 = vmatpush.msra.mxu0 0.0
    %2865 = vmatpush.msra.mxu0 0.0
    %2866 = vmatpush.msra.mxu0 0.0
    %2867 = vmatpush.msra.mxu0 0.0
    %2868 = vmatpush.msra.mxu0 0.0
    %2869 = vmatpush.msra.mxu0 0.0
    %2870 = vmatpush.msra.mxu0 0.0
    %2871 = vmatpush.msra.mxu0 0.0
    %2872 = vmatpush.msra.mxu0 0.0
    %2873 = vmatpush.msra.mxu0 0.0
    %2874 = vmatpush.msra.mxu0 0.0
    %2875 = vmatpush.msra.mxu0 %v2855
    %2876 = vmatmul.f32.gmra.mxu0 %v2858
    %v2877 = vpop.f32.mrf.mxu0
    %v2878 = vadd.f32 0.0, %v2877
    %2879 = vdwg.mxu0
    %2880 = vmatpush.msra.mxu0 0.0
    %2881 = vmatpush.msra.mxu0 0.0
    %2882 = vmatpush.msra.mxu0 0.0
    %2883 = vmatpush.msra.mxu0 0.0
    %2884 = vmatpush.msra.mxu0 0.0
    %2885 = vmatpush.msra.mxu0 0.0
    %2886 = vmatpush.msra.mxu0 0.0
    %2887 = vmatpush.msra.mxu0 0.0
    %2888 = vmatpush.msra.mxu0 0.0
    %2889 = vmatpush.msra.mxu0 0.0
    %2890 = vmatpush.msra.mxu0 0.0
    %2891 = vmatpush.msra.mxu0 0.0
    %2892 = vmatpush.msra.mxu0 0.0
    %2893 = vmatpush.msra.mxu0 0.0
    %2894 = vmatpush.msra.mxu0 0.0
    %2895 = vmatpush.msra.mxu0 %v2856
    %2896 = vmatmul.f32.gmra.mxu0 %v2858
    %v2897 = vpop.f32.mrf.mxu0
    %v2898 = vadd.f32 0.0, %v2897
    %2899 = vdwg.mxu0
    %v2901 = vsel %vm245, %v2854, 0
    %2903 = vmatpush.msra.mxu0 0.0
    %2904 = vmatpush.msra.mxu0 0.0
    %2905 = vmatpush.msra.mxu0 0.0
    %2906 = vmatpush.msra.mxu0 0.0
    %2907 = vmatpush.msra.mxu0 0.0
    %2908 = vmatpush.msra.mxu0 0.0
    %2909 = vmatpush.msra.mxu0 0.0
    %2910 = vmatpush.msra.mxu0 0.0
    %2911 = vmatpush.msra.mxu0 0.0
    %2912 = vmatpush.msra.mxu0 0.0
    %2913 = vmatpush.msra.mxu0 0.0
    %2914 = vmatpush.msra.mxu0 0.0
    %2915 = vmatpush.msra.mxu0 0.0
    %2916 = vmatpush.msra.mxu0 0.0
    %2917 = vmatpush.msra.mxu0 0.0
    %2918 = vmatpush.msra.mxu0 %v2855
    %2919 = vmatmul.f32.gmra.mxu0 %v2901
    %v2920 = vpop.f32.mrf.mxu0
    %v2921 = vadd.f32 0.0, %v2920
    %2922 = vdwg.mxu0
    %2923 = vmatpush.msra.mxu0 0.0
    %2924 = vmatpush.msra.mxu0 0.0
    %2925 = vmatpush.msra.mxu0 0.0
    %2926 = vmatpush.msra.mxu0 0.0
    %2927 = vmatpush.msra.mxu0 0.0
    %2928 = vmatpush.msra.mxu0 0.0
    %2929 = vmatpush.msra.mxu0 0.0
    %2930 = vmatpush.msra.mxu0 0.0
    %2931 = vmatpush.msra.mxu0 0.0
    %2932 = vmatpush.msra.mxu0 0.0
    %2933 = vmatpush.msra.mxu0 0.0
    %2934 = vmatpush.msra.mxu0 0.0
    %2935 = vmatpush.msra.mxu0 0.0
    %2936 = vmatpush.msra.mxu0 0.0
    %2937 = vmatpush.msra.mxu0 0.0
    %2938 = vmatpush.msra.mxu0 %v2856
    %2939 = vmatmul.f32.gmra.mxu0 %v2901
    %v2940 = vpop.f32.mrf.mxu0
    %v2941 = vadd.f32 0.0, %v2940
    %2942 = vdwg.mxu0
    %v2943 = vperm.slane %v2878, 0
    %v2944 = vperm.slane %v2898, 0
    %v2945 = vmul.f32 %v2627, %v2943
    %v2946 = vmul.f32 %v2628, %v2944
    %v2947 = vmul.f32 %v2629, %v2943
    %v2948 = vmul.f32 %v2630, %v2944
    %v2949 = vmul.f32 %v2631, %v2943
    %v2950 = vmul.f32 %v2632, %v2944
    %v2951 = vmul.f32 %v2633, %v2943
    %v2952 = vmul.f32 %v2634, %v2944
    %v2953 = vmul.f32 %v2635, %v2943
    %v2954 = vmul.f32 %v2636, %v2944
    %v2955 = vmul.f32 %v2637, %v2943
    %v2956 = vmul.f32 %v2638, %v2944
    %v2957 = vmul.f32 %v2639, %v2943
    %v2958 = vmul.f32 %v2640, %v2944
    %v2959 = vperm.slane %v2921, 0
    %v2960 = vperm.slane %v2941, 0
    %v2961 = vadd.f32 %v2945, %v2959
    %v2962 = vadd.f32 %v2946, %v2960
    %v2963 = vadd.f32 %v2947, %v2959
    %v2964 = vadd.f32 %v2948, %v2960
    %v2965 = vadd.f32 %v2949, %v2959
    %v2966 = vadd.f32 %v2950, %v2960
    %v2967 = vadd.f32 %v2951, %v2959
    %v2968 = vadd.f32 %v2952, %v2960
    %v2969 = vadd.f32 %v2953, %v2959
    %v2970 = vadd.f32 %v2954, %v2960
    %v2971 = vadd.f32 %v2955, %v2959
    %v2972 = vadd.f32 %v2956, %v2960
    %v2973 = vadd.f32 %v2957, %v2959
    %v2974 = vadd.f32 %v2958, %v2960
    %vm2975 = vcmp.gt.f32.partialorder %v2961, 0.0
    %vm2976 = vcmp.gt.f32.partialorder %v2962, 0.0
    %vm2977 = vcmp.gt.f32.partialorder %v2963, 0.0
    %vm2978 = vcmp.gt.f32.partialorder %v2964, 0.0
    %vm2979 = vcmp.gt.f32.partialorder %v2965, 0.0
    %vm2980 = vcmp.gt.f32.partialorder %v2966, 0.0
    %vm2981 = vcmp.gt.f32.partialorder %v2967, 0.0
    %vm2982 = vcmp.gt.f32.partialorder %v2968, 0.0
    %vm2983 = vcmp.gt.f32.partialorder %v2969, 0.0
    %vm2984 = vcmp.gt.f32.partialorder %v2970, 0.0
    %vm2985 = vcmp.gt.f32.partialorder %v2971, 0.0
    %vm2986 = vcmp.gt.f32.partialorder %v2972, 0.0
    %vm2987 = vcmp.gt.f32.partialorder %v2973, 0.0
    %vm2988 = vcmp.gt.f32.partialorder %v2974, 0.0
    %v2989 = vstv %s2641
    %v2990 = vmul.f32 %v2989, %v2961
    %v2991 = vmul.f32 %v2989, %v2962
    %v2992 = vmul.f32 %v2989, %v2963
    %v2993 = vmul.f32 %v2989, %v2964
    %v2994 = vmul.f32 %v2989, %v2965
    %v2995 = vmul.f32 %v2989, %v2966
    %v2996 = vmul.f32 %v2989, %v2967
    %v2997 = vmul.f32 %v2989, %v2968
    %v2998 = vmul.f32 %v2989, %v2969
    %v2999 = vmul.f32 %v2989, %v2970
    %v3000 = vmul.f32 %v2989, %v2971
    %v3001 = vmul.f32 %v2989, %v2972
    %v3002 = vmul.f32 %v2989, %v2973
    %v3003 = vmul.f32 %v2989, %v2974
    %v3004 = vsel %vm2975, %v2961, %v2990
    %v3005 = vsel %vm2976, %v2962, %v2991
    %v3006 = vsel %vm2977, %v2963, %v2992
    %v3007 = vsel %vm2978, %v2964, %v2993
    %v3008 = vsel %vm2979, %v2965, %v2994
    %v3009 = vsel %vm2980, %v2966, %v2995
    %v3010 = vsel %vm2981, %v2967, %v2996
    %v3011 = vsel %vm2982, %v2968, %v2997
    %v3012 = vsel %vm2983, %v2969, %v2998
    %v3013 = vsel %vm2984, %v2970, %v2999
    %v3014 = vsel %vm2985, %v2971, %v3000
    %v3015 = vsel %vm2986, %v2972, %v3001
    %v3016 = vsel %vm2987, %v2973, %v3002
    %v3017 = vsel %vm2988, %v2974, %v3003
    %v3018 = vld [vmem:[%s19] sm:$0x1]
    %v3019 = vld [vmem:[#allocation18] sm:$0xff]
    %v3020 = vld [vmem:[#allocation18 + $0x8] sm:$0xff]
    %v3021 = vld [vmem:[#allocation18 + $0x10] sm:$0xff]
    %v3022 = vld [vmem:[#allocation18 + $0x18] sm:$0xff]
    %v3023 = vld [vmem:[#allocation18 + $0x20] sm:$0xff]
    %v3024 = vld [vmem:[#allocation18 + $0x28] sm:$0xff]
    %v3025 = vld [vmem:[#allocation18 + $0x30] sm:$0xff]
    %v3026 = vld [vmem:[#allocation18 + $0x38] sm:$0xff]
    %v3027 = vld [vmem:[#allocation18 + $0x40] sm:$0xff]
    %v3028 = vld [vmem:[#allocation18 + $0x48] sm:$0xff]
    %v3029 = vld [vmem:[#allocation18 + $0x50] sm:$0xff]
    %v3030 = vld [vmem:[#allocation18 + $0x58] sm:$0xff]
    %v3031 = vld [vmem:[#allocation18 + $0x60] sm:$0xff]
    %v3032 = vld [vmem:[#allocation18 + $0x68] sm:$0xff]
    %v3033 = vld [vmem:[#allocation18 + $0x70] sm:$0xff]
    %v3034 = vld [vmem:[#allocation18 + $0x78] sm:$0xff]
    %v3035 = vld [vmem:[#allocation18 + $0x80] sm:$0xff]
    %v3036 = vld [vmem:[#allocation18 + $0x88] sm:$0xff]
    %v3037 = vld [vmem:[#allocation18 + $0x90] sm:$0xff]
    %v3038 = vld [vmem:[#allocation18 + $0x98] sm:$0xff]
    %v3039 = vld [vmem:[#allocation18 + $0xa0] sm:$0xff]
    %v3040 = vld [vmem:[#allocation18 + $0xa8] sm:$0xff]
    %v3041 = vld [vmem:[#allocation18 + $0xb0] sm:$0xff]
    %v3042 = vld [vmem:[#allocation18 + $0xb8] sm:$0xff]
    %v3043 = vld [vmem:[#allocation18 + $0xc0] sm:$0xff]
    %v3044 = vld [vmem:[#allocation18 + $0xc8] sm:$0xff]
    %v3046 = vsel %vm2656, %v3005, 0
    %v3049 = vsel %vm2656, %v3007, 0
    %v3052 = vsel %vm2656, %v3009, 0
    %v3055 = vsel %vm2656, %v3011, 0
    %v3058 = vsel %vm2656, %v3013, 0
    %v3061 = vsel %vm2656, %v3015, 0
    %v3064 = vsel %vm2656, %v3017, 0
    %3066 = vmatpush.msra.mxu0 %v3034
    %3067 = vmatpush.msra.mxu0 %v3033
    %3068 = vmatpush.msra.mxu0 %v3032
    %3069 = vmatpush.msra.mxu0 %v3031
    %3070 = vmatpush.msra.mxu0 %v3030
    %3071 = vmatpush.msra.mxu0 %v3029
    %3072 = vmatpush.msra.mxu0 %v3028
    %3073 = vmatpush.msra.mxu0 %v3027
    %3074 = vmatpush.msra.mxu0 %v3026
    %3075 = vmatpush.msra.mxu0 %v3025
    %3076 = vmatpush.msra.mxu0 %v3024
    %3077 = vmatpush.msra.mxu0 %v3023
    %3078 = vmatpush.msra.mxu0 %v3022
    %3079 = vmatpush.msra.mxu0 %v3021
    %3080 = vmatpush.msra.mxu0 %v3020
    %3081 = vmatpush.msra.mxu0 %v3019
    %3082 = vmatmul.f32.gmra.mxu0 %v3004
    %v3083 = vpop.f32.mrf.mxu0
    %v3084 = vadd.f32 0.0, %v3083
    %3085 = vmatmul.f32.gmra.mxu0 %v3006
    %v3086 = vpop.f32.mrf.mxu0
    %v3087 = vadd.f32 0.0, %v3086
    %3088 = vmatmul.f32.gmra.mxu0 %v3008
    %v3089 = vpop.f32.mrf.mxu0
    %v3090 = vadd.f32 0.0, %v3089
    %3091 = vmatmul.f32.gmra.mxu0 %v3010
    %v3092 = vpop.f32.mrf.mxu0
    %v3093 = vadd.f32 0.0, %v3092
    %3094 = vmatmul.f32.gmra.mxu0 %v3012
    %v3095 = vpop.f32.mrf.mxu0
    %v3096 = vadd.f32 0.0, %v3095
    %3097 = vmatmul.f32.gmra.mxu0 %v3014
    %v3098 = vpop.f32.mrf.mxu0
    %v3099 = vadd.f32 0.0, %v3098
    %3100 = vmatmul.f32.gmra.mxu0 %v3016
    %v3101 = vpop.f32.mrf.mxu0
    %v3102 = vadd.f32 0.0, %v3101
    %3103 = vdwg.mxu0
    %3104 = vmatpush.msra.mxu0 0.0
    %3105 = vmatpush.msra.mxu0 0.0
    %3106 = vmatpush.msra.mxu0 0.0
    %3107 = vmatpush.msra.mxu0 0.0
    %3108 = vmatpush.msra.mxu0 0.0
    %3109 = vmatpush.msra.mxu0 0.0
    %3110 = vmatpush.msra.mxu0 %v3044
    %3111 = vmatpush.msra.mxu0 %v3043
    %3112 = vmatpush.msra.mxu0 %v3042
    %3113 = vmatpush.msra.mxu0 %v3041
    %3114 = vmatpush.msra.mxu0 %v3040
    %3115 = vmatpush.msra.mxu0 %v3039
    %3116 = vmatpush.msra.mxu0 %v3038
    %3117 = vmatpush.msra.mxu0 %v3037
    %3118 = vmatpush.msra.mxu0 %v3036
    %3119 = vmatpush.msra.mxu0 %v3035
    %3120 = vmatmul.f32.gmra.mxu0 %v3046
    %v3121 = vpop.f32.mrf.mxu0
    %v3122 = vadd.f32 %v3084, %v3121
    %3123 = vmatmul.f32.gmra.mxu0 %v3049
    %v3124 = vpop.f32.mrf.mxu0
    %v3125 = vadd.f32 %v3087, %v3124
    %3126 = vmatmul.f32.gmra.mxu0 %v3052
    %v3127 = vpop.f32.mrf.mxu0
    %v3128 = vadd.f32 %v3090, %v3127
    %3129 = vmatmul.f32.gmra.mxu0 %v3055
    %v3130 = vpop.f32.mrf.mxu0
    %v3131 = vadd.f32 %v3093, %v3130
    %3132 = vmatmul.f32.gmra.mxu0 %v3058
    %v3133 = vpop.f32.mrf.mxu0
    %v3134 = vadd.f32 %v3096, %v3133
    %3135 = vmatmul.f32.gmra.mxu0 %v3061
    %v3136 = vpop.f32.mrf.mxu0
    %v3137 = vadd.f32 %v3099, %v3136
    %3138 = vmatmul.f32.gmra.mxu0 %v3064
    %v3139 = vpop.f32.mrf.mxu0
    %v3140 = vadd.f32 %v3102, %v3139
    %3141 = vdwg.mxu0
    %v3142 = vld [vmem:[#allocation19] sm:$0xff]
    %v3143 = vld [vmem:[#allocation19 + $0x8] sm:$0xff]
    %v3144 = vld [vmem:[#allocation19 + $0x10] sm:$0xff]
    %v3145 = vld [vmem:[#allocation19 + $0x18] sm:$0xff]
    %v3146 = vld [vmem:[#allocation19 + $0x20] sm:$0xff]
    %v3147 = vld [vmem:[#allocation19 + $0x28] sm:$0xff]
    %v3148 = vld [vmem:[#allocation19 + $0x30] sm:$0xff]
    %vm3149 = vcmask 424960
    %v3151 = vsel %vm3149, %v3142, 0
    %v3154 = vsel %vm3149, %v3143, 0
    %v3157 = vsel %vm3149, %v3144, 0
    %v3160 = vsel %vm3149, %v3145, 0
    %v3163 = vsel %vm3149, %v3146, 0
    %v3166 = vsel %vm3149, %v3147, 0
    %v3169 = vsel %vm3149, %v3148, 0
    %v3172 = vsel %vm2647, %v3140, 0
    %3174 = vmatpush.msra.mxu0 0.0
    %3175 = vmatpush.msra.mxu0 0.0
    %3176 = vmatpush.msra.mxu0 0.0
    %3177 = vmatpush.msra.mxu0 0.0
    %3178 = vmatpush.msra.mxu0 0.0
    %3179 = vmatpush.msra.mxu0 0.0
    %3180 = vmatpush.msra.mxu0 0.0
    %3181 = vmatpush.msra.mxu0 0.0
    %3182 = vmatpush.msra.mxu0 0.0
    %3183 = vmatpush.msra.mxu0 %v3172
    %3184 = vmatpush.msra.mxu0 %v3137
    %3185 = vmatpush.msra.mxu0 %v3134
    %3186 = vmatpush.msra.mxu0 %v3131
    %3187 = vmatpush.msra.mxu0 %v3128
    %3188 = vmatpush.msra.mxu0 %v3125
    %3189 = vmatpush.msra.mxu0 %v3122
    %3190 = vmatmul.f32.gmra.mxu0 %v3151
    %v3191 = vpop.f32.mrf.mxu0
    %v3192 = vadd.f32 0.0, %v3191
    %3193 = vmatmul.f32.gmra.mxu0 %v3154
    %v3194 = vpop.f32.mrf.mxu0
    %v3195 = vadd.f32 0.0, %v3194
    %3196 = vmatmul.f32.gmra.mxu0 %v3157
    %v3197 = vpop.f32.mrf.mxu0
    %v3198 = vadd.f32 0.0, %v3197
    %3199 = vmatmul.f32.gmra.mxu0 %v3160
    %v3200 = vpop.f32.mrf.mxu0
    %v3201 = vadd.f32 0.0, %v3200
    %3202 = vmatmul.f32.gmra.mxu0 %v3163
    %v3203 = vpop.f32.mrf.mxu0
    %v3204 = vadd.f32 0.0, %v3203
    %3205 = vmatmul.f32.gmra.mxu0 %v3166
    %v3206 = vpop.f32.mrf.mxu0
    %v3207 = vadd.f32 0.0, %v3206
    %3208 = vmatmul.f32.gmra.mxu0 %v3169
    %v3209 = vpop.f32.mrf.mxu0
    %v3210 = vadd.f32 0.0, %v3209
    %3211 = vdwg.mxu0
    %v3213 = vperm.slane %v3018, 0
    %v3215 = vadd.f32 %v3213, %v3192
    %v3216 = vadd.f32 %v3213, %v3195
    %v3217 = vadd.f32 %v3213, %v3198
    %v3218 = vadd.f32 %v3213, %v3201
    %v3219 = vadd.f32 %v3213, %v3204
    %v3220 = vadd.f32 %v3213, %v3207
    %v3221 = vadd.f32 %v3213, %v3210
    %s3222 = scalar_lea.vmem [#allocation18], 208
    %v3223 = vld [vmem:[%s3222] sm:$0xff]
    %v3224 = vld [vmem:[%s3222 + $0x8] sm:$0xff]
    %v3225 = vld [vmem:[%s3222 + $0x10] sm:$0xff]
    %v3226 = vld [vmem:[%s3222 + $0x18] sm:$0xff]
    %v3227 = vld [vmem:[%s3222 + $0x20] sm:$0xff]
    %v3228 = vld [vmem:[%s3222 + $0x28] sm:$0xff]
    %v3229 = vld [vmem:[%s3222 + $0x30] sm:$0xff]
    %v3230 = vld [vmem:[%s3222 + $0x38] sm:$0xff]
    %v3231 = vld [vmem:[%s3222 + $0x40] sm:$0xff]
    %v3232 = vld [vmem:[%s3222 + $0x48] sm:$0xff]
    %v3233 = vld [vmem:[%s3222 + $0x50] sm:$0xff]
    %v3234 = vld [vmem:[%s3222 + $0x58] sm:$0xff]
    %v3235 = vld [vmem:[%s3222 + $0x60] sm:$0xff]
    %v3236 = vld [vmem:[%s3222 + $0x68] sm:$0xff]
    %v3237 = vld [vmem:[%s3222 + $0x70] sm:$0xff]
    %v3238 = vld [vmem:[%s3222 + $0x78] sm:$0xff]
    %v3239 = vld [vmem:[%s3222 + $0x80] sm:$0xff]
    %v3240 = vld [vmem:[%s3222 + $0x88] sm:$0xff]
    %v3241 = vld [vmem:[%s3222 + $0x90] sm:$0xff]
    %v3242 = vld [vmem:[%s3222 + $0x98] sm:$0xff]
    %v3243 = vld [vmem:[%s3222 + $0xa0] sm:$0xff]
    %v3244 = vld [vmem:[%s3222 + $0xa8] sm:$0xff]
    %v3245 = vld [vmem:[%s3222 + $0xb0] sm:$0xff]
    %v3246 = vld [vmem:[%s3222 + $0xb8] sm:$0xff]
    %v3247 = vld [vmem:[%s3222 + $0xc0] sm:$0xff]
    %v3248 = vld [vmem:[%s3222 + $0xc8] sm:$0xff]
    %3249 = vmatpush.msra.mxu0 %v3238
    %3250 = vmatpush.msra.mxu0 %v3237
    %3251 = vmatpush.msra.mxu0 %v3236
    %3252 = vmatpush.msra.mxu0 %v3235
    %3253 = vmatpush.msra.mxu0 %v3234
    %3254 = vmatpush.msra.mxu0 %v3233
    %3255 = vmatpush.msra.mxu0 %v3232
    %3256 = vmatpush.msra.mxu0 %v3231
    %3257 = vmatpush.msra.mxu0 %v3230
    %3258 = vmatpush.msra.mxu0 %v3229
    %3259 = vmatpush.msra.mxu0 %v3228
    %3260 = vmatpush.msra.mxu0 %v3227
    %3261 = vmatpush.msra.mxu0 %v3226
    %3262 = vmatpush.msra.mxu0 %v3225
    %3263 = vmatpush.msra.mxu0 %v3224
    %3264 = vmatpush.msra.mxu0 %v3223
    %3265 = vmatmul.f32.gmra.mxu0 %v3004
    %v3266 = vpop.f32.mrf.mxu0
    %v3267 = vadd.f32 0.0, %v3266
    %3268 = vmatmul.f32.gmra.mxu0 %v3006
    %v3269 = vpop.f32.mrf.mxu0
    %v3270 = vadd.f32 0.0, %v3269
    %3271 = vmatmul.f32.gmra.mxu0 %v3008
    %v3272 = vpop.f32.mrf.mxu0
    %v3273 = vadd.f32 0.0, %v3272
    %3274 = vmatmul.f32.gmra.mxu0 %v3010
    %v3275 = vpop.f32.mrf.mxu0
    %v3276 = vadd.f32 0.0, %v3275
    %3277 = vmatmul.f32.gmra.mxu0 %v3012
    %v3278 = vpop.f32.mrf.mxu0
    %v3279 = vadd.f32 0.0, %v3278
    %3280 = vmatmul.f32.gmra.mxu0 %v3014
    %v3281 = vpop.f32.mrf.mxu0
    %v3282 = vadd.f32 0.0, %v3281
    %3283 = vmatmul.f32.gmra.mxu0 %v3016
    %v3284 = vpop.f32.mrf.mxu0
    %v3285 = vadd.f32 0.0, %v3284
    %3286 = vdwg.mxu0
    %3287 = vmatpush.msra.mxu0 0.0
    %3288 = vmatpush.msra.mxu0 0.0
    %3289 = vmatpush.msra.mxu0 0.0
    %3290 = vmatpush.msra.mxu0 0.0
    %3291 = vmatpush.msra.mxu0 0.0
    %3292 = vmatpush.msra.mxu0 0.0
    %3293 = vmatpush.msra.mxu0 %v3248
    %3294 = vmatpush.msra.mxu0 %v3247
    %3295 = vmatpush.msra.mxu0 %v3246
    %3296 = vmatpush.msra.mxu0 %v3245
    %3297 = vmatpush.msra.mxu0 %v3244
    %3298 = vmatpush.msra.mxu0 %v3243
    %3299 = vmatpush.msra.mxu0 %v3242
    %3300 = vmatpush.msra.mxu0 %v3241
    %3301 = vmatpush.msra.mxu0 %v3240
    %3302 = vmatpush.msra.mxu0 %v3239
    %3303 = vmatmul.f32.gmra.mxu0 %v3046
    %v3304 = vpop.f32.mrf.mxu0
    %v3305 = vadd.f32 %v3267, %v3304
    %3306 = vmatmul.f32.gmra.mxu0 %v3049
    %v3307 = vpop.f32.mrf.mxu0
    %v3308 = vadd.f32 %v3270, %v3307
    %3309 = vmatmul.f32.gmra.mxu0 %v3052
    %v3310 = vpop.f32.mrf.mxu0
    %v3311 = vadd.f32 %v3273, %v3310
    %3312 = vmatmul.f32.gmra.mxu0 %v3055
    %v3313 = vpop.f32.mrf.mxu0
    %v3314 = vadd.f32 %v3276, %v3313
    %3315 = vmatmul.f32.gmra.mxu0 %v3058
    %v3316 = vpop.f32.mrf.mxu0
    %v3317 = vadd.f32 %v3279, %v3316
    %3318 = vmatmul.f32.gmra.mxu0 %v3061
    %v3319 = vpop.f32.mrf.mxu0
    %v3320 = vadd.f32 %v3282, %v3319
    %3321 = vmatmul.f32.gmra.mxu0 %v3064
    %v3322 = vpop.f32.mrf.mxu0
    %v3323 = vadd.f32 %v3285, %v3322
    %3324 = vdwg.mxu0
    %s3325 = scalar_lea.vmem [#allocation19], 56
    %v3326 = vld [vmem:[%s3325] sm:$0xff]
    %v3327 = vld [vmem:[%s3325 + $0x8] sm:$0xff]
    %v3328 = vld [vmem:[%s3325 + $0x10] sm:$0xff]
    %v3329 = vld [vmem:[%s3325 + $0x18] sm:$0xff]
    %v3330 = vld [vmem:[%s3325 + $0x20] sm:$0xff]
    %v3331 = vld [vmem:[%s3325 + $0x28] sm:$0xff]
    %v3332 = vld [vmem:[%s3325 + $0x30] sm:$0xff]
    %v3334 = vsel %vm3149, %v3326, 0
    %v3337 = vsel %vm3149, %v3327, 0
    %v3340 = vsel %vm3149, %v3328, 0
    %v3343 = vsel %vm3149, %v3329, 0
    %v3346 = vsel %vm3149, %v3330, 0
    %v3349 = vsel %vm3149, %v3331, 0
    %v3352 = vsel %vm3149, %v3332, 0
    %v3355 = vsel %vm2647, %v3323, 0
    %3357 = vmatpush.msra.mxu0 0.0
    %3358 = vmatpush.msra.mxu0 0.0
    %3359 = vmatpush.msra.mxu0 0.0
    %3360 = vmatpush.msra.mxu0 0.0
    %3361 = vmatpush.msra.mxu0 0.0
    %3362 = vmatpush.msra.mxu0 0.0
    %3363 = vmatpush.msra.mxu0 0.0
    %3364 = vmatpush.msra.mxu0 0.0
    %3365 = vmatpush.msra.mxu0 0.0
    %3366 = vmatpush.msra.mxu0 %v3355
    %3367 = vmatpush.msra.mxu0 %v3320
    %3368 = vmatpush.msra.mxu0 %v3317
    %3369 = vmatpush.msra.mxu0 %v3314
    %3370 = vmatpush.msra.mxu0 %v3311
    %3371 = vmatpush.msra.mxu0 %v3308
    %3372 = vmatpush.msra.mxu0 %v3305
    %3373 = vmatmul.f32.gmra.mxu0 %v3334
    %v3374 = vpop.f32.mrf.mxu0
    %v3375 = vadd.f32 0.0, %v3374
    %3376 = vmatmul.f32.gmra.mxu0 %v3337
    %v3377 = vpop.f32.mrf.mxu0
    %v3378 = vadd.f32 0.0, %v3377
    %3379 = vmatmul.f32.gmra.mxu0 %v3340
    %v3380 = vpop.f32.mrf.mxu0
    %v3381 = vadd.f32 0.0, %v3380
    %3382 = vmatmul.f32.gmra.mxu0 %v3343
    %v3383 = vpop.f32.mrf.mxu0
    %v3384 = vadd.f32 0.0, %v3383
    %3385 = vmatmul.f32.gmra.mxu0 %v3346
    %v3386 = vpop.f32.mrf.mxu0
    %v3387 = vadd.f32 0.0, %v3386
    %3388 = vmatmul.f32.gmra.mxu0 %v3349
    %v3389 = vpop.f32.mrf.mxu0
    %v3390 = vadd.f32 0.0, %v3389
    %3391 = vmatmul.f32.gmra.mxu0 %v3352
    %v3392 = vpop.f32.mrf.mxu0
    %v3393 = vadd.f32 0.0, %v3392
    %3394 = vdwg.mxu0
    %v3395 = vadd.f32 %v3215, %v3375
    %v3396 = vadd.f32 %v3216, %v3378
    %v3397 = vadd.f32 %v3217, %v3381
    %v3398 = vadd.f32 %v3218, %v3384
    %v3399 = vadd.f32 %v3219, %v3387
    %v3400 = vadd.f32 %v3220, %v3390
    %v3401 = vadd.f32 %v3221, %v3393
    %s3402 = scalar_lea.vmem [#allocation18], 416
    %v3403 = vld [vmem:[%s3402] sm:$0xff]
    %v3404 = vld [vmem:[%s3402 + $0x8] sm:$0xff]
    %v3405 = vld [vmem:[%s3402 + $0x10] sm:$0xff]
    %v3406 = vld [vmem:[%s3402 + $0x18] sm:$0xff]
    %v3407 = vld [vmem:[%s3402 + $0x20] sm:$0xff]
    %v3408 = vld [vmem:[%s3402 + $0x28] sm:$0xff]
    %v3409 = vld [vmem:[%s3402 + $0x30] sm:$0xff]
    %v3410 = vld [vmem:[%s3402 + $0x38] sm:$0xff]
    %v3411 = vld [vmem:[%s3402 + $0x40] sm:$0xff]
    %v3412 = vld [vmem:[%s3402 + $0x48] sm:$0xff]
    %v3413 = vld [vmem:[%s3402 + $0x50] sm:$0xff]
    %v3414 = vld [vmem:[%s3402 + $0x58] sm:$0xff]
    %v3415 = vld [vmem:[%s3402 + $0x60] sm:$0xff]
    %v3416 = vld [vmem:[%s3402 + $0x68] sm:$0xff]
    %v3417 = vld [vmem:[%s3402 + $0x70] sm:$0xff]
    %v3418 = vld [vmem:[%s3402 + $0x78] sm:$0xff]
    %v3419 = vld [vmem:[%s3402 + $0x80] sm:$0xff]
    %v3420 = vld [vmem:[%s3402 + $0x88] sm:$0xff]
    %v3421 = vld [vmem:[%s3402 + $0x90] sm:$0xff]
    %v3422 = vld [vmem:[%s3402 + $0x98] sm:$0xff]
    %v3423 = vld [vmem:[%s3402 + $0xa0] sm:$0xff]
    %v3424 = vld [vmem:[%s3402 + $0xa8] sm:$0xff]
    %v3425 = vld [vmem:[%s3402 + $0xb0] sm:$0xff]
    %v3426 = vld [vmem:[%s3402 + $0xb8] sm:$0xff]
    %v3427 = vld [vmem:[%s3402 + $0xc0] sm:$0xff]
    %v3428 = vld [vmem:[%s3402 + $0xc8] sm:$0xff]
    %3429 = vmatpush.msra.mxu0 %v3418
    %3430 = vmatpush.msra.mxu0 %v3417
    %3431 = vmatpush.msra.mxu0 %v3416
    %3432 = vmatpush.msra.mxu0 %v3415
    %3433 = vmatpush.msra.mxu0 %v3414
    %3434 = vmatpush.msra.mxu0 %v3413
    %3435 = vmatpush.msra.mxu0 %v3412
    %3436 = vmatpush.msra.mxu0 %v3411
    %3437 = vmatpush.msra.mxu0 %v3410
    %3438 = vmatpush.msra.mxu0 %v3409
    %3439 = vmatpush.msra.mxu0 %v3408
    %3440 = vmatpush.msra.mxu0 %v3407
    %3441 = vmatpush.msra.mxu0 %v3406
    %3442 = vmatpush.msra.mxu0 %v3405
    %3443 = vmatpush.msra.mxu0 %v3404
    %3444 = vmatpush.msra.mxu0 %v3403
    %3445 = vmatmul.f32.gmra.mxu0 %v3004
    %v3446 = vpop.f32.mrf.mxu0
    %v3447 = vadd.f32 0.0, %v3446
    %3448 = vmatmul.f32.gmra.mxu0 %v3006
    %v3449 = vpop.f32.mrf.mxu0
    %v3450 = vadd.f32 0.0, %v3449
    %3451 = vmatmul.f32.gmra.mxu0 %v3008
    %v3452 = vpop.f32.mrf.mxu0
    %v3453 = vadd.f32 0.0, %v3452
    %3454 = vmatmul.f32.gmra.mxu0 %v3010
    %v3455 = vpop.f32.mrf.mxu0
    %v3456 = vadd.f32 0.0, %v3455
    %3457 = vmatmul.f32.gmra.mxu0 %v3012
    %v3458 = vpop.f32.mrf.mxu0
    %v3459 = vadd.f32 0.0, %v3458
    %3460 = vmatmul.f32.gmra.mxu0 %v3014
    %v3461 = vpop.f32.mrf.mxu0
    %v3462 = vadd.f32 0.0, %v3461
    %3463 = vmatmul.f32.gmra.mxu0 %v3016
    %v3464 = vpop.f32.mrf.mxu0
    %v3465 = vadd.f32 0.0, %v3464
    %3466 = vdwg.mxu0
    %3467 = vmatpush.msra.mxu0 0.0
    %3468 = vmatpush.msra.mxu0 0.0
    %3469 = vmatpush.msra.mxu0 0.0
    %3470 = vmatpush.msra.mxu0 0.0
    %3471 = vmatpush.msra.mxu0 0.0
    %3472 = vmatpush.msra.mxu0 0.0
    %3473 = vmatpush.msra.mxu0 %v3428
    %3474 = vmatpush.msra.mxu0 %v3427
    %3475 = vmatpush.msra.mxu0 %v3426
    %3476 = vmatpush.msra.mxu0 %v3425
    %3477 = vmatpush.msra.mxu0 %v3424
    %3478 = vmatpush.msra.mxu0 %v3423
    %3479 = vmatpush.msra.mxu0 %v3422
    %3480 = vmatpush.msra.mxu0 %v3421
    %3481 = vmatpush.msra.mxu0 %v3420
    %3482 = vmatpush.msra.mxu0 %v3419
    %3483 = vmatmul.f32.gmra.mxu0 %v3046
    %v3484 = vpop.f32.mrf.mxu0
    %v3485 = vadd.f32 %v3447, %v3484
    %3486 = vmatmul.f32.gmra.mxu0 %v3049
    %v3487 = vpop.f32.mrf.mxu0
    %v3488 = vadd.f32 %v3450, %v3487
    %3489 = vmatmul.f32.gmra.mxu0 %v3052
    %v3490 = vpop.f32.mrf.mxu0
    %v3491 = vadd.f32 %v3453, %v3490
    %3492 = vmatmul.f32.gmra.mxu0 %v3055
    %v3493 = vpop.f32.mrf.mxu0
    %v3494 = vadd.f32 %v3456, %v3493
    %3495 = vmatmul.f32.gmra.mxu0 %v3058
    %v3496 = vpop.f32.mrf.mxu0
    %v3497 = vadd.f32 %v3459, %v3496
    %3498 = vmatmul.f32.gmra.mxu0 %v3061
    %v3499 = vpop.f32.mrf.mxu0
    %v3500 = vadd.f32 %v3462, %v3499
    %3501 = vmatmul.f32.gmra.mxu0 %v3064
    %v3502 = vpop.f32.mrf.mxu0
    %v3503 = vadd.f32 %v3465, %v3502
    %3504 = vdwg.mxu0
    %s3505 = scalar_lea.vmem [#allocation19], 112
    %v3506 = vld [vmem:[%s3505] sm:$0xff]
    %v3507 = vld [vmem:[%s3505 + $0x8] sm:$0xff]
    %v3508 = vld [vmem:[%s3505 + $0x10] sm:$0xff]
    %v3509 = vld [vmem:[%s3505 + $0x18] sm:$0xff]
    %v3510 = vld [vmem:[%s3505 + $0x20] sm:$0xff]
    %v3511 = vld [vmem:[%s3505 + $0x28] sm:$0xff]
    %v3512 = vld [vmem:[%s3505 + $0x30] sm:$0xff]
    %v3514 = vsel %vm3149, %v3506, 0
    %v3517 = vsel %vm3149, %v3507, 0
    %v3520 = vsel %vm3149, %v3508, 0
    %v3523 = vsel %vm3149, %v3509, 0
    %v3526 = vsel %vm3149, %v3510, 0
    %v3529 = vsel %vm3149, %v3511, 0
    %v3532 = vsel %vm3149, %v3512, 0
    %v3535 = vsel %vm2647, %v3503, 0
    %3537 = vmatpush.msra.mxu0 0.0
    %3538 = vmatpush.msra.mxu0 0.0
    %3539 = vmatpush.msra.mxu0 0.0
    %3540 = vmatpush.msra.mxu0 0.0
    %3541 = vmatpush.msra.mxu0 0.0
    %3542 = vmatpush.msra.mxu0 0.0
    %3543 = vmatpush.msra.mxu0 0.0
    %3544 = vmatpush.msra.mxu0 0.0
    %3545 = vmatpush.msra.mxu0 0.0
    %3546 = vmatpush.msra.mxu0 %v3535
    %3547 = vmatpush.msra.mxu0 %v3500
    %3548 = vmatpush.msra.mxu0 %v3497
    %3549 = vmatpush.msra.mxu0 %v3494
    %3550 = vmatpush.msra.mxu0 %v3491
    %3551 = vmatpush.msra.mxu0 %v3488
    %3552 = vmatpush.msra.mxu0 %v3485
    %3553 = vmatmul.f32.gmra.mxu0 %v3514
    %v3554 = vpop.f32.mrf.mxu0
    %v3555 = vadd.f32 0.0, %v3554
    %3556 = vmatmul.f32.gmra.mxu0 %v3517
    %v3557 = vpop.f32.mrf.mxu0
    %v3558 = vadd.f32 0.0, %v3557
    %3559 = vmatmul.f32.gmra.mxu0 %v3520
    %v3560 = vpop.f32.mrf.mxu0
    %v3561 = vadd.f32 0.0, %v3560
    %3562 = vmatmul.f32.gmra.mxu0 %v3523
    %v3563 = vpop.f32.mrf.mxu0
    %v3564 = vadd.f32 0.0, %v3563
    %3565 = vmatmul.f32.gmra.mxu0 %v3526
    %v3566 = vpop.f32.mrf.mxu0
    %v3567 = vadd.f32 0.0, %v3566
    %3568 = vmatmul.f32.gmra.mxu0 %v3529
    %v3569 = vpop.f32.mrf.mxu0
    %v3570 = vadd.f32 0.0, %v3569
    %3571 = vmatmul.f32.gmra.mxu0 %v3532
    %v3572 = vpop.f32.mrf.mxu0
    %v3573 = vadd.f32 0.0, %v3572
    %3574 = vdwg.mxu0
    %v3575 = vadd.f32 %v3395, %v3555
    %v3576 = vadd.f32 %v3396, %v3558
    %v3577 = vadd.f32 %v3397, %v3561
    %v3578 = vadd.f32 %v3398, %v3564
    %v3579 = vadd.f32 %v3399, %v3567
    %v3580 = vadd.f32 %v3400, %v3570
    %v3581 = vadd.f32 %v3401, %v3573
    %v3582 = vxor.u32 %v3575, 2147483648
    %v3583 = vxor.u32 %v3576, 2147483648
    %v3584 = vxor.u32 %v3577, 2147483648
    %v3585 = vxor.u32 %v3578, 2147483648
    %v3586 = vxor.u32 %v3579, 2147483648
    %v3587 = vxor.u32 %v3580, 2147483648
    %v3588 = vxor.u32 %v3581, 2147483648
    %v3589 = vmul.f32 %v3582, 1.442695
    %v3590 = vpow.pop %v3589
    %v3591 = vmul.f32 %v3583, 1.442695
    %v3592 = vpow.pop %v3591
    %v3593 = vmul.f32 %v3584, 1.442695
    %v3594 = vpow.pop %v3593
    %v3595 = vmul.f32 %v3585, 1.442695
    %v3596 = vpow.pop %v3595
    %v3597 = vmul.f32 %v3586, 1.442695
    %v3598 = vpow.pop %v3597
    %v3599 = vmul.f32 %v3587, 1.442695
    %v3600 = vpow.pop %v3599
    %v3601 = vmul.f32 %v3588, 1.442695
    %v3602 = vpow.pop %v3601
    %v3603 = vadd.f32 %v3590, 1.0
    %v3604 = vadd.f32 %v3592, 1.0
    %v3605 = vadd.f32 %v3594, 1.0
    %v3606 = vadd.f32 %v3596, 1.0
    %v3607 = vadd.f32 %v3598, 1.0
    %v3608 = vadd.f32 %v3600, 1.0
    %v3609 = vadd.f32 %v3602, 1.0
    %v3610 = vrcp.pop %v3603
    %v3611 = vmul.f32 %v3603, %v3610
    %v3612 = vsub.f32 1.0, %v3611
    %v3613 = vmul.f32 %v3610, %v3612
    %v3614 = vadd.f32 %v3610, %v3613
    %vm3615 = vweird.f32 %v3603
    %vm3616 = vweird.f32 %v3610
    %vm3617 = vmor %vm3615, %vm3616
    %v3618 = vsel %vm3617, %v3610, %v3614
    %v3619 = vand.u32 2147483647, %v3603
    %vm3620 = vcmp.eq.f32.partialorder %v3619, 8.507059e+37
    %v3621 = vand.u32 %v3603, 2147483648
    %v3622 = vor.u32 1.1754944e-38, %v3621
    %v3623 = vsel %vm3620, %v3622, %v3618
    %v3624 = vmul.f32 1.0, %v3623
    %v3625 = vrcp.pop %v3604
    %v3626 = vmul.f32 %v3604, %v3625
    %v3627 = vsub.f32 1.0, %v3626
    %v3628 = vmul.f32 %v3625, %v3627
    %v3629 = vadd.f32 %v3625, %v3628
    %vm3630 = vweird.f32 %v3604
    %vm3631 = vweird.f32 %v3625
    %vm3632 = vmor %vm3630, %vm3631
    %v3633 = vsel %vm3632, %v3625, %v3629
    %v3634 = vand.u32 2147483647, %v3604
    %vm3635 = vcmp.eq.f32.partialorder %v3634, 8.507059e+37
    %v3636 = vand.u32 %v3604, 2147483648
    %v3637 = vor.u32 1.1754944e-38, %v3636
    %v3638 = vsel %vm3635, %v3637, %v3633
    %v3639 = vmul.f32 1.0, %v3638
    %v3640 = vrcp.pop %v3605
    %v3641 = vmul.f32 %v3605, %v3640
    %v3642 = vsub.f32 1.0, %v3641
    %v3643 = vmul.f32 %v3640, %v3642
    %v3644 = vadd.f32 %v3640, %v3643
    %vm3645 = vweird.f32 %v3605
    %vm3646 = vweird.f32 %v3640
    %vm3647 = vmor %vm3645, %vm3646
    %v3648 = vsel %vm3647, %v3640, %v3644
    %v3649 = vand.u32 2147483647, %v3605
    %vm3650 = vcmp.eq.f32.partialorder %v3649, 8.507059e+37
    %v3651 = vand.u32 %v3605, 2147483648
    %v3652 = vor.u32 1.1754944e-38, %v3651
    %v3653 = vsel %vm3650, %v3652, %v3648
    %v3654 = vmul.f32 1.0, %v3653
    %v3655 = vrcp.pop %v3606
    %v3656 = vmul.f32 %v3606, %v3655
    %v3657 = vsub.f32 1.0, %v3656
    %v3658 = vmul.f32 %v3655, %v3657
    %v3659 = vadd.f32 %v3655, %v3658
    %vm3660 = vweird.f32 %v3606
    %vm3661 = vweird.f32 %v3655
    %vm3662 = vmor %vm3660, %vm3661
    %v3663 = vsel %vm3662, %v3655, %v3659
    %v3664 = vand.u32 2147483647, %v3606
    %vm3665 = vcmp.eq.f32.partialorder %v3664, 8.507059e+37
    %v3666 = vand.u32 %v3606, 2147483648
    %v3667 = vor.u32 1.1754944e-38, %v3666
    %v3668 = vsel %vm3665, %v3667, %v3663
    %v3669 = vmul.f32 1.0, %v3668
    %v3670 = vrcp.pop %v3607
    %v3671 = vmul.f32 %v3607, %v3670
    %v3672 = vsub.f32 1.0, %v3671
    %v3673 = vmul.f32 %v3670, %v3672
    %v3674 = vadd.f32 %v3670, %v3673
    %vm3675 = vweird.f32 %v3607
    %vm3676 = vweird.f32 %v3670
    %vm3677 = vmor %vm3675, %vm3676
    %v3678 = vsel %vm3677, %v3670, %v3674
    %v3679 = vand.u32 2147483647, %v3607
    %vm3680 = vcmp.eq.f32.partialorder %v3679, 8.507059e+37
    %v3681 = vand.u32 %v3607, 2147483648
    %v3682 = vor.u32 1.1754944e-38, %v3681
    %v3683 = vsel %vm3680, %v3682, %v3678
    %v3684 = vmul.f32 1.0, %v3683
    %v3685 = vrcp.pop %v3608
    %v3686 = vmul.f32 %v3608, %v3685
    %v3687 = vsub.f32 1.0, %v3686
    %v3688 = vmul.f32 %v3685, %v3687
    %v3689 = vadd.f32 %v3685, %v3688
    %vm3690 = vweird.f32 %v3608
    %vm3691 = vweird.f32 %v3685
    %vm3692 = vmor %vm3690, %vm3691
    %v3693 = vsel %vm3692, %v3685, %v3689
    %v3694 = vand.u32 2147483647, %v3608
    %vm3695 = vcmp.eq.f32.partialorder %v3694, 8.507059e+37
    %v3696 = vand.u32 %v3608, 2147483648
    %v3697 = vor.u32 1.1754944e-38, %v3696
    %v3698 = vsel %vm3695, %v3697, %v3693
    %v3699 = vmul.f32 1.0, %v3698
    %v3700 = vrcp.pop %v3609
    %v3701 = vmul.f32 %v3609, %v3700
    %v3702 = vsub.f32 1.0, %v3701
    %v3703 = vmul.f32 %v3700, %v3702
    %v3704 = vadd.f32 %v3700, %v3703
    %vm3705 = vweird.f32 %v3609
    %vm3706 = vweird.f32 %v3700
    %vm3707 = vmor %vm3705, %vm3706
    %v3708 = vsel %vm3707, %v3700, %v3704
    %v3709 = vand.u32 2147483647, %v3609
    %vm3710 = vcmp.eq.f32.partialorder %v3709, 8.507059e+37
    %v3711 = vand.u32 %v3609, 2147483648
    %v3712 = vor.u32 1.1754944e-38, %v3711
    %v3713 = vsel %vm3710, %v3712, %v3708
    %v3714 = vmul.f32 1.0, %v3713
    %vm3715 = vcmask 228352
    %3716 = vst.msk [vmem:[#allocation22] sm:$0xff] %vm3715, %v3624
    %3717 = vst.msk [vmem:[#allocation22 + $0x8] sm:$0xff] %vm3715, %v3639
    %3718 = vst.msk [vmem:[#allocation22 + $0x10] sm:$0xff] %vm3715, %v3654
    %3719 = vst.msk [vmem:[#allocation22 + $0x18] sm:$0xff] %vm3715, %v3669
    %3720 = vst.msk [vmem:[#allocation22 + $0x20] sm:$0xff] %vm3715, %v3684
    %3721 = vst.msk [vmem:[#allocation22 + $0x28] sm:$0xff] %vm3715, %v3699
    %3722 = vst.msk [vmem:[#allocation22 + $0x30] sm:$0xff] %vm3715, %v3714
    // Predicated region
    $region130: #{_lambda_.1} parent=1 // pred_check
      _
    $region131: #{_lambda_.1} parent=1 // pred_check_branch
      %3724 = sbr.rel (0) target = $region133
    $region132: #{_lambda_.1} parent=1 // pred_region
      %3726 = vsyncadd [#allocation5], 0
      %s3727 = sshll.u32 [#allocation22], 4
      %s3728 = int_to_ptr.vmem [resolvable:$true] %s3727
      %s3729 = sshll.u32 %s21, 4
      %s3730 = int_to_ptr.hbm [resolvable:$true] %s3729
      %3735 = dma.vmem_to_hbm [thread:$0]  %s3728, 896, %s3730, [#allocation5], 128, 128, 8
    $region133: #{_lambda_.1} parent=1 // pred_fallthru
      _
    // Predicated region
    $region134: #{_lambda_.1} parent=1 // pred_check
      _
    $region135: #{_lambda_.1} parent=1 // pred_check_branch
      %3737 = sbr.rel (0) target = $region137
    $region136: #{_lambda_.1} parent=1 // pred_region
      %3739 = dma.done [#allocation5], 896
    $region137: #{_lambda_.1} parent=1 // pred_fallthru
      _
    %3740 = vsyncpa [#allocation4], 1
    %3741 = vsyncpa [#allocation8], 1
    %3742 = vsyncpa [#allocation11], 1
    %3743 = vsyncpa [#allocation14], 1
    %3744 = vsyncpa [#allocation17], 1
    %3745 = vsyncpa [#allocation20], 1
    %3746 = vsyncpa [#allocation5], 1
    %3747 = vsyncpa [#allocation6], 1

</llo_original>
